<compile_context>
chip_gen: v7x
topology: tpu7x:2x2x1
jax: 0.10.0
libtpu: 0.0.40
codegen_flags: <defaults>
</compile_context>

<pallas_src>
import jax
import jax.numpy as jnp
import numpy as np
from jax.experimental import pallas as pl
from jax.experimental.pallas import tpu as pltpu

LEAKY_SLOPE = 0.01  # nn.LeakyReLU() default
BN_EPS = 1e-5       # nn.BatchNorm2d default
LANE = 128


# ------------------------------ Pallas kernel --------------------------------
def _make_conv2x_kernel(ho, wo, c1, c2out):
    """Fused conv1(stride2) + concat + conv2(stride1), all BN-folded + LeakyReLU."""

    def kernel(p1_ref, w1_ref, b1_ref, rem_ref, w2a_ref, w2b_ref, b2_ref,
               o_ref, mid_ref):
        # p1_ref:  (ho*wo, K1P)        bf16 conv1 im2col rows for this batch elem
        # w1_ref:  (K1P, c1)           bf16 conv1 weight, BN scale folded, K zero-padded
        # b1_ref:  (1, c1)             f32 folded BN bias (conv1)
        # rem_ref: (1, ho+2, wo+2, c1) bf16 skip input, spatially zero-padded (halo)
        # w2a_ref: (9, c1, c2out)      bf16 conv2 weight taps for the conv1-output half
        # w2b_ref: (9, c1, c2out)      bf16 conv2 weight taps for the rem half
        # b2_ref:  (1, c2out)          f32 folded BN bias (conv2)
        # o_ref:   (1, ho, wo, c2out)  f32 output (NHWC)
        # mid_ref: (1, ho+2, wo+2, c1) bf16 VMEM scratch: conv1 output with zero halo

        # ---- conv1: bf16 MXU matmul, f32 acc, fused bias + LeakyReLU ----
        y1 = jnp.dot(p1_ref[...], w1_ref[...], preferred_element_type=jnp.float32)
        y1 = y1 + b1_ref[...]
        y1 = jnp.maximum(y1, LEAKY_SLOPE * y1)

        # Keep conv1 output resident in VMEM (bf16) inside a zero halo for conv2.
        mid_ref[...] = jnp.zeros_like(mid_ref)
        mid_ref[:, 1:1 + ho, 1:1 + wo, :] = (
            y1.astype(mid_ref.dtype).reshape(1, ho, wo, c1))

        # ---- conv2: in-kernel shifted-window 3x3, concat realized as weight split ----
        acc = jnp.zeros((ho * wo, c2out), jnp.float32)
        for kh in range(3):
            for kw in range(3):
                t = kh * 3 + kw
                a1 = mid_ref[:, kh:kh + ho, kw:kw + wo, :].reshape(ho * wo, c1)
                a2 = rem_ref[:, kh:kh + ho, kw:kw + wo, :].reshape(ho * wo, c1)
                acc = acc + jnp.dot(a1, w2a_ref[t],
                                    preferred_element_type=jnp.float32)
                acc = acc + jnp.dot(a2, w2b_ref[t],
                                    preferred_element_type=jnp.float32)

        y2 = acc + b2_ref[...]
        y2 = jnp.maximum(y2, LEAKY_SLOPE * y2)
        o_ref[...] = y2.reshape(1, ho, wo, c2out).astype(o_ref.dtype)

    return kernel


# -------------------------------- JAX glue ------------------------------------
def _im2col_s2(x_nhwc):
    """3x3 / stride 2 / pad 1 im2col. [N,H,W,C] -> [N*Ho*Wo, 9*C], (kh,kw,c) order."""
    N, H, W, C = x_nhwc.shape
    Ho = (H + 2 - 3) // 2 + 1
    Wo = (W + 2 - 3) // 2 + 1
    xp = jnp.pad(x_nhwc, ((0, 0), (1, 1), (1, 1), (0, 0)))
    cols = []
    for kh in range(3):
        for kw in range(3):
            cols.append(xp[:, kh:kh + 2 * (Ho - 1) + 1:2,
                           kw:kw + 2 * (Wo - 1) + 1:2, :])
    p = jnp.stack(cols, axis=3)                      # [N, Ho, Wo, 9, C]
    return p.reshape(N * Ho * Wo, 9 * C), Ho, Wo


def conv2x_forward(x, rem, params):
    p = params
    N, Cin, H, W = x.shape
    Cout = p["w1"].shape[0]
    C2in = p["w2"].shape[1]
    C2out = p["w2"].shape[0]
    assert C2in == 2 * Cout

    # ---- fold BatchNorm (eval running stats) into conv weights / biases ----
    s1 = p["g1"] / jnp.sqrt(p["v1"] + BN_EPS)
    bias1 = (p["b1"] - p["m1"] * s1).reshape(1, Cout).astype(jnp.float32)
    w1f = jnp.transpose(p["w1"], (2, 3, 1, 0)).reshape(9 * Cin, Cout) * s1[None, :]

    s2 = p["g2"] / jnp.sqrt(p["v2"] + BN_EPS)
    bias2 = (p["b2"] - p["m2"] * s2).reshape(1, C2out).astype(jnp.float32)
    w2f = (jnp.transpose(p["w2"], (2, 3, 1, 0)).reshape(9, C2in, C2out)
           * s2[None, None, :])
    w2a = w2f[:, :Cout, :].astype(jnp.bfloat16)   # acts on conv1-output channels
    w2b = w2f[:, Cout:, :].astype(jnp.bfloat16)   # acts on skip (rem) channels

    # ---- conv1 im2col (tiny stride-2 glue pass), bf16, lane-dense K ----
    x_nhwc = jnp.transpose(x, (0, 2, 3, 1)).astype(jnp.bfloat16)   # single entry transpose
    p1, Ho, Wo = _im2col_s2(x_nhwc)
    K1 = 9 * Cin
    K1P = ((K1 + LANE - 1) // LANE) * LANE
    if K1P != K1:
        p1 = jnp.pad(p1, ((0, 0), (0, K1P - K1)))
    w1p = jnp.pad(w1f, ((0, K1P - K1), (0, 0))).astype(jnp.bfloat16)

    # TODO(synk): nearest-neighbour resize of the conv1 output (shape-mismatch case)
    # is not fused into the kernel; only the matching-shape case is supported.
    assert (Ho, Wo) == (rem.shape[2], rem.shape[3]), "nearest-resize path not implemented"

    rem_pad = jnp.pad(jnp.transpose(rem, (0, 2, 3, 1)).astype(jnp.bfloat16),
                      ((0, 0), (1, 1), (1, 1), (0, 0)))            # zero halo for conv2

    rows_b = Ho * Wo                       # conv1 rows per batch element
    assert rows_b % 8 == 0, "sublane alignment of the per-batch im2col block"

    kernel = _make_conv2x_kernel(Ho, Wo, Cout, C2out)
    out_nhwc = pl.pallas_call(
        kernel,
        out_shape=jax.ShapeDtypeStruct((N, Ho, Wo, C2out), jnp.float32),
        grid_spec=pltpu.PrefetchScalarGridSpec(
            num_scalar_prefetch=0,
            grid=(N,),                                   # >=2 steps -> both v7x cores
            in_specs=[
                pl.BlockSpec((rows_b, K1P), lambda i: (i, 0)),
                pl.BlockSpec((K1P, Cout), lambda i: (0, 0)),
                pl.BlockSpec((1, Cout), lambda i: (0, 0)),
                pl.BlockSpec((1, Ho + 2, Wo + 2, Cout), lambda i: (i, 0, 0, 0)),
                pl.BlockSpec((9, Cout, C2out), lambda i: (0, 0, 0)),
                pl.BlockSpec((9, Cout, C2out), lambda i: (0, 0, 0)),
                pl.BlockSpec((1, C2out), lambda i: (0, 0)),
            ],
            out_specs=pl.BlockSpec((1, Ho, Wo, C2out), lambda i: (i, 0, 0, 0)),
            scratch_shapes=[pltpu.VMEM((1, Ho + 2, Wo + 2, Cout), jnp.bfloat16)],
        ),
        compiler_params=pltpu.CompilerParams(
            dimension_semantics=("parallel",)),
    )(p1, w1p, bias1, rem_pad, w2a, w2b, bias2)

    return jnp.transpose(out_nhwc, (0, 3, 1, 2))        # single exit transpose -> NCHW


def init_params(key, in_channels, out_channels):
    ks = jax.random.split(key, 10)
    c2 = out_channels * 2
    return {
        "w1": 0.1 * jax.random.normal(ks[0], (out_channels, in_channels, 3, 3), jnp.float32),
        "g1": 1.0 + 0.1 * jax.random.normal(ks[1], (out_channels,), jnp.float32),
        "b1": 0.05 * jax.random.normal(ks[2], (out_channels,), jnp.float32),
        "m1": 0.02 * jax.random.normal(ks[3], (out_channels,), jnp.float32),
        "v1": 1.0 + 0.1 * jnp.abs(jax.random.normal(ks[4], (out_channels,), jnp.float32)),
        "w2": 0.1 * jax.random.normal(ks[5], (c2, c2, 3, 3), jnp.float32),
        "g2": 1.0 + 0.1 * jax.random.normal(ks[6], (c2,), jnp.float32),
        "b2": 0.05 * jax.random.normal(ks[7], (c2,), jnp.float32),
        "m2": 0.02 * jax.random.normal(ks[8], (c2,), jnp.float32),
        "v2": 1.0 + 0.1 * jnp.abs(jax.random.normal(ks[9], (c2,), jnp.float32)),
    }


# --------------------------- pure-JAX reference -------------------------------
def _ref_basic_conv(x, w, gamma, beta, mean, var, *, stride, padding):
    y = jax.lax.conv_general_dilated(
        x, w, window_strides=(stride, stride),
        padding=((padding, padding), (padding, padding)),
        dimension_numbers=("NCHW", "OIHW", "NCHW"))
    scale = (gamma / jnp.sqrt(var + BN_EPS)).reshape(1, -1, 1, 1)
    bias = (beta - mean * gamma / jnp.sqrt(var + BN_EPS)).reshape(1, -1, 1, 1)
    y = y * scale + bias
    return jnp.where(y >= 0.0, y, LEAKY_SLOPE * y)


def _ref_conv2x(x, rem, p):
    y = _ref_basic_conv(x, p["w1"], p["g1"], p["b1"], p["m1"], p["v1"], stride=2, padding=1)
    y = jnp.concatenate([y, rem], axis=1)
    return _ref_basic_conv(y, p["w2"], p["g2"], p["b2"], p["m2"], p["v2"], stride=1, padding=1)


# ----------------------------------- main --------------------------------------
if __name__ == "__main__":
    key = jax.random.PRNGKey(0)
    k_x, k_rem, k_p = jax.random.split(key, 3)

    in_channels, out_channels = 4, 4
    x = jax.random.normal(k_x, (2, in_channels, 16, 16), jnp.float32)     # NCHW
    rem = jax.random.normal(k_rem, (2, out_channels, 8, 8), jnp.float32)  # NCHW skip
    params = init_params(k_p, in_channels, out_channels)

    out = jax.block_until_ready(jax.jit(conv2x_forward)(x, rem, params))

    ref = jax.block_until_ready(_ref_conv2x(x, rem, params))
    assert out.shape == (2, out_channels * 2, 8, 8), out.shape
    # bf16 MXU operands (f32 accumulation) vs f32 reference -> bf16 tolerance.
    np.testing.assert_allclose(np.asarray(out), np.asarray(ref), rtol=3e-2, atol=3e-2)

    print("KERNEL_OK")
</pallas_src>

<mosaic_0001>
module attributes {stable_mosaic.version = 11 : i64} {
  func.func @kernel(%arg0: i32, %arg1: memref<64x128xbf16, #tpu.memory_space<vmem>>, %arg2: memref<128x4xbf16, #tpu.memory_space<vmem>>, %arg3: memref<1x4xf32, #tpu.memory_space<vmem>>, %arg4: memref<1x10x10x4xbf16, #tpu.memory_space<vmem>>, %arg5: memref<9x4x8xbf16, #tpu.memory_space<vmem>>, %arg6: memref<9x4x8xbf16, #tpu.memory_space<vmem>>, %arg7: memref<1x8xf32, #tpu.memory_space<vmem>>, %arg8: memref<1x8x8x8xf32, #tpu.memory_space<vmem>>, %arg9: memref<1x10x10x4xbf16, #tpu.memory_space<vmem>>) attributes {dimension_semantics = [#tpu.dimension_semantics<parallel>], iteration_bounds = array<i64: 2>, scalar_prefetch = 0 : i64, scratch_operands = 1 : i64, tpu.core_type = #tpu.core_type<tc>, window_params = [{transform_indices = @transform_0, window_bounds = array<i64: 64, 128>}, {pipeline_mode = #tpu.pipeline_mode<synchronous>, transform_indices = @transform_1, window_bounds = array<i64: 128, 4>}, {pipeline_mode = #tpu.pipeline_mode<synchronous>, transform_indices = @transform_2, window_bounds = array<i64: 1, 4>}, {transform_indices = @transform_3, window_bounds = array<i64: 1, 10, 10, 4>}, {pipeline_mode = #tpu.pipeline_mode<synchronous>, transform_indices = @transform_4, window_bounds = array<i64: 9, 4, 8>}, {pipeline_mode = #tpu.pipeline_mode<synchronous>, transform_indices = @transform_5, window_bounds = array<i64: 9, 4, 8>}, {pipeline_mode = #tpu.pipeline_mode<synchronous>, transform_indices = @transform_6, window_bounds = array<i64: 1, 8>}, {transform_indices = @transform_7, window_bounds = array<i64: 1, 8, 8, 8>}]} {
    %c0 = arith.constant 0 : index
    %c0_0 = arith.constant 0 : index
    %0 = vector.load %arg1[%c0, %c0_0] : memref<64x128xbf16, #tpu.memory_space<vmem>>, vector<64x128xbf16>
    %c0_1 = arith.constant 0 : index
    %c0_2 = arith.constant 0 : index
    %1 = vector.load %arg2[%c0_1, %c0_2] : memref<128x4xbf16, #tpu.memory_space<vmem>>, vector<128x4xbf16>
    %cst = arith.constant dense<0.000000e+00> : vector<64x4xf32>
    %2 = tpu.matmul %0, %1, %cst {dimension_numbers = #tpu.dot_dimension_numbers<[1], [0], [0], [1], [0, 0, 1, 1], [], []>} : vector<64x128xbf16>, vector<128x4xbf16>, vector<64x4xf32> -> vector<64x4xf32>
    %c0_3 = arith.constant 0 : index
    %c0_4 = arith.constant 0 : index
    %3 = vector.load %arg3[%c0_3, %c0_4] : memref<1x4xf32, #tpu.memory_space<vmem>>, vector<1x4xf32>
    %4 = vector.broadcast %3 : vector<1x4xf32> to vector<64x4xf32>
    %5 = arith.addf %2, %4 : vector<64x4xf32>
    %cst_5 = arith.constant 0.00999999977 : f32
    %6 = vector.broadcast %cst_5 : f32 to vector<64x4xf32>
    %7 = arith.mulf %6, %5 : vector<64x4xf32>
    %8 = arith.maximumf %5, %7 : vector<64x4xf32>
    %cst_6 = arith.constant 0.000000e+00 : bf16
    %9 = vector.broadcast %cst_6 : bf16 to vector<1x10x10x4xbf16>
    %c0_7 = arith.constant 0 : index
    %c0_8 = arith.constant 0 : index
    %c0_9 = arith.constant 0 : index
    %c0_10 = arith.constant 0 : index
    %10 = vector.load %arg9[%c0_7, %c0_8, %c0_9, %c0_10] : memref<1x10x10x4xbf16, #tpu.memory_space<vmem>>, vector<1x10x10x4xbf16>
    tpu.vector_store %arg9[%c0_7, %c0_8, %c0_9, %c0_10], %9 {strides = array<i32>} : memref<1x10x10x4xbf16, #tpu.memory_space<vmem>>, vector<1x10x10x4xbf16>,
    %11 = arith.truncf %8 : vector<64x4xf32> to vector<64x4xbf16>
    %12 = vector.shape_cast %11 : vector<64x4xbf16> to vector<1x8x8x4xbf16>
    %c0_11 = arith.constant 0 : index
    %c1 = arith.constant 1 : index
    %c1_12 = arith.constant 1 : index
    %c0_13 = arith.constant 0 : index
    %13 = vector.load %arg9[%c0_11, %c1, %c1_12, %c0_13] : memref<1x10x10x4xbf16, #tpu.memory_space<vmem>>, vector<1x8x8x4xbf16>
    tpu.vector_store %arg9[%c0_11, %c1, %c1_12, %c0_13], %12 {strides = array<i32>} : memref<1x10x10x4xbf16, #tpu.memory_space<vmem>>, vector<1x8x8x4xbf16>,
    %cst_14 = arith.constant 0.000000e+00 : f32
    %14 = vector.broadcast %cst_14 : f32 to vector<64x8xf32>
    %c0_15 = arith.constant 0 : index
    %c0_16 = arith.constant 0 : index
    %c0_17 = arith.constant 0 : index
    %c0_18 = arith.constant 0 : index
    %15 = vector.load %arg9[%c0_15, %c0_16, %c0_17, %c0_18] : memref<1x10x10x4xbf16, #tpu.memory_space<vmem>>, vector<1x8x8x4xbf16>
    %16 = vector.shape_cast %15 : vector<1x8x8x4xbf16> to vector<64x4xbf16>
    %c0_19 = arith.constant 0 : index
    %c0_20 = arith.constant 0 : index
    %c0_21 = arith.constant 0 : index
    %c0_22 = arith.constant 0 : index
    %17 = vector.load %arg4[%c0_19, %c0_20, %c0_21, %c0_22] : memref<1x10x10x4xbf16, #tpu.memory_space<vmem>>, vector<1x8x8x4xbf16>
    %18 = vector.shape_cast %17 : vector<1x8x8x4xbf16> to vector<64x4xbf16>
    %c0_23 = arith.constant 0 : index
    %c0_24 = arith.constant 0 : index
    %c0_25 = arith.constant 0 : index
    %19 = vector.load %arg5[%c0_23, %c0_24, %c0_25] : memref<9x4x8xbf16, #tpu.memory_space<vmem>>, vector<1x4x8xbf16>
    %20 = vector.shape_cast %19 : vector<1x4x8xbf16> to vector<4x8xbf16>
    %cst_26 = arith.constant dense<0.000000e+00> : vector<64x8xf32>
    %21 = tpu.matmul %16, %20, %cst_26 {dimension_numbers = #tpu.dot_dimension_numbers<[1], [0], [0], [1], [0, 0, 1, 1], [], []>} : vector<64x4xbf16>, vector<4x8xbf16>, vector<64x8xf32> -> vector<64x8xf32>
    %22 = arith.addf %14, %21 : vector<64x8xf32>
    %c0_27 = arith.constant 0 : index
    %c0_28 = arith.constant 0 : index
    %c0_29 = arith.constant 0 : index
    %23 = vector.load %arg6[%c0_27, %c0_28, %c0_29] : memref<9x4x8xbf16, #tpu.memory_space<vmem>>, vector<1x4x8xbf16>
    %24 = vector.shape_cast %23 : vector<1x4x8xbf16> to vector<4x8xbf16>
    %cst_30 = arith.constant dense<0.000000e+00> : vector<64x8xf32>
    %25 = tpu.matmul %18, %24, %cst_30 {dimension_numbers = #tpu.dot_dimension_numbers<[1], [0], [0], [1], [0, 0, 1, 1], [], []>} : vector<64x4xbf16>, vector<4x8xbf16>, vector<64x8xf32> -> vector<64x8xf32>
    %26 = arith.addf %22, %25 : vector<64x8xf32>
    %c0_31 = arith.constant 0 : index
    %c0_32 = arith.constant 0 : index
    %c1_33 = arith.constant 1 : index
    %c0_34 = arith.constant 0 : index
    %27 = vector.load %arg9[%c0_31, %c0_32, %c1_33, %c0_34] : memref<1x10x10x4xbf16, #tpu.memory_space<vmem>>, vector<1x8x8x4xbf16>
    %28 = vector.shape_cast %27 : vector<1x8x8x4xbf16> to vector<64x4xbf16>
    %c0_35 = arith.constant 0 : index
    %c0_36 = arith.constant 0 : index
    %c1_37 = arith.constant 1 : index
    %c0_38 = arith.constant 0 : index
    %29 = vector.load %arg4[%c0_35, %c0_36, %c1_37, %c0_38] : memref<1x10x10x4xbf16, #tpu.memory_space<vmem>>, vector<1x8x8x4xbf16>
    %30 = vector.shape_cast %29 : vector<1x8x8x4xbf16> to vector<64x4xbf16>
    %c1_39 = arith.constant 1 : index
    %c0_40 = arith.constant 0 : index
    %c0_41 = arith.constant 0 : index
    %31 = vector.load %arg5[%c1_39, %c0_40, %c0_41] : memref<9x4x8xbf16, #tpu.memory_space<vmem>>, vector<1x4x8xbf16>
    %32 = vector.shape_cast %31 : vector<1x4x8xbf16> to vector<4x8xbf16>
    %cst_42 = arith.constant dense<0.000000e+00> : vector<64x8xf32>
    %33 = tpu.matmul %28, %32, %cst_42 {dimension_numbers = #tpu.dot_dimension_numbers<[1], [0], [0], [1], [0, 0, 1, 1], [], []>} : vector<64x4xbf16>, vector<4x8xbf16>, vector<64x8xf32> -> vector<64x8xf32>
    %34 = arith.addf %26, %33 : vector<64x8xf32>
    %c1_43 = arith.constant 1 : index
    %c0_44 = arith.constant 0 : index
    %c0_45 = arith.constant 0 : index
    %35 = vector.load %arg6[%c1_43, %c0_44, %c0_45] : memref<9x4x8xbf16, #tpu.memory_space<vmem>>, vector<1x4x8xbf16>
    %36 = vector.shape_cast %35 : vector<1x4x8xbf16> to vector<4x8xbf16>
    %cst_46 = arith.constant dense<0.000000e+00> : vector<64x8xf32>
    %37 = tpu.matmul %30, %36, %cst_46 {dimension_numbers = #tpu.dot_dimension_numbers<[1], [0], [0], [1], [0, 0, 1, 1], [], []>} : vector<64x4xbf16>, vector<4x8xbf16>, vector<64x8xf32> -> vector<64x8xf32>
    %38 = arith.addf %34, %37 : vector<64x8xf32>
    %c0_47 = arith.constant 0 : index
    %c0_48 = arith.constant 0 : index
    %c2 = arith.constant 2 : index
    %c0_49 = arith.constant 0 : index
    %39 = vector.load %arg9[%c0_47, %c0_48, %c2, %c0_49] : memref<1x10x10x4xbf16, #tpu.memory_space<vmem>>, vector<1x8x8x4xbf16>
    %40 = vector.shape_cast %39 : vector<1x8x8x4xbf16> to vector<64x4xbf16>
    %c0_50 = arith.constant 0 : index
    %c0_51 = arith.constant 0 : index
    %c2_52 = arith.constant 2 : index
    %c0_53 = arith.constant 0 : index
    %41 = vector.load %arg4[%c0_50, %c0_51, %c2_52, %c0_53] : memref<1x10x10x4xbf16, #tpu.memory_space<vmem>>, vector<1x8x8x4xbf16>
    %42 = vector.shape_cast %41 : vector<1x8x8x4xbf16> to vector<64x4xbf16>
    %c2_54 = arith.constant 2 : index
    %c0_55 = arith.constant 0 : index
    %c0_56 = arith.constant 0 : index
    %43 = vector.load %arg5[%c2_54, %c0_55, %c0_56] : memref<9x4x8xbf16, #tpu.memory_space<vmem>>, vector<1x4x8xbf16>
    %44 = vector.shape_cast %43 : vector<1x4x8xbf16> to vector<4x8xbf16>
    %cst_57 = arith.constant dense<0.000000e+00> : vector<64x8xf32>
    %45 = tpu.matmul %40, %44, %cst_57 {dimension_numbers = #tpu.dot_dimension_numbers<[1], [0], [0], [1], [0, 0, 1, 1], [], []>} : vector<64x4xbf16>, vector<4x8xbf16>, vector<64x8xf32> -> vector<64x8xf32>
    %46 = arith.addf %38, %45 : vector<64x8xf32>
    %c2_58 = arith.constant 2 : index
    %c0_59 = arith.constant 0 : index
    %c0_60 = arith.constant 0 : index
    %47 = vector.load %arg6[%c2_58, %c0_59, %c0_60] : memref<9x4x8xbf16, #tpu.memory_space<vmem>>, vector<1x4x8xbf16>
    %48 = vector.shape_cast %47 : vector<1x4x8xbf16> to vector<4x8xbf16>
    %cst_61 = arith.constant dense<0.000000e+00> : vector<64x8xf32>
    %49 = tpu.matmul %42, %48, %cst_61 {dimension_numbers = #tpu.dot_dimension_numbers<[1], [0], [0], [1], [0, 0, 1, 1], [], []>} : vector<64x4xbf16>, vector<4x8xbf16>, vector<64x8xf32> -> vector<64x8xf32>
    %50 = arith.addf %46, %49 : vector<64x8xf32>
    %c0_62 = arith.constant 0 : index
    %c1_63 = arith.constant 1 : index
    %c0_64 = arith.constant 0 : index
    %c0_65 = arith.constant 0 : index
    %51 = vector.load %arg9[%c0_62, %c1_63, %c0_64, %c0_65] : memref<1x10x10x4xbf16, #tpu.memory_space<vmem>>, vector<1x8x8x4xbf16>
    %52 = vector.shape_cast %51 : vector<1x8x8x4xbf16> to vector<64x4xbf16>
    %c0_66 = arith.constant 0 : index
    %c1_67 = arith.constant 1 : index
    %c0_68 = arith.constant 0 : index
    %c0_69 = arith.constant 0 : index
    %53 = vector.load %arg4[%c0_66, %c1_67, %c0_68, %c0_69] : memref<1x10x10x4xbf16, #tpu.memory_space<vmem>>, vector<1x8x8x4xbf16>
    %54 = vector.shape_cast %53 : vector<1x8x8x4xbf16> to vector<64x4xbf16>
    %c3 = arith.constant 3 : index
    %c0_70 = arith.constant 0 : index
    %c0_71 = arith.constant 0 : index
    %55 = vector.load %arg5[%c3, %c0_70, %c0_71] : memref<9x4x8xbf16, #tpu.memory_space<vmem>>, vector<1x4x8xbf16>
    %56 = vector.shape_cast %55 : vector<1x4x8xbf16> to vector<4x8xbf16>
    %cst_72 = arith.constant dense<0.000000e+00> : vector<64x8xf32>
    %57 = tpu.matmul %52, %56, %cst_72 {dimension_numbers = #tpu.dot_dimension_numbers<[1], [0], [0], [1], [0, 0, 1, 1], [], []>} : vector<64x4xbf16>, vector<4x8xbf16>, vector<64x8xf32> -> vector<64x8xf32>
    %58 = arith.addf %50, %57 : vector<64x8xf32>
    %c3_73 = arith.constant 3 : index
    %c0_74 = arith.constant 0 : index
    %c0_75 = arith.constant 0 : index
    %59 = vector.load %arg6[%c3_73, %c0_74, %c0_75] : memref<9x4x8xbf16, #tpu.memory_space<vmem>>, vector<1x4x8xbf16>
    %60 = vector.shape_cast %59 : vector<1x4x8xbf16> to vector<4x8xbf16>
    %cst_76 = arith.constant dense<0.000000e+00> : vector<64x8xf32>
    %61 = tpu.matmul %54, %60, %cst_76 {dimension_numbers = #tpu.dot_dimension_numbers<[1], [0], [0], [1], [0, 0, 1, 1], [], []>} : vector<64x4xbf16>, vector<4x8xbf16>, vector<64x8xf32> -> vector<64x8xf32>
    %62 = arith.addf %58, %61 : vector<64x8xf32>
    %c0_77 = arith.constant 0 : index
    %c1_78 = arith.constant 1 : index
    %c1_79 = arith.constant 1 : index
    %c0_80 = arith.constant 0 : index
    %63 = vector.load %arg9[%c0_77, %c1_78, %c1_79, %c0_80] : memref<1x10x10x4xbf16, #tpu.memory_space<vmem>>, vector<1x8x8x4xbf16>
    %64 = vector.shape_cast %63 : vector<1x8x8x4xbf16> to vector<64x4xbf16>
    %c0_81 = arith.constant 0 : index
    %c1_82 = arith.constant 1 : index
    %c1_83 = arith.constant 1 : index
    %c0_84 = arith.constant 0 : index
    %65 = vector.load %arg4[%c0_81, %c1_82, %c1_83, %c0_84] : memref<1x10x10x4xbf16, #tpu.memory_space<vmem>>, vector<1x8x8x4xbf16>
    %66 = vector.shape_cast %65 : vector<1x8x8x4xbf16> to vector<64x4xbf16>
    %c4 = arith.constant 4 : index
    %c0_85 = arith.constant 0 : index
    %c0_86 = arith.constant 0 : index
    %67 = vector.load %arg5[%c4, %c0_85, %c0_86] : memref<9x4x8xbf16, #tpu.memory_space<vmem>>, vector<1x4x8xbf16>
    %68 = vector.shape_cast %67 : vector<1x4x8xbf16> to vector<4x8xbf16>
    %cst_87 = arith.constant dense<0.000000e+00> : vector<64x8xf32>
    %69 = tpu.matmul %64, %68, %cst_87 {dimension_numbers = #tpu.dot_dimension_numbers<[1], [0], [0], [1], [0, 0, 1, 1], [], []>} : vector<64x4xbf16>, vector<4x8xbf16>, vector<64x8xf32> -> vector<64x8xf32>
    %70 = arith.addf %62, %69 : vector<64x8xf32>
    %c4_88 = arith.constant 4 : index
    %c0_89 = arith.constant 0 : index
    %c0_90 = arith.constant 0 : index
    %71 = vector.load %arg6[%c4_88, %c0_89, %c0_90] : memref<9x4x8xbf16, #tpu.memory_space<vmem>>, vector<1x4x8xbf16>
    %72 = vector.shape_cast %71 : vector<1x4x8xbf16> to vector<4x8xbf16>
    %cst_91 = arith.constant dense<0.000000e+00> : vector<64x8xf32>
    %73 = tpu.matmul %66, %72, %cst_91 {dimension_numbers = #tpu.dot_dimension_numbers<[1], [0], [0], [1], [0, 0, 1, 1], [], []>} : vector<64x4xbf16>, vector<4x8xbf16>, vector<64x8xf32> -> vector<64x8xf32>
    %74 = arith.addf %70, %73 : vector<64x8xf32>
    %c0_92 = arith.constant 0 : index
    %c1_93 = arith.constant 1 : index
    %c2_94 = arith.constant 2 : index
    %c0_95 = arith.constant 0 : index
    %75 = vector.load %arg9[%c0_92, %c1_93, %c2_94, %c0_95] : memref<1x10x10x4xbf16, #tpu.memory_space<vmem>>, vector<1x8x8x4xbf16>
    %76 = vector.shape_cast %75 : vector<1x8x8x4xbf16> to vector<64x4xbf16>
    %c0_96 = arith.constant 0 : index
    %c1_97 = arith.constant 1 : index
    %c2_98 = arith.constant 2 : index
    %c0_99 = arith.constant 0 : index
    %77 = vector.load %arg4[%c0_96, %c1_97, %c2_98, %c0_99] : memref<1x10x10x4xbf16, #tpu.memory_space<vmem>>, vector<1x8x8x4xbf16>
    %78 = vector.shape_cast %77 : vector<1x8x8x4xbf16> to vector<64x4xbf16>
    %c5 = arith.constant 5 : index
    %c0_100 = arith.constant 0 : index
    %c0_101 = arith.constant 0 : index
    %79 = vector.load %arg5[%c5, %c0_100, %c0_101] : memref<9x4x8xbf16, #tpu.memory_space<vmem>>, vector<1x4x8xbf16>
    %80 = vector.shape_cast %79 : vector<1x4x8xbf16> to vector<4x8xbf16>
    %cst_102 = arith.constant dense<0.000000e+00> : vector<64x8xf32>
    %81 = tpu.matmul %76, %80, %cst_102 {dimension_numbers = #tpu.dot_dimension_numbers<[1], [0], [0], [1], [0, 0, 1, 1], [], []>} : vector<64x4xbf16>, vector<4x8xbf16>, vector<64x8xf32> -> vector<64x8xf32>
    %82 = arith.addf %74, %81 : vector<64x8xf32>
    %c5_103 = arith.constant 5 : index
    %c0_104 = arith.constant 0 : index
    %c0_105 = arith.constant 0 : index
    %83 = vector.load %arg6[%c5_103, %c0_104, %c0_105] : memref<9x4x8xbf16, #tpu.memory_space<vmem>>, vector<1x4x8xbf16>
    %84 = vector.shape_cast %83 : vector<1x4x8xbf16> to vector<4x8xbf16>
    %cst_106 = arith.constant dense<0.000000e+00> : vector<64x8xf32>
    %85 = tpu.matmul %78, %84, %cst_106 {dimension_numbers = #tpu.dot_dimension_numbers<[1], [0], [0], [1], [0, 0, 1, 1], [], []>} : vector<64x4xbf16>, vector<4x8xbf16>, vector<64x8xf32> -> vector<64x8xf32>
    %86 = arith.addf %82, %85 : vector<64x8xf32>
    %c0_107 = arith.constant 0 : index
    %c2_108 = arith.constant 2 : index
    %c0_109 = arith.constant 0 : index
    %c0_110 = arith.constant 0 : index
    %87 = vector.load %arg9[%c0_107, %c2_108, %c0_109, %c0_110] : memref<1x10x10x4xbf16, #tpu.memory_space<vmem>>, vector<1x8x8x4xbf16>
    %88 = vector.shape_cast %87 : vector<1x8x8x4xbf16> to vector<64x4xbf16>
    %c0_111 = arith.constant 0 : index
    %c2_112 = arith.constant 2 : index
    %c0_113 = arith.constant 0 : index
    %c0_114 = arith.constant 0 : index
    %89 = vector.load %arg4[%c0_111, %c2_112, %c0_113, %c0_114] : memref<1x10x10x4xbf16, #tpu.memory_space<vmem>>, vector<1x8x8x4xbf16>
    %90 = vector.shape_cast %89 : vector<1x8x8x4xbf16> to vector<64x4xbf16>
    %c6 = arith.constant 6 : index
    %c0_115 = arith.constant 0 : index
    %c0_116 = arith.constant 0 : index
    %91 = vector.load %arg5[%c6, %c0_115, %c0_116] : memref<9x4x8xbf16, #tpu.memory_space<vmem>>, vector<1x4x8xbf16>
    %92 = vector.shape_cast %91 : vector<1x4x8xbf16> to vector<4x8xbf16>
    %cst_117 = arith.constant dense<0.000000e+00> : vector<64x8xf32>
    %93 = tpu.matmul %88, %92, %cst_117 {dimension_numbers = #tpu.dot_dimension_numbers<[1], [0], [0], [1], [0, 0, 1, 1], [], []>} : vector<64x4xbf16>, vector<4x8xbf16>, vector<64x8xf32> -> vector<64x8xf32>
    %94 = arith.addf %86, %93 : vector<64x8xf32>
    %c6_118 = arith.constant 6 : index
    %c0_119 = arith.constant 0 : index
    %c0_120 = arith.constant 0 : index
    %95 = vector.load %arg6[%c6_118, %c0_119, %c0_120] : memref<9x4x8xbf16, #tpu.memory_space<vmem>>, vector<1x4x8xbf16>
    %96 = vector.shape_cast %95 : vector<1x4x8xbf16> to vector<4x8xbf16>
    %cst_121 = arith.constant dense<0.000000e+00> : vector<64x8xf32>
    %97 = tpu.matmul %90, %96, %cst_121 {dimension_numbers = #tpu.dot_dimension_numbers<[1], [0], [0], [1], [0, 0, 1, 1], [], []>} : vector<64x4xbf16>, vector<4x8xbf16>, vector<64x8xf32> -> vector<64x8xf32>
    %98 = arith.addf %94, %97 : vector<64x8xf32>
    %c0_122 = arith.constant 0 : index
    %c2_123 = arith.constant 2 : index
    %c1_124 = arith.constant 1 : index
    %c0_125 = arith.constant 0 : index
    %99 = vector.load %arg9[%c0_122, %c2_123, %c1_124, %c0_125] : memref<1x10x10x4xbf16, #tpu.memory_space<vmem>>, vector<1x8x8x4xbf16>
    %100 = vector.shape_cast %99 : vector<1x8x8x4xbf16> to vector<64x4xbf16>
    %c0_126 = arith.constant 0 : index
    %c2_127 = arith.constant 2 : index
    %c1_128 = arith.constant 1 : index
    %c0_129 = arith.constant 0 : index
    %101 = vector.load %arg4[%c0_126, %c2_127, %c1_128, %c0_129] : memref<1x10x10x4xbf16, #tpu.memory_space<vmem>>, vector<1x8x8x4xbf16>
    %102 = vector.shape_cast %101 : vector<1x8x8x4xbf16> to vector<64x4xbf16>
    %c7 = arith.constant 7 : index
    %c0_130 = arith.constant 0 : index
    %c0_131 = arith.constant 0 : index
    %103 = vector.load %arg5[%c7, %c0_130, %c0_131] : memref<9x4x8xbf16, #tpu.memory_space<vmem>>, vector<1x4x8xbf16>
    %104 = vector.shape_cast %103 : vector<1x4x8xbf16> to vector<4x8xbf16>
    %cst_132 = arith.constant dense<0.000000e+00> : vector<64x8xf32>
    %105 = tpu.matmul %100, %104, %cst_132 {dimension_numbers = #tpu.dot_dimension_numbers<[1], [0], [0], [1], [0, 0, 1, 1], [], []>} : vector<64x4xbf16>, vector<4x8xbf16>, vector<64x8xf32> -> vector<64x8xf32>
    %106 = arith.addf %98, %105 : vector<64x8xf32>
    %c7_133 = arith.constant 7 : index
    %c0_134 = arith.constant 0 : index
    %c0_135 = arith.constant 0 : index
    %107 = vector.load %arg6[%c7_133, %c0_134, %c0_135] : memref<9x4x8xbf16, #tpu.memory_space<vmem>>, vector<1x4x8xbf16>
    %108 = vector.shape_cast %107 : vector<1x4x8xbf16> to vector<4x8xbf16>
    %cst_136 = arith.constant dense<0.000000e+00> : vector<64x8xf32>
    %109 = tpu.matmul %102, %108, %cst_136 {dimension_numbers = #tpu.dot_dimension_numbers<[1], [0], [0], [1], [0, 0, 1, 1], [], []>} : vector<64x4xbf16>, vector<4x8xbf16>, vector<64x8xf32> -> vector<64x8xf32>
    %110 = arith.addf %106, %109 : vector<64x8xf32>
    %c0_137 = arith.constant 0 : index
    %c2_138 = arith.constant 2 : index
    %c2_139 = arith.constant 2 : index
    %c0_140 = arith.constant 0 : index
    %111 = vector.load %arg9[%c0_137, %c2_138, %c2_139, %c0_140] : memref<1x10x10x4xbf16, #tpu.memory_space<vmem>>, vector<1x8x8x4xbf16>
    %112 = vector.shape_cast %111 : vector<1x8x8x4xbf16> to vector<64x4xbf16>
    %c0_141 = arith.constant 0 : index
    %c2_142 = arith.constant 2 : index
    %c2_143 = arith.constant 2 : index
    %c0_144 = arith.constant 0 : index
    %113 = vector.load %arg4[%c0_141, %c2_142, %c2_143, %c0_144] : memref<1x10x10x4xbf16, #tpu.memory_space<vmem>>, vector<1x8x8x4xbf16>
    %114 = vector.shape_cast %113 : vector<1x8x8x4xbf16> to vector<64x4xbf16>
    %c8 = arith.constant 8 : index
    %c0_145 = arith.constant 0 : index
    %c0_146 = arith.constant 0 : index
    %115 = vector.load %arg5[%c8, %c0_145, %c0_146] : memref<9x4x8xbf16, #tpu.memory_space<vmem>>, vector<1x4x8xbf16>
    %116 = vector.shape_cast %115 : vector<1x4x8xbf16> to vector<4x8xbf16>
    %cst_147 = arith.constant dense<0.000000e+00> : vector<64x8xf32>
    %117 = tpu.matmul %112, %116, %cst_147 {dimension_numbers = #tpu.dot_dimension_numbers<[1], [0], [0], [1], [0, 0, 1, 1], [], []>} : vector<64x4xbf16>, vector<4x8xbf16>, vector<64x8xf32> -> vector<64x8xf32>
    %118 = arith.addf %110, %117 : vector<64x8xf32>
    %c8_148 = arith.constant 8 : index
    %c0_149 = arith.constant 0 : index
    %c0_150 = arith.constant 0 : index
    %119 = vector.load %arg6[%c8_148, %c0_149, %c0_150] : memref<9x4x8xbf16, #tpu.memory_space<vmem>>, vector<1x4x8xbf16>
    %120 = vector.shape_cast %119 : vector<1x4x8xbf16> to vector<4x8xbf16>
    %cst_151 = arith.constant dense<0.000000e+00> : vector<64x8xf32>
    %121 = tpu.matmul %114, %120, %cst_151 {dimension_numbers = #tpu.dot_dimension_numbers<[1], [0], [0], [1], [0, 0, 1, 1], [], []>} : vector<64x4xbf16>, vector<4x8xbf16>, vector<64x8xf32> -> vector<64x8xf32>
    %122 = arith.addf %118, %121 : vector<64x8xf32>
    %c0_152 = arith.constant 0 : index
    %c0_153 = arith.constant 0 : index
    %123 = vector.load %arg7[%c0_152, %c0_153] : memref<1x8xf32, #tpu.memory_space<vmem>>, vector<1x8xf32>
    %124 = vector.broadcast %123 : vector<1x8xf32> to vector<64x8xf32>
    %125 = arith.addf %122, %124 : vector<64x8xf32>
    %cst_154 = arith.constant 0.00999999977 : f32
    %126 = vector.broadcast %cst_154 : f32 to vector<64x8xf32>
    %127 = arith.mulf %126, %125 : vector<64x8xf32>
    %128 = arith.maximumf %125, %127 : vector<64x8xf32>
    %129 = vector.shape_cast %128 : vector<64x8xf32> to vector<1x8x8x8xf32>
    %c0_155 = arith.constant 0 : index
    %c0_156 = arith.constant 0 : index
    %c0_157 = arith.constant 0 : index
    %c0_158 = arith.constant 0 : index
    %130 = vector.load %arg8[%c0_155, %c0_156, %c0_157, %c0_158] : memref<1x8x8x8xf32, #tpu.memory_space<vmem>>, vector<1x8x8x8xf32>
    tpu.vector_store %arg8[%c0_155, %c0_156, %c0_157, %c0_158], %129 {strides = array<i32>} : memref<1x8x8x8xf32, #tpu.memory_space<vmem>>, vector<1x8x8x8xf32>,
    return
  }
  func.func @transform_0(%arg0: i32) -> (i32, i32) {
    %c0_i32 = arith.constant 0 : i32
    %c0_i32_0 = arith.constant 0 : i32
    return %arg0, %c0_i32 : i32, i32
  }
  func.func @transform_1(%arg0: i32) -> (i32, i32) {
    %c0_i32 = arith.constant 0 : i32
    %c0_i32_0 = arith.constant 0 : i32
    %c0_i32_1 = arith.constant 0 : i32
    return %c0_i32, %c0_i32_0 : i32, i32
  }
  func.func @transform_2(%arg0: i32) -> (i32, i32) {
    %c0_i32 = arith.constant 0 : i32
    %c0_i32_0 = arith.constant 0 : i32
    %c0_i32_1 = arith.constant 0 : i32
    return %c0_i32, %c0_i32_0 : i32, i32
  }
  func.func @transform_3(%arg0: i32) -> (i32, i32, i32, i32) {
    %c0_i32 = arith.constant 0 : i32
    %c0_i32_0 = arith.constant 0 : i32
    %c0_i32_1 = arith.constant 0 : i32
    %c0_i32_2 = arith.constant 0 : i32
    return %arg0, %c0_i32, %c0_i32_0, %c0_i32_1 : i32, i32, i32, i32
  }
  func.func @transform_4(%arg0: i32) -> (i32, i32, i32) {
    %c0_i32 = arith.constant 0 : i32
    %c0_i32_0 = arith.constant 0 : i32
    %c0_i32_1 = arith.constant 0 : i32
    %c0_i32_2 = arith.constant 0 : i32
    return %c0_i32, %c0_i32_0, %c0_i32_1 : i32, i32, i32
  }
  func.func @transform_5(%arg0: i32) -> (i32, i32, i32) {
    %c0_i32 = arith.constant 0 : i32
    %c0_i32_0 = arith.constant 0 : i32
    %c0_i32_1 = arith.constant 0 : i32
    %c0_i32_2 = arith.constant 0 : i32
    return %c0_i32, %c0_i32_0, %c0_i32_1 : i32, i32, i32
  }
  func.func @transform_6(%arg0: i32) -> (i32, i32) {
    %c0_i32 = arith.constant 0 : i32
    %c0_i32_0 = arith.constant 0 : i32
    %c0_i32_1 = arith.constant 0 : i32
    return %c0_i32, %c0_i32_0 : i32, i32
  }
  func.func @transform_7(%arg0: i32) -> (i32, i32, i32, i32) {
    %c0_i32 = arith.constant 0 : i32
    %c0_i32_0 = arith.constant 0 : i32
    %c0_i32_1 = arith.constant 0 : i32
    %c0_i32_2 = arith.constant 0 : i32
    return %arg0, %c0_i32, %c0_i32_0, %c0_i32_1 : i32, i32, i32, i32
  }
}

</mosaic_0001>

<llo_original>
// kernel: conv2x_forward.1
$region0: #{conv2x_forward.1}
  #allocation0 [shape = 'u32[]', space=smem, size = 0x4, offset = 0x4, fixed_abs, tag = 'smem constant byte address 0x4 - core index']
  #allocation1 [shape = 'u32[144,128]{1,0:T(1,128)}', space=vmem, size = 0x12000, scoped, tag = 'internal scratch']
  #allocation2 [shape = 'bf16[1,10,10,4]{3,2,1,0:T(8,128)(2,1)}', space=vmem, size = 0xa000, scoped, tag = 'scratch operand']
  %s0 = inlined_call_operand.vmem [shape: bf16[128,128], index: 0, kind: input, shape index: {}]
  %s1 = inlined_call_operand.vmem [shape: bf16[128,4], index: 1, kind: input, shape index: {}]
  %s2 = inlined_call_operand.vmem [shape: f32[1,4], index: 2, kind: input, shape index: {}]
  %s3 = inlined_call_operand.vmem [shape: bf16[2,10,10,4], index: 3, kind: input, shape index: {}]
  %s4 = inlined_call_operand.vmem [shape: bf16[9,4,8], index: 4, kind: input, shape index: {}]
  %s5 = inlined_call_operand.vmem [shape: bf16[9,4,8], index: 5, kind: input, shape index: {}]
  %s6 = inlined_call_operand.vmem [shape: f32[1,8], index: 6, kind: input, shape index: {}]
  %s7 = inlined_call_operand.vmem [shape: f32[2,8,8,8], index: 7, kind: output, shape index: {}]
  %s8 = sld [smem:[#allocation0]]
  $region61: #{conv2x_forward.1} parent=0
    _
  %s10 = ssub.s32 1, %s8
  %s11 = scalar_select 0, %s10, %s8
  loop: start=0, step=1, limit=4
  $region2: #{conv2x_forward.1} parent=0 // loop_pre_header
    _
  $region3: #{conv2x_forward.1} parent=0 // loop_header
    %s13 = sphi 0, %s17
    %p14 = scmp.ge.s32.totalorder %s13, 4
    %s23 = sphi 0, %s25
    %s26 = sphi 0, %s23
    %s27 = sphi 0, %s26
    %s43 = sphi 0, %s27
    %s47 = sphi 0, %s47
    %s49 = sphi 0, %s47
    %s50 = sphi 0, %s49
    %s64 = sphi 0, %s50
    %s68 = sphi 0, %s68
    %s70 = sphi 0, %s68
    %s71 = sphi 0, %s70
    %s85 = sphi 0, %s71
    %s91 = sphi 0, %s93
    %s94 = sphi 0, %s91
    %s95 = sphi 0, %s94
    %s111 = sphi 0, %s95
    %s115 = sphi 0, %s115
    %s117 = sphi 0, %s115
    %s118 = sphi 0, %s117
    %s132 = sphi 0, %s118
    %s136 = sphi 0, %s136
    %s138 = sphi 0, %s136
    %s139 = sphi 0, %s138
    %s153 = sphi 0, %s139
    %s157 = sphi 0, %s157
    %s159 = sphi 0, %s157
    %s160 = sphi 0, %s159
    %s174 = sphi 0, %s160
    %s180 = sphi 0, %s182
    %s183 = sphi 0, %s180
    %s184 = sphi 0, %s183
    %s200 = sphi 0, %s184
  $region4: #{conv2x_forward.1} parent=0 // loop_header_branch
    %16 = sbr.rel (%p14) target = $region8
  $region5: #{conv2x_forward.1} parent=0 // loop_body
    %s18 = ssub.s32 %s13, 1
    %s19 = ssub.s32 %s13, 2
    %s20 = sadd.s32 %s13, 1
    %s21 = ssub.s32 %s13, %s20
    %p22 = scmp.eq.s32.totalorder %s21, 0
    %s24 = sadd.s32 %s23, 1
    %s25 = scalar_select %p22, %s23, %s24
    %p28 = pneg %p22
    %p29 = scmp.eq.s32.totalorder %s13, 1
    %p30 = por %p28, %p29
    %p31 = scmp.ne.s32.totalorder %s23, %s26
    %p32 = scmp.eq.s32.totalorder %s13, 0
    %p33 = por %p31, %p32
    %p34 = scmp.ne.s32.totalorder %s23, %s26
    %p35 = scmp.eq.s32.totalorder %s18, 1
    %p36 = por %p34, %p35
    %p37 = scmp.ne.s32.totalorder %s26, %s27
    %p38 = scmp.eq.s32.totalorder %s18, 0
    %p39 = por %p37, %p38
    %p40 = scmp.ne.s32.totalorder %s26, %s27
    %p41 = scmp.eq.s32.totalorder %s19, 1
    %p42 = por %p40, %p41
    %p44 = scmp.ne.s32.totalorder %s27, %s43
    %p45 = scmp.eq.s32.totalorder %s19, 0
    %p46 = por %p44, %p45
    %s48 = sadd.s32 %s47, 1
    %p51 = scmp.eq.s32.totalorder %s13, 1
    %p52 = scmp.ne.s32.totalorder %s47, %s49
    %p53 = scmp.eq.s32.totalorder %s13, 0
    %p54 = por %p52, %p53
    %p55 = scmp.ne.s32.totalorder %s47, %s49
    %p56 = scmp.eq.s32.totalorder %s18, 1
    %p57 = por %p55, %p56
    %p58 = scmp.ne.s32.totalorder %s49, %s50
    %p59 = scmp.eq.s32.totalorder %s18, 0
    %p60 = por %p58, %p59
    %p61 = scmp.ne.s32.totalorder %s49, %s50
    %p62 = scmp.eq.s32.totalorder %s19, 1
    %p63 = por %p61, %p62
    %p65 = scmp.ne.s32.totalorder %s50, %s64
    %p66 = scmp.eq.s32.totalorder %s19, 0
    %p67 = por %p65, %p66
    %s69 = sadd.s32 %s68, 1
    %p72 = scmp.eq.s32.totalorder %s13, 1
    %p73 = scmp.ne.s32.totalorder %s68, %s70
    %p74 = scmp.eq.s32.totalorder %s13, 0
    %p75 = por %p73, %p74
    %p76 = scmp.ne.s32.totalorder %s68, %s70
    %p77 = scmp.eq.s32.totalorder %s18, 1
    %p78 = por %p76, %p77
    %p79 = scmp.ne.s32.totalorder %s70, %s71
    %p80 = scmp.eq.s32.totalorder %s18, 0
    %p81 = por %p79, %p80
    %p82 = scmp.ne.s32.totalorder %s70, %s71
    %p83 = scmp.eq.s32.totalorder %s19, 1
    %p84 = por %p82, %p83
    %p86 = scmp.ne.s32.totalorder %s71, %s85
    %p87 = scmp.eq.s32.totalorder %s19, 0
    %p88 = por %p86, %p87
    %s89 = ssub.s32 %s13, %s20
    %p90 = scmp.eq.s32.totalorder %s89, 0
    %s92 = sadd.s32 %s91, 1
    %s93 = scalar_select %p90, %s91, %s92
    %p96 = pneg %p90
    %p97 = scmp.eq.s32.totalorder %s13, 1
    %p98 = por %p96, %p97
    %p99 = scmp.ne.s32.totalorder %s91, %s94
    %p100 = scmp.eq.s32.totalorder %s13, 0
    %p101 = por %p99, %p100
    %p102 = scmp.ne.s32.totalorder %s91, %s94
    %p103 = scmp.eq.s32.totalorder %s18, 1
    %p104 = por %p102, %p103
    %p105 = scmp.ne.s32.totalorder %s94, %s95
    %p106 = scmp.eq.s32.totalorder %s18, 0
    %p107 = por %p105, %p106
    %p108 = scmp.ne.s32.totalorder %s94, %s95
    %p109 = scmp.eq.s32.totalorder %s19, 1
    %p110 = por %p108, %p109
    %p112 = scmp.ne.s32.totalorder %s95, %s111
    %p113 = scmp.eq.s32.totalorder %s19, 0
    %p114 = por %p112, %p113
    %s116 = sadd.s32 %s115, 1
    %p119 = scmp.eq.s32.totalorder %s13, 1
    %p120 = scmp.ne.s32.totalorder %s115, %s117
    %p121 = scmp.eq.s32.totalorder %s13, 0
    %p122 = por %p120, %p121
    %p123 = scmp.ne.s32.totalorder %s115, %s117
    %p124 = scmp.eq.s32.totalorder %s18, 1
    %p125 = por %p123, %p124
    %p126 = scmp.ne.s32.totalorder %s117, %s118
    %p127 = scmp.eq.s32.totalorder %s18, 0
    %p128 = por %p126, %p127
    %p129 = scmp.ne.s32.totalorder %s117, %s118
    %p130 = scmp.eq.s32.totalorder %s19, 1
    %p131 = por %p129, %p130
    %p133 = scmp.ne.s32.totalorder %s118, %s132
    %p134 = scmp.eq.s32.totalorder %s19, 0
    %p135 = por %p133, %p134
    %s137 = sadd.s32 %s136, 1
    %p140 = scmp.eq.s32.totalorder %s13, 1
    %p141 = scmp.ne.s32.totalorder %s136, %s138
    %p142 = scmp.eq.s32.totalorder %s13, 0
    %p143 = por %p141, %p142
    %p144 = scmp.ne.s32.totalorder %s136, %s138
    %p145 = scmp.eq.s32.totalorder %s18, 1
    %p146 = por %p144, %p145
    %p147 = scmp.ne.s32.totalorder %s138, %s139
    %p148 = scmp.eq.s32.totalorder %s18, 0
    %p149 = por %p147, %p148
    %p150 = scmp.ne.s32.totalorder %s138, %s139
    %p151 = scmp.eq.s32.totalorder %s19, 1
    %p152 = por %p150, %p151
    %p154 = scmp.ne.s32.totalorder %s139, %s153
    %p155 = scmp.eq.s32.totalorder %s19, 0
    %p156 = por %p154, %p155
    %s158 = sadd.s32 %s157, 1
    %p161 = scmp.eq.s32.totalorder %s13, 1
    %p162 = scmp.ne.s32.totalorder %s157, %s159
    %p163 = scmp.eq.s32.totalorder %s13, 0
    %p164 = por %p162, %p163
    %p165 = scmp.ne.s32.totalorder %s157, %s159
    %p166 = scmp.eq.s32.totalorder %s18, 1
    %p167 = por %p165, %p166
    %p168 = scmp.ne.s32.totalorder %s159, %s160
    %p169 = scmp.eq.s32.totalorder %s18, 0
    %p170 = por %p168, %p169
    %p171 = scmp.ne.s32.totalorder %s159, %s160
    %p172 = scmp.eq.s32.totalorder %s19, 1
    %p173 = por %p171, %p172
    %p175 = scmp.ne.s32.totalorder %s160, %s174
    %p176 = scmp.eq.s32.totalorder %s19, 0
    %p177 = por %p175, %p176
    %s178 = ssub.s32 %s13, %s20
    %p179 = scmp.eq.s32.totalorder %s178, 0
    %s181 = sadd.s32 %s180, 1
    %s182 = scalar_select %p179, %s180, %s181
    %p185 = pneg %p179
    %p186 = scmp.eq.s32.totalorder %s13, 1
    %p187 = por %p185, %p186
    %p188 = scmp.ne.s32.totalorder %s180, %s183
    %p189 = scmp.eq.s32.totalorder %s13, 0
    %p190 = por %p188, %p189
    %p191 = scmp.ne.s32.totalorder %s180, %s183
    %p192 = scmp.eq.s32.totalorder %s18, 1
    %p193 = por %p191, %p192
    %p194 = scmp.ne.s32.totalorder %s183, %s184
    %p195 = scmp.eq.s32.totalorder %s18, 0
    %p196 = por %p194, %p195
    %p197 = scmp.ne.s32.totalorder %s183, %s184
    %p198 = scmp.eq.s32.totalorder %s19, 1
    %p199 = por %p197, %p198
    %p201 = scmp.ne.s32.totalorder %s184, %s200
    %p202 = scmp.eq.s32.totalorder %s19, 0
    %p203 = por %p201, %p202
    %p204 = scmp.le.s32.totalorder 1, %s13
    %p205 = scmp.lt.s32.totalorder %s13, 3
    %p206 = pnand %p204, %p205
    %p207 = pneg %p206
    // Predicated region
    $region9: #{conv2x_forward.1} parent=5 // pred_check
      _
    $region10: #{conv2x_forward.1} parent=5 // pred_check_branch
      %209 = sbr.rel (%p206) target = $region12
    $region11: #{conv2x_forward.1} parent=5 // pred_region
      %s210 = ssub.s32 %s13, 1
      // Predicated region
      $region13: #{conv2x_forward.1} parent=11 // pred_check
        %p211 = pneg %p60
      $region14: #{conv2x_forward.1} parent=11 // pred_check_branch
        %213 = sbr.rel (%p211) target = $region16
      $region15: #{conv2x_forward.1} parent=11 // pred_region
        _
      $region16: #{conv2x_forward.1} parent=11 // pred_fallthru
        _
      // Predicated region
      $region17: #{conv2x_forward.1} parent=11 // pred_check
        %p214 = pneg %p81
      $region18: #{conv2x_forward.1} parent=11 // pred_check_branch
        %216 = sbr.rel (%p214) target = $region20
      $region19: #{conv2x_forward.1} parent=11 // pred_region
        _
      $region20: #{conv2x_forward.1} parent=11 // pred_fallthru
        _
      // Predicated region
      $region21: #{conv2x_forward.1} parent=11 // pred_check
        %p217 = pneg %p128
      $region22: #{conv2x_forward.1} parent=11 // pred_check_branch
        %219 = sbr.rel (%p217) target = $region24
      $region23: #{conv2x_forward.1} parent=11 // pred_region
        _
      $region24: #{conv2x_forward.1} parent=11 // pred_fallthru
        _
      // Predicated region
      $region25: #{conv2x_forward.1} parent=11 // pred_check
        %p220 = pneg %p149
      $region26: #{conv2x_forward.1} parent=11 // pred_check_branch
        %222 = sbr.rel (%p220) target = $region28
      $region27: #{conv2x_forward.1} parent=11 // pred_region
        _
      $region28: #{conv2x_forward.1} parent=11 // pred_fallthru
        _
      // Predicated region
      $region29: #{conv2x_forward.1} parent=11 // pred_check
        %p223 = pneg %p170
      $region30: #{conv2x_forward.1} parent=11 // pred_check_branch
        %225 = sbr.rel (%p223) target = $region32
      $region31: #{conv2x_forward.1} parent=11 // pred_region
        _
      $region32: #{conv2x_forward.1} parent=11 // pred_fallthru
        _
    $region12: #{conv2x_forward.1} parent=5 // pred_fallthru
      _
    %p226 = scmp.lt.s32.totalorder %s13, 2
    // Predicated region
    $region33: #{conv2x_forward.1} parent=5 // pred_check
      %p227 = pneg %p226
    $region34: #{conv2x_forward.1} parent=5 // pred_check_branch
      %229 = sbr.rel (%p227) target = $region36
    $region35: #{conv2x_forward.1} parent=5 // pred_region
      // Predicated region
      $region37: #{conv2x_forward.1} parent=35 // pred_check
        %p230 = pneg %p33
      $region38: #{conv2x_forward.1} parent=35 // pred_check_branch
        %232 = sbr.rel (%p230) target = $region40
      $region39: #{conv2x_forward.1} parent=35 // pred_region
        %s233 = smul.u32 8, %s13
        %p234 = scmp.lt.s32.totalorder %s233, 15
        %s235 = scalar_select %p234, %s233, 15
        %s236 = smul.addr %s235, 4
        %s237 = scalar_lea.vmem %s0, %s236
        %s238 = smul.u32 8, %s13
      $region40: #{conv2x_forward.1} parent=35 // pred_fallthru
        _
      // Predicated region
      $region41: #{conv2x_forward.1} parent=35 // pred_check
        %p239 = pneg %p101
      $region42: #{conv2x_forward.1} parent=35 // pred_check_branch
        %241 = sbr.rel (%p239) target = $region44
      $region43: #{conv2x_forward.1} parent=35 // pred_region
        %p242 = scmp.lt.s32.totalorder %s13, 1
        %s243 = scalar_select %p242, %s13, 1
        %s244 = smul.addr %s243, 20
        %s245 = smul.addr %s244, 4
        %s246 = scalar_lea.vmem %s3, %s245
      $region44: #{conv2x_forward.1} parent=35 // pred_fallthru
        _
    $region36: #{conv2x_forward.1} parent=5 // pred_fallthru
      _
    %p247 = scmp.le.s32.totalorder 1, %s13
    %p248 = scmp.lt.s32.totalorder %s13, 3
    %p249 = pnand %p247, %p248
    %p250 = pneg %p249
    // Predicated region
    $region45: #{conv2x_forward.1} parent=5 // pred_check
      _
    $region46: #{conv2x_forward.1} parent=5 // pred_check_branch
      %252 = sbr.rel (%p249) target = $region48
    $region47: #{conv2x_forward.1} parent=5 // pred_region
      %s253 = ssub.s32 %s13, 1
      %s254 = smul.u32 8, %s18
      %p255 = scmp.lt.s32.totalorder %s254, 15
      %s256 = scalar_select %p255, %s254, 15
      %s257 = smul.addr %s256, 4
      %s258 = scalar_lea.vmem %s0, %s257
      %p259 = pneg %p39
      %p260 = pneg %p36
      %p261 = pneg %p60
      %p262 = pneg %p57
      %p263 = pneg %p81
      %p264 = pneg %p78
      %p265 = scmp.lt.s32.totalorder %s18, 1
      %s266 = scalar_select %p265, %s18, 1
      %s267 = smul.addr %s266, 20
      %s268 = smul.addr %s267, 4
      %s269 = scalar_lea.vmem %s3, %s268
      %p270 = pneg %p107
      %p271 = pneg %p104
      %p272 = pneg %p128
      %p273 = pneg %p125
      %p274 = pneg %p149
      %p275 = pneg %p146
      %p276 = pneg %p170
      %p277 = pneg %p167
      %p278 = pneg %p196
      %p279 = pneg %p193
      %p280 = scmp.lt.s32.totalorder %s18, 1
      %s281 = scalar_select %p280, %s18, 1
      %s282 = smul.addr %s281, 8
      %s283 = smul.addr %s282, 8
      %s284 = scalar_lea.vmem %s7, %s283
      %s285 = smul.u32 8, %s18
      %p286 = scmp.lt.s32.totalorder %s285, 15
      %s287 = scalar_select %p286, %s285, 15
      %s288 = smul.addr %s287, 4
      %s289 = scalar_lea.vmem %s0, %s288
      %s290 = smul.u32 8, %s18
      %p291 = scmp.lt.s32.totalorder %s18, 1
      %s292 = scalar_select %p291, %s18, 1
      %s293 = smul.addr %s292, 20
      %s294 = smul.addr %s293, 4
      %s295 = scalar_lea.vmem %s3, %s294
      %p296 = scmp.lt.s32.totalorder %s18, 1
      %s297 = scalar_select %p296, %s18, 1
      %s298 = smul.addr %s297, 8
      %s299 = smul.addr %s298, 8
      %s300 = scalar_lea.vmem %s7, %s299
      %v302 = vld [vmem:[%s289] sm:$0xf]
      %v303 = vld [vmem:[%s289 + $0x4] sm:$0xf]
      %v304 = vld [vmem:[%s289 + $0x8] sm:$0xf]
      %v305 = vld [vmem:[%s289 + $0xc] sm:$0xf]
      %v306 = vld [vmem:[%s289 + $0x10] sm:$0xf]
      %v307 = vld [vmem:[%s289 + $0x14] sm:$0xf]
      %v308 = vld [vmem:[%s289 + $0x18] sm:$0xf]
      %v309 = vld [vmem:[%s289 + $0x1c] sm:$0xf]
      %v310 = vld [vmem:[%s1] sm:$0xf]
      %v311 = vld [vmem:[%s1 + $0x4] sm:$0xf]
      %v312 = vld [vmem:[%s1 + $0x8] sm:$0xf]
      %v313 = vld [vmem:[%s1 + $0xc] sm:$0xf]
      %v314 = vld [vmem:[%s1 + $0x10] sm:$0xf]
      %v315 = vld [vmem:[%s1 + $0x14] sm:$0xf]
      %v316 = vld [vmem:[%s1 + $0x18] sm:$0xf]
      %v317 = vld [vmem:[%s1 + $0x1c] sm:$0xf]
      %v318 = vld [vmem:[%s1 + $0x20] sm:$0xf]
      %v319 = vld [vmem:[%s1 + $0x24] sm:$0xf]
      %v320 = vld [vmem:[%s1 + $0x28] sm:$0xf]
      %v321 = vld [vmem:[%s1 + $0x2c] sm:$0xf]
      %v322 = vld [vmem:[%s1 + $0x30] sm:$0xf]
      %v323 = vld [vmem:[%s1 + $0x34] sm:$0xf]
      %v324 = vld [vmem:[%s1 + $0x38] sm:$0xf]
      %v325 = vld [vmem:[%s1 + $0x3c] sm:$0xf]
      %v326 = vld [vmem:[%s2] sm:$0x1]
      %v328 = vlaneseq
      %v329 = vshrl.u32 %v328, 7
      %v330 = vsub.s32 0, %v329
      %v331 = vrot.slane %v326, %v330
      %v341 = vunpack.c.l.b16 %v302
      %v342 = vunpack.c.l.b16 %v303
      %v343 = vunpack.c.l.b16 %v304
      %v344 = vunpack.c.l.b16 %v305
      %v345 = vunpack.c.l.b16 %v306
      %v346 = vunpack.c.l.b16 %v307
      %v347 = vunpack.c.l.b16 %v308
      %v348 = vunpack.c.l.b16 %v309
      %v349 = vpack.c.b16 %v342, %v341
      %v350 = vpack.c.b16 %v344, %v343
      %v351 = vpack.c.b16 %v346, %v345
      %v352 = vpack.c.b16 %v348, %v347
      %v373 = vunpack.c.l.b16 %v310
      %v374 = vunpack.c.l.b16 %v311
      %v375 = vunpack.c.l.b16 %v312
      %v376 = vunpack.c.l.b16 %v313
      %v377 = vunpack.c.l.b16 %v314
      %v378 = vunpack.c.l.b16 %v315
      %v379 = vunpack.c.l.b16 %v316
      %v380 = vunpack.c.l.b16 %v317
      %v381 = vunpack.c.l.b16 %v318
      %v382 = vunpack.c.l.b16 %v319
      %v383 = vunpack.c.l.b16 %v320
      %v384 = vunpack.c.l.b16 %v321
      %v385 = vunpack.c.l.b16 %v322
      %v386 = vunpack.c.l.b16 %v323
      %v387 = vunpack.c.l.b16 %v324
      %v388 = vunpack.c.l.b16 %v325
      %v389 = vpack.c.b16 %v374, %v373
      %v390 = vpack.c.b16 %v376, %v375
      %v391 = vpack.c.b16 %v378, %v377
      %v392 = vpack.c.b16 %v380, %v379
      %v393 = vpack.c.b16 %v382, %v381
      %v394 = vpack.c.b16 %v384, %v383
      %v395 = vpack.c.b16 %v386, %v385
      %v396 = vpack.c.b16 %v388, %v387
      %405 = vmatprep.subr.bf16.mxu0 0
      %406 = vmatpush1.bf16.msra.mxu0 %v389
      %407 = vmatprep.subr.bf16.mxu0 0
      %408 = vmatpush1.bf16.msra.mxu0 %v390
      %409 = vmatprep.subr.bf16.mxu0 0
      %410 = vmatpush1.bf16.msra.mxu0 %v391
      %411 = vmatprep.subr.bf16.mxu0 0
      %412 = vmatpush1.bf16.msra.mxu0 %v392
      %413 = vmatprep.subr.bf16.mxu0 0
      %414 = vmatpush1.bf16.msra.mxu0 %v393
      %415 = vmatprep.subr.bf16.mxu0 0
      %416 = vmatpush1.bf16.msra.mxu0 %v394
      %417 = vmatprep.subr.bf16.mxu0 0
      %418 = vmatpush1.bf16.msra.mxu0 %v395
      %419 = vmatprep.subr.bf16.mxu0 0
      %420 = vmatpush1.bf16.msra.mxu0 %v396
      %421 = vmatprep.subr.bf16.mxu0 0
      %422 = vmatpush1.bf16.msra.mxu0 0
      %423 = vmatprep.subr.bf16.mxu0 0
      %424 = vmatpush1.bf16.msra.mxu0 0
      %425 = vmatprep.subr.bf16.mxu0 0
      %426 = vmatpush1.bf16.msra.mxu0 0
      %427 = vmatprep.subr.bf16.mxu0 0
      %428 = vmatpush1.bf16.msra.mxu0 0
      %429 = vmatprep.subr.bf16.mxu0 0
      %430 = vmatpush1.bf16.msra.mxu0 0
      %431 = vmatprep.subr.bf16.mxu0 0
      %432 = vmatpush1.bf16.msra.mxu0 0
      %433 = vmatprep.subr.bf16.mxu0 0
      %434 = vmatpush1.bf16.msra.mxu0 0
      %435 = vmatprep.subr.bf16.mxu0 0
      %436 = vmatpush1.bf16.msra.mxu0 0
      %437 = vmatprep.mubr.bf16.mxu0 0
      %438 = vmatmul.mubr.bf16.gmra.mrb[0].mxu0 %v349
      %v439 = vpop.f32.mrb[0].mxu0
      %v440 = vadd.f32 %v331, %v439
      %v441 = vpop.f32.mrb[0].mxu0
      %v442 = vpop.f32.mrb[0].mxu0
      %v443 = vadd.f32 %v331, %v442
      %v444 = vpop.f32.mrb[0].mxu0
      %445 = vmatprep.mubr.bf16.mxu0 0
      %446 = vmatmul.mubr.bf16.gmra.mrb[0].mxu0 %v350
      %v447 = vpop.f32.mrb[0].mxu0
      %v448 = vadd.f32 %v331, %v447
      %v449 = vpop.f32.mrb[0].mxu0
      %v450 = vpop.f32.mrb[0].mxu0
      %v451 = vadd.f32 %v331, %v450
      %v452 = vpop.f32.mrb[0].mxu0
      %453 = vmatprep.mubr.bf16.mxu0 0
      %454 = vmatmul.mubr.bf16.gmra.mrb[0].mxu0 %v351
      %v455 = vpop.f32.mrb[0].mxu0
      %v456 = vadd.f32 %v331, %v455
      %v457 = vpop.f32.mrb[0].mxu0
      %v458 = vpop.f32.mrb[0].mxu0
      %v459 = vadd.f32 %v331, %v458
      %v460 = vpop.f32.mrb[0].mxu0
      %461 = vmatprep.mubr.bf16.mxu0 0
      %462 = vmatmul.mubr.bf16.gmra.mrb[0].mxu0 %v352
      %v463 = vpop.f32.mrb[0].mxu0
      %v464 = vadd.f32 %v331, %v463
      %v465 = vpop.f32.mrb[0].mxu0
      %v466 = vpop.f32.mrb[0].mxu0
      %v467 = vadd.f32 %v331, %v466
      %v468 = vpop.f32.mrb[0].mxu0
      %469 = vdwg.mxu0
      %v470 = vmul.f32 %v440, 0.01
      %v471 = vmul.f32 %v443, 0.01
      %v472 = vmul.f32 %v448, 0.01
      %v473 = vmul.f32 %v451, 0.01
      %v474 = vmul.f32 %v456, 0.01
      %v475 = vmul.f32 %v459, 0.01
      %v476 = vmul.f32 %v464, 0.01
      %v477 = vmul.f32 %v467, 0.01
      %v478 = vmax.f32 %v440, %v470
      %v479 = vmax.f32 %v443, %v471
      %v480 = vmax.f32 %v448, %v472
      %v481 = vmax.f32 %v451, %v473
      %v482 = vmax.f32 %v456, %v474
      %v483 = vmax.f32 %v459, %v475
      %v484 = vmax.f32 %v464, %v476
      %v485 = vmax.f32 %v467, %v477
      %vm486 = vcmask 27648
      %487 = vst.msk [vmem:[#allocation2] sm:$0xf] %vm486, 0
      %vm488 = vcmask 24576
      %489 = vst.msk [vmem:[#allocation2 + $0x4] sm:$0x1] %vm488, 0
      %490 = vst.msk [vmem:[#allocation2 + $0x8] sm:$0xf] %vm486, 0
      %491 = vst.msk [vmem:[#allocation2 + $0xc] sm:$0x1] %vm488, 0
      %492 = vst.msk [vmem:[#allocation2 + $0x10] sm:$0xf] %vm486, 0
      %493 = vst.msk [vmem:[#allocation2 + $0x14] sm:$0x1] %vm488, 0
      %494 = vst.msk [vmem:[#allocation2 + $0x18] sm:$0xf] %vm486, 0
      %495 = vst.msk [vmem:[#allocation2 + $0x1c] sm:$0x1] %vm488, 0
      %496 = vst.msk [vmem:[#allocation2 + $0x20] sm:$0xf] %vm486, 0
      %497 = vst.msk [vmem:[#allocation2 + $0x24] sm:$0x1] %vm488, 0
      %498 = vst.msk [vmem:[#allocation2 + $0x28] sm:$0xf] %vm486, 0
      %499 = vst.msk [vmem:[#allocation2 + $0x2c] sm:$0x1] %vm488, 0
      %500 = vst.msk [vmem:[#allocation2 + $0x30] sm:$0xf] %vm486, 0
      %501 = vst.msk [vmem:[#allocation2 + $0x34] sm:$0x1] %vm488, 0
      %502 = vst.msk [vmem:[#allocation2 + $0x38] sm:$0xf] %vm486, 0
      %503 = vst.msk [vmem:[#allocation2 + $0x3c] sm:$0x1] %vm488, 0
      %504 = vst.msk [vmem:[#allocation2 + $0x40] sm:$0xf] %vm486, 0
      %505 = vst.msk [vmem:[#allocation2 + $0x44] sm:$0x1] %vm488, 0
      %506 = vst.msk [vmem:[#allocation2 + $0x48] sm:$0xf] %vm486, 0
      %507 = vst.msk [vmem:[#allocation2 + $0x4c] sm:$0x1] %vm488, 0
      %v508 = vpack.c.bf16 %v479, %v478
      %v509 = vpack.c.bf16 %v481, %v480
      %v510 = vpack.c.bf16 %v483, %v482
      %v511 = vpack.c.bf16 %v485, %v484
      %v516 = vunpack.c.l.b16 %v508
      %v517 = vunpack.c.h.b16 %v508
      %v518 = vunpack.c.l.b16 %v509
      %v519 = vunpack.c.h.b16 %v509
      %v520 = vunpack.c.l.b16 %v510
      %v521 = vunpack.c.h.b16 %v510
      %v522 = vunpack.c.l.b16 %v511
      %v523 = vunpack.c.h.b16 %v511
      %v524 = vpack.c.b16 %v516, %v516
      %v525 = vpack.c.b16 %v517, %v517
      %v526 = vpack.c.b16 %v518, %v518
      %v527 = vpack.c.b16 %v519, %v519
      %v528 = vpack.c.b16 %v520, %v520
      %v529 = vpack.c.b16 %v521, %v521
      %v530 = vpack.c.b16 %v522, %v522
      %v531 = vpack.c.b16 %v523, %v523
      %v533 = vshrl.u32 %v524, 16
      %v535 = vrot.slane %v533, 7
      %v536 = vshll.u32 %v524, 16
      %v538 = vor.u32 %v535, %v536
      %v539 = vrot.slane %v535, 4
      %v541 = vshrl.u32 %v525, 16
      %v543 = vrot.slane %v541, 7
      %v544 = vshll.u32 %v525, 16
      %v546 = vor.u32 %v543, %v544
      %v547 = vrot.slane %v543, 4
      %v549 = vshrl.u32 %v526, 16
      %v551 = vrot.slane %v549, 7
      %v552 = vshll.u32 %v526, 16
      %v554 = vor.u32 %v551, %v552
      %v555 = vrot.slane %v551, 4
      %v557 = vshrl.u32 %v527, 16
      %v559 = vrot.slane %v557, 7
      %v560 = vshll.u32 %v527, 16
      %v562 = vor.u32 %v559, %v560
      %v563 = vrot.slane %v559, 4
      %v565 = vshrl.u32 %v528, 16
      %v567 = vrot.slane %v565, 7
      %v568 = vshll.u32 %v528, 16
      %v570 = vor.u32 %v567, %v568
      %v571 = vrot.slane %v567, 4
      %v573 = vshrl.u32 %v529, 16
      %v575 = vrot.slane %v573, 7
      %v576 = vshll.u32 %v529, 16
      %v578 = vor.u32 %v575, %v576
      %v579 = vrot.slane %v575, 4
      %v581 = vshrl.u32 %v530, 16
      %v583 = vrot.slane %v581, 7
      %v584 = vshll.u32 %v530, 16
      %v586 = vor.u32 %v583, %v584
      %v587 = vrot.slane %v583, 4
      %v589 = vshrl.u32 %v531, 16
      %v591 = vrot.slane %v589, 7
      %v592 = vshll.u32 %v531, 16
      %v594 = vor.u32 %v591, %v592
      %v595 = vrot.slane %v591, 4
      %s612 = scalar_lea.vmem [#allocation2], 8
      %vm613 = vcmask 27648
      %vm614 = vsmask.f32 7938
      %vm615 = vmand %vm613, %vm614
      %v616 = vld [vmem:[%s612] sm:$0xf]
      %v617 = vsel %vm615, %v538, %v616
      %618 = vst [vmem:[%s612] sm:$0xf] %v617
      %vm619 = vcmask 24576
      %vm620 = vsmask.f32 256
      %vm621 = vmand %vm619, %vm620
      %v622 = vld [vmem:[%s612 + $0x4] sm:$0x1]
      %v623 = vsel %vm621, %v539, %v622
      %624 = vst [vmem:[%s612 + $0x4] sm:$0x1] %v623
      %v625 = vld [vmem:[%s612 + $0x8] sm:$0xf]
      %v626 = vsel %vm615, %v546, %v625
      %627 = vst [vmem:[%s612 + $0x8] sm:$0xf] %v626
      %v628 = vld [vmem:[%s612 + $0xc] sm:$0x1]
      %v629 = vsel %vm621, %v547, %v628
      %630 = vst [vmem:[%s612 + $0xc] sm:$0x1] %v629
      %v631 = vld [vmem:[%s612 + $0x10] sm:$0xf]
      %v632 = vsel %vm615, %v554, %v631
      %633 = vst [vmem:[%s612 + $0x10] sm:$0xf] %v632
      %v634 = vld [vmem:[%s612 + $0x14] sm:$0x1]
      %v635 = vsel %vm621, %v555, %v634
      %636 = vst [vmem:[%s612 + $0x14] sm:$0x1] %v635
      %v637 = vld [vmem:[%s612 + $0x18] sm:$0xf]
      %v638 = vsel %vm615, %v562, %v637
      %639 = vst [vmem:[%s612 + $0x18] sm:$0xf] %v638
      %v640 = vld [vmem:[%s612 + $0x1c] sm:$0x1]
      %v641 = vsel %vm621, %v563, %v640
      %642 = vst [vmem:[%s612 + $0x1c] sm:$0x1] %v641
      %v643 = vld [vmem:[%s612 + $0x20] sm:$0xf]
      %v644 = vsel %vm615, %v570, %v643
      %645 = vst [vmem:[%s612 + $0x20] sm:$0xf] %v644
      %v646 = vld [vmem:[%s612 + $0x24] sm:$0x1]
      %v647 = vsel %vm621, %v571, %v646
      %648 = vst [vmem:[%s612 + $0x24] sm:$0x1] %v647
      %v649 = vld [vmem:[%s612 + $0x28] sm:$0xf]
      %v650 = vsel %vm615, %v578, %v649
      %651 = vst [vmem:[%s612 + $0x28] sm:$0xf] %v650
      %v652 = vld [vmem:[%s612 + $0x2c] sm:$0x1]
      %v653 = vsel %vm621, %v579, %v652
      %654 = vst [vmem:[%s612 + $0x2c] sm:$0x1] %v653
      %v655 = vld [vmem:[%s612 + $0x30] sm:$0xf]
      %v656 = vsel %vm615, %v586, %v655
      %657 = vst [vmem:[%s612 + $0x30] sm:$0xf] %v656
      %v658 = vld [vmem:[%s612 + $0x34] sm:$0x1]
      %v659 = vsel %vm621, %v587, %v658
      %660 = vst [vmem:[%s612 + $0x34] sm:$0x1] %v659
      %v661 = vld [vmem:[%s612 + $0x38] sm:$0xf]
      %v662 = vsel %vm615, %v594, %v661
      %663 = vst [vmem:[%s612 + $0x38] sm:$0xf] %v662
      %v664 = vld [vmem:[%s612 + $0x3c] sm:$0x1]
      %v665 = vsel %vm621, %v595, %v664
      %666 = vst [vmem:[%s612 + $0x3c] sm:$0x1] %v665
      %v667 = vld [vmem:[#allocation2] sm:$0xf]
      %v668 = vld [vmem:[#allocation2 + $0x8] sm:$0xf]
      %v669 = vld [vmem:[#allocation2 + $0x10] sm:$0xf]
      %v670 = vld [vmem:[#allocation2 + $0x18] sm:$0xf]
      %v671 = vld [vmem:[#allocation2 + $0x20] sm:$0xf]
      %v672 = vld [vmem:[#allocation2 + $0x28] sm:$0xf]
      %v673 = vld [vmem:[#allocation2 + $0x30] sm:$0xf]
      %v674 = vld [vmem:[#allocation2 + $0x38] sm:$0xf]
      %v675 = vld [vmem:[%s295] sm:$0xf]
      %v676 = vld [vmem:[%s295 + $0x8] sm:$0xf]
      %v677 = vld [vmem:[%s295 + $0x10] sm:$0xf]
      %v678 = vld [vmem:[%s295 + $0x18] sm:$0xf]
      %v679 = vld [vmem:[%s295 + $0x20] sm:$0xf]
      %v680 = vld [vmem:[%s295 + $0x28] sm:$0xf]
      %v681 = vld [vmem:[%s295 + $0x30] sm:$0xf]
      %v682 = vld [vmem:[%s295 + $0x38] sm:$0xf]
      %v683 = vld [vmem:[%s4] sm:$0x3]
      %v684 = vld [vmem:[%s5] sm:$0x3]
      %v693 = vunpack.c.l.b16 %v675
      %v694 = vunpack.c.l.b16 %v676
      %v695 = vunpack.c.l.b16 %v677
      %v696 = vunpack.c.l.b16 %v678
      %v697 = vunpack.c.l.b16 %v679
      %v698 = vunpack.c.l.b16 %v680
      %v699 = vunpack.c.l.b16 %v681
      %v700 = vunpack.c.l.b16 %v682
      %v701 = vpack.c.b16 %v694, %v693
      %v702 = vpack.c.b16 %v696, %v695
      %v703 = vpack.c.b16 %v698, %v697
      %v704 = vpack.c.b16 %v700, %v699
      %vm705 = vcmask 31744
      %v707 = vsel %vm705, %v701, 0
      %v710 = vsel %vm705, %v702, 0
      %v713 = vsel %vm705, %v703, 0
      %v716 = vsel %vm705, %v704, 0
      %vm718 = vcmask 1041408
      %v720 = vsel %vm718, %v684, 0
      %722 = vmatprep.subr.bf16.mxu0 0
      %723 = vmatpush1.bf16.msra.mxu0 %v720
      %724 = vmatprep.subr.bf16.mxu0 0
      %725 = vmatpush1.bf16.msra.mxu0 0
      %726 = vmatprep.subr.bf16.mxu0 0
      %727 = vmatpush1.bf16.msra.mxu0 0
      %728 = vmatprep.subr.bf16.mxu0 0
      %729 = vmatpush1.bf16.msra.mxu0 0
      %730 = vmatprep.subr.bf16.mxu0 0
      %731 = vmatpush1.bf16.msra.mxu0 0
      %732 = vmatprep.subr.bf16.mxu0 0
      %733 = vmatpush1.bf16.msra.mxu0 0
      %734 = vmatprep.subr.bf16.mxu0 0
      %735 = vmatpush1.bf16.msra.mxu0 0
      %736 = vmatprep.subr.bf16.mxu0 0
      %737 = vmatpush1.bf16.msra.mxu0 0
      %738 = vmatprep.subr.bf16.mxu0 0
      %739 = vmatpush1.bf16.msra.mxu0 0
      %740 = vmatprep.subr.bf16.mxu0 0
      %741 = vmatpush1.bf16.msra.mxu0 0
      %742 = vmatprep.subr.bf16.mxu0 0
      %743 = vmatpush1.bf16.msra.mxu0 0
      %744 = vmatprep.subr.bf16.mxu0 0
      %745 = vmatpush1.bf16.msra.mxu0 0
      %746 = vmatprep.subr.bf16.mxu0 0
      %747 = vmatpush1.bf16.msra.mxu0 0
      %748 = vmatprep.subr.bf16.mxu0 0
      %749 = vmatpush1.bf16.msra.mxu0 0
      %750 = vmatprep.subr.bf16.mxu0 0
      %751 = vmatpush1.bf16.msra.mxu0 0
      %752 = vmatprep.subr.bf16.mxu0 0
      %753 = vmatpush1.bf16.msra.mxu0 0
      %754 = vmatprep.mubr.bf16.mxu0 0
      %755 = vmatmul.mubr.bf16.gmra.mrb[0].mxu0 %v707
      %v756 = vpop.f32.mrb[0].mxu0
      %v757 = vadd.f32 0.0, %v756
      %v758 = vpop.f32.mrb[0].mxu0
      %v759 = vpop.f32.mrb[0].mxu0
      %v760 = vadd.f32 0.0, %v759
      %v761 = vpop.f32.mrb[0].mxu0
      %762 = vmatprep.mubr.bf16.mxu0 0
      %763 = vmatmul.mubr.bf16.gmra.mrb[0].mxu0 %v710
      %v764 = vpop.f32.mrb[0].mxu0
      %v765 = vadd.f32 0.0, %v764
      %v766 = vpop.f32.mrb[0].mxu0
      %v767 = vpop.f32.mrb[0].mxu0
      %v768 = vadd.f32 0.0, %v767
      %v769 = vpop.f32.mrb[0].mxu0
      %770 = vmatprep.mubr.bf16.mxu0 0
      %771 = vmatmul.mubr.bf16.gmra.mrb[0].mxu0 %v713
      %v772 = vpop.f32.mrb[0].mxu0
      %v773 = vadd.f32 0.0, %v772
      %v774 = vpop.f32.mrb[0].mxu0
      %v775 = vpop.f32.mrb[0].mxu0
      %v776 = vadd.f32 0.0, %v775
      %v777 = vpop.f32.mrb[0].mxu0
      %778 = vmatprep.mubr.bf16.mxu0 0
      %779 = vmatmul.mubr.bf16.gmra.mrb[0].mxu0 %v716
      %v780 = vpop.f32.mrb[0].mxu0
      %v781 = vadd.f32 0.0, %v780
      %v782 = vpop.f32.mrb[0].mxu0
      %v783 = vpop.f32.mrb[0].mxu0
      %v784 = vadd.f32 0.0, %v783
      %v785 = vpop.f32.mrb[0].mxu0
      %786 = vdwg.mxu0
      %v795 = vunpack.c.l.b16 %v667
      %v796 = vunpack.c.l.b16 %v668
      %v797 = vunpack.c.l.b16 %v669
      %v798 = vunpack.c.l.b16 %v670
      %v799 = vunpack.c.l.b16 %v671
      %v800 = vunpack.c.l.b16 %v672
      %v801 = vunpack.c.l.b16 %v673
      %v802 = vunpack.c.l.b16 %v674
      %v803 = vpack.c.b16 %v796, %v795
      %v804 = vpack.c.b16 %v798, %v797
      %v805 = vpack.c.b16 %v800, %v799
      %v806 = vpack.c.b16 %v802, %v801
      %v808 = vsel %vm705, %v803, 0
      %v811 = vsel %vm705, %v804, 0
      %v814 = vsel %vm705, %v805, 0
      %v817 = vsel %vm705, %v806, 0
      %v820 = vsel %vm718, %v683, 0
      %822 = vmatprep.subr.bf16.mxu0 0
      %823 = vmatpush1.bf16.msra.mxu0 %v820
      %824 = vmatprep.subr.bf16.mxu0 0
      %825 = vmatpush1.bf16.msra.mxu0 0
      %826 = vmatprep.subr.bf16.mxu0 0
      %827 = vmatpush1.bf16.msra.mxu0 0
      %828 = vmatprep.subr.bf16.mxu0 0
      %829 = vmatpush1.bf16.msra.mxu0 0
      %830 = vmatprep.subr.bf16.mxu0 0
      %831 = vmatpush1.bf16.msra.mxu0 0
      %832 = vmatprep.subr.bf16.mxu0 0
      %833 = vmatpush1.bf16.msra.mxu0 0
      %834 = vmatprep.subr.bf16.mxu0 0
      %835 = vmatpush1.bf16.msra.mxu0 0
      %836 = vmatprep.subr.bf16.mxu0 0
      %837 = vmatpush1.bf16.msra.mxu0 0
      %838 = vmatprep.subr.bf16.mxu0 0
      %839 = vmatpush1.bf16.msra.mxu0 0
      %840 = vmatprep.subr.bf16.mxu0 0
      %841 = vmatpush1.bf16.msra.mxu0 0
      %842 = vmatprep.subr.bf16.mxu0 0
      %843 = vmatpush1.bf16.msra.mxu0 0
      %844 = vmatprep.subr.bf16.mxu0 0
      %845 = vmatpush1.bf16.msra.mxu0 0
      %846 = vmatprep.subr.bf16.mxu0 0
      %847 = vmatpush1.bf16.msra.mxu0 0
      %848 = vmatprep.subr.bf16.mxu0 0
      %849 = vmatpush1.bf16.msra.mxu0 0
      %850 = vmatprep.subr.bf16.mxu0 0
      %851 = vmatpush1.bf16.msra.mxu0 0
      %852 = vmatprep.subr.bf16.mxu0 0
      %853 = vmatpush1.bf16.msra.mxu0 0
      %854 = vmatprep.mubr.bf16.mxu0 0
      %855 = vmatmul.mubr.bf16.gmra.mrb[0].mxu0 %v808
      %v856 = vpop.f32.mrb[0].mxu0
      %v857 = vadd.f32 %v757, %v856
      %v858 = vpop.f32.mrb[0].mxu0
      %v859 = vpop.f32.mrb[0].mxu0
      %v860 = vadd.f32 %v760, %v859
      %v861 = vpop.f32.mrb[0].mxu0
      %862 = vmatprep.mubr.bf16.mxu0 0
      %863 = vmatmul.mubr.bf16.gmra.mrb[0].mxu0 %v811
      %v864 = vpop.f32.mrb[0].mxu0
      %v865 = vadd.f32 %v765, %v864
      %v866 = vpop.f32.mrb[0].mxu0
      %v867 = vpop.f32.mrb[0].mxu0
      %v868 = vadd.f32 %v768, %v867
      %v869 = vpop.f32.mrb[0].mxu0
      %870 = vmatprep.mubr.bf16.mxu0 0
      %871 = vmatmul.mubr.bf16.gmra.mrb[0].mxu0 %v814
      %v872 = vpop.f32.mrb[0].mxu0
      %v873 = vadd.f32 %v773, %v872
      %v874 = vpop.f32.mrb[0].mxu0
      %v875 = vpop.f32.mrb[0].mxu0
      %v876 = vadd.f32 %v776, %v875
      %v877 = vpop.f32.mrb[0].mxu0
      %878 = vmatprep.mubr.bf16.mxu0 0
      %879 = vmatmul.mubr.bf16.gmra.mrb[0].mxu0 %v817
      %v880 = vpop.f32.mrb[0].mxu0
      %v881 = vadd.f32 %v781, %v880
      %v882 = vpop.f32.mrb[0].mxu0
      %v883 = vpop.f32.mrb[0].mxu0
      %v884 = vadd.f32 %v784, %v883
      %v885 = vpop.f32.mrb[0].mxu0
      %886 = vdwg.mxu0
      %v887 = vld [vmem:[#allocation2] sm:$0xf]
      %v888 = vld [vmem:[#allocation2 + $0x4] sm:$0x1]
      %v889 = vld [vmem:[#allocation2 + $0x8] sm:$0xf]
      %v890 = vld [vmem:[#allocation2 + $0xc] sm:$0x1]
      %v891 = vld [vmem:[#allocation2 + $0x10] sm:$0xf]
      %v892 = vld [vmem:[#allocation2 + $0x14] sm:$0x1]
      %v893 = vld [vmem:[#allocation2 + $0x18] sm:$0xf]
      %v894 = vld [vmem:[#allocation2 + $0x1c] sm:$0x1]
      %v895 = vld [vmem:[#allocation2 + $0x20] sm:$0xf]
      %v896 = vld [vmem:[#allocation2 + $0x24] sm:$0x1]
      %v897 = vld [vmem:[#allocation2 + $0x28] sm:$0xf]
      %v898 = vld [vmem:[#allocation2 + $0x2c] sm:$0x1]
      %v899 = vld [vmem:[#allocation2 + $0x30] sm:$0xf]
      %v900 = vld [vmem:[#allocation2 + $0x34] sm:$0x1]
      %v901 = vld [vmem:[#allocation2 + $0x38] sm:$0xf]
      %v902 = vld [vmem:[#allocation2 + $0x3c] sm:$0x1]
      %vm903 = vsmask.f32 3328
      %vm904 = vsmask.f32 7440
      %vm905 = vmor %vm903, %vm904
      %v907 = vshrl.u32 %v887, 16
      %v909 = vrot.slane %v907, 4
      %v910 = vshll.u32 %v887, 16
      %v912 = vrot.slane %v910, 5
      %v913 = vor.u32 %v909, %v912
      %v914 = vrot.slane %v913, 4
      %v916 = vshll.u32 %v888, 16
      %v918 = vrot.slane %v916, 5
      %v919 = vsel %vm905, %v914, %v918
      %v921 = vshrl.u32 %v889, 16
      %v923 = vrot.slane %v921, 4
      %v924 = vshll.u32 %v889, 16
      %v926 = vrot.slane %v924, 5
      %v927 = vor.u32 %v923, %v926
      %v928 = vrot.slane %v927, 4
      %v930 = vshll.u32 %v890, 16
      %v932 = vrot.slane %v930, 5
      %v933 = vsel %vm905, %v928, %v932
      %v935 = vshrl.u32 %v891, 16
      %v937 = vrot.slane %v935, 4
      %v938 = vshll.u32 %v891, 16
      %v940 = vrot.slane %v938, 5
      %v941 = vor.u32 %v937, %v940
      %v942 = vrot.slane %v941, 4
      %v944 = vshll.u32 %v892, 16
      %v946 = vrot.slane %v944, 5
      %v947 = vsel %vm905, %v942, %v946
      %v949 = vshrl.u32 %v893, 16
      %v951 = vrot.slane %v949, 4
      %v952 = vshll.u32 %v893, 16
      %v954 = vrot.slane %v952, 5
      %v955 = vor.u32 %v951, %v954
      %v956 = vrot.slane %v955, 4
      %v958 = vshll.u32 %v894, 16
      %v960 = vrot.slane %v958, 5
      %v961 = vsel %vm905, %v956, %v960
      %v963 = vshrl.u32 %v895, 16
      %v965 = vrot.slane %v963, 4
      %v966 = vshll.u32 %v895, 16
      %v968 = vrot.slane %v966, 5
      %v969 = vor.u32 %v965, %v968
      %v970 = vrot.slane %v969, 4
      %v972 = vshll.u32 %v896, 16
      %v974 = vrot.slane %v972, 5
      %v975 = vsel %vm905, %v970, %v974
      %v977 = vshrl.u32 %v897, 16
      %v979 = vrot.slane %v977, 4
      %v980 = vshll.u32 %v897, 16
      %v982 = vrot.slane %v980, 5
      %v983 = vor.u32 %v979, %v982
      %v984 = vrot.slane %v983, 4
      %v986 = vshll.u32 %v898, 16
      %v988 = vrot.slane %v986, 5
      %v989 = vsel %vm905, %v984, %v988
      %v991 = vshrl.u32 %v899, 16
      %v993 = vrot.slane %v991, 4
      %v994 = vshll.u32 %v899, 16
      %v996 = vrot.slane %v994, 5
      %v997 = vor.u32 %v993, %v996
      %v998 = vrot.slane %v997, 4
      %v1000 = vshll.u32 %v900, 16
      %v1002 = vrot.slane %v1000, 5
      %v1003 = vsel %vm905, %v998, %v1002
      %v1005 = vshrl.u32 %v901, 16
      %v1007 = vrot.slane %v1005, 4
      %v1008 = vshll.u32 %v901, 16
      %v1010 = vrot.slane %v1008, 5
      %v1011 = vor.u32 %v1007, %v1010
      %v1012 = vrot.slane %v1011, 4
      %v1014 = vshll.u32 %v902, 16
      %v1016 = vrot.slane %v1014, 5
      %v1017 = vsel %vm905, %v1012, %v1016
      %v1018 = vld [vmem:[%s295] sm:$0xf]
      %v1019 = vld [vmem:[%s295 + $0x4] sm:$0x1]
      %v1020 = vld [vmem:[%s295 + $0x8] sm:$0xf]
      %v1021 = vld [vmem:[%s295 + $0xc] sm:$0x1]
      %v1022 = vld [vmem:[%s295 + $0x10] sm:$0xf]
      %v1023 = vld [vmem:[%s295 + $0x14] sm:$0x1]
      %v1024 = vld [vmem:[%s295 + $0x18] sm:$0xf]
      %v1025 = vld [vmem:[%s295 + $0x1c] sm:$0x1]
      %v1026 = vld [vmem:[%s295 + $0x20] sm:$0xf]
      %v1027 = vld [vmem:[%s295 + $0x24] sm:$0x1]
      %v1028 = vld [vmem:[%s295 + $0x28] sm:$0xf]
      %v1029 = vld [vmem:[%s295 + $0x2c] sm:$0x1]
      %v1030 = vld [vmem:[%s295 + $0x30] sm:$0xf]
      %v1031 = vld [vmem:[%s295 + $0x34] sm:$0x1]
      %v1032 = vld [vmem:[%s295 + $0x38] sm:$0xf]
      %v1033 = vld [vmem:[%s295 + $0x3c] sm:$0x1]
      %v1035 = vshrl.u32 %v1018, 16
      %v1037 = vrot.slane %v1035, 4
      %v1038 = vshll.u32 %v1018, 16
      %v1040 = vrot.slane %v1038, 5
      %v1041 = vor.u32 %v1037, %v1040
      %v1042 = vrot.slane %v1041, 4
      %v1044 = vshll.u32 %v1019, 16
      %v1046 = vrot.slane %v1044, 5
      %v1047 = vsel %vm905, %v1042, %v1046
      %v1049 = vshrl.u32 %v1020, 16
      %v1051 = vrot.slane %v1049, 4
      %v1052 = vshll.u32 %v1020, 16
      %v1054 = vrot.slane %v1052, 5
      %v1055 = vor.u32 %v1051, %v1054
      %v1056 = vrot.slane %v1055, 4
      %v1058 = vshll.u32 %v1021, 16
      %v1060 = vrot.slane %v1058, 5
      %v1061 = vsel %vm905, %v1056, %v1060
      %v1063 = vshrl.u32 %v1022, 16
      %v1065 = vrot.slane %v1063, 4
      %v1066 = vshll.u32 %v1022, 16
      %v1068 = vrot.slane %v1066, 5
      %v1069 = vor.u32 %v1065, %v1068
      %v1070 = vrot.slane %v1069, 4
      %v1072 = vshll.u32 %v1023, 16
      %v1074 = vrot.slane %v1072, 5
      %v1075 = vsel %vm905, %v1070, %v1074
      %v1077 = vshrl.u32 %v1024, 16
      %v1079 = vrot.slane %v1077, 4
      %v1080 = vshll.u32 %v1024, 16
      %v1082 = vrot.slane %v1080, 5
      %v1083 = vor.u32 %v1079, %v1082
      %v1084 = vrot.slane %v1083, 4
      %v1086 = vshll.u32 %v1025, 16
      %v1088 = vrot.slane %v1086, 5
      %v1089 = vsel %vm905, %v1084, %v1088
      %v1091 = vshrl.u32 %v1026, 16
      %v1093 = vrot.slane %v1091, 4
      %v1094 = vshll.u32 %v1026, 16
      %v1096 = vrot.slane %v1094, 5
      %v1097 = vor.u32 %v1093, %v1096
      %v1098 = vrot.slane %v1097, 4
      %v1100 = vshll.u32 %v1027, 16
      %v1102 = vrot.slane %v1100, 5
      %v1103 = vsel %vm905, %v1098, %v1102
      %v1105 = vshrl.u32 %v1028, 16
      %v1107 = vrot.slane %v1105, 4
      %v1108 = vshll.u32 %v1028, 16
      %v1110 = vrot.slane %v1108, 5
      %v1111 = vor.u32 %v1107, %v1110
      %v1112 = vrot.slane %v1111, 4
      %v1114 = vshll.u32 %v1029, 16
      %v1116 = vrot.slane %v1114, 5
      %v1117 = vsel %vm905, %v1112, %v1116
      %v1119 = vshrl.u32 %v1030, 16
      %v1121 = vrot.slane %v1119, 4
      %v1122 = vshll.u32 %v1030, 16
      %v1124 = vrot.slane %v1122, 5
      %v1125 = vor.u32 %v1121, %v1124
      %v1126 = vrot.slane %v1125, 4
      %v1128 = vshll.u32 %v1031, 16
      %v1130 = vrot.slane %v1128, 5
      %v1131 = vsel %vm905, %v1126, %v1130
      %v1133 = vshrl.u32 %v1032, 16
      %v1135 = vrot.slane %v1133, 4
      %v1136 = vshll.u32 %v1032, 16
      %v1138 = vrot.slane %v1136, 5
      %v1139 = vor.u32 %v1135, %v1138
      %v1140 = vrot.slane %v1139, 4
      %v1142 = vshll.u32 %v1033, 16
      %v1144 = vrot.slane %v1142, 5
      %v1145 = vsel %vm905, %v1140, %v1144
      %s1146 = scalar_lea.vmem %s4, 2
      %v1147 = vld [vmem:[%s1146] sm:$0x3]
      %v1148 = vunpack.c.l.b16 %v919
      %v1149 = vunpack.c.l.b16 %v933
      %v1150 = vunpack.c.l.b16 %v947
      %v1151 = vunpack.c.l.b16 %v961
      %v1152 = vunpack.c.l.b16 %v975
      %v1153 = vunpack.c.l.b16 %v989
      %v1154 = vunpack.c.l.b16 %v1003
      %v1155 = vunpack.c.l.b16 %v1017
      %v1156 = vpack.c.b16 %v1149, %v1148
      %v1157 = vpack.c.b16 %v1151, %v1150
      %v1158 = vpack.c.b16 %v1153, %v1152
      %v1159 = vpack.c.b16 %v1155, %v1154
      %v1161 = vsel %vm705, %v1156, 0
      %v1164 = vsel %vm705, %v1157, 0
      %v1167 = vsel %vm705, %v1158, 0
      %v1170 = vsel %vm705, %v1159, 0
      %v1173 = vsel %vm718, %v1147, 0
      %1175 = vmatprep.subr.bf16.mxu0 0
      %1176 = vmatpush1.bf16.msra.mxu0 %v1173
      %1177 = vmatprep.subr.bf16.mxu0 0
      %1178 = vmatpush1.bf16.msra.mxu0 0
      %1179 = vmatprep.subr.bf16.mxu0 0
      %1180 = vmatpush1.bf16.msra.mxu0 0
      %1181 = vmatprep.subr.bf16.mxu0 0
      %1182 = vmatpush1.bf16.msra.mxu0 0
      %1183 = vmatprep.subr.bf16.mxu0 0
      %1184 = vmatpush1.bf16.msra.mxu0 0
      %1185 = vmatprep.subr.bf16.mxu0 0
      %1186 = vmatpush1.bf16.msra.mxu0 0
      %1187 = vmatprep.subr.bf16.mxu0 0
      %1188 = vmatpush1.bf16.msra.mxu0 0
      %1189 = vmatprep.subr.bf16.mxu0 0
      %1190 = vmatpush1.bf16.msra.mxu0 0
      %1191 = vmatprep.subr.bf16.mxu0 0
      %1192 = vmatpush1.bf16.msra.mxu0 0
      %1193 = vmatprep.subr.bf16.mxu0 0
      %1194 = vmatpush1.bf16.msra.mxu0 0
      %1195 = vmatprep.subr.bf16.mxu0 0
      %1196 = vmatpush1.bf16.msra.mxu0 0
      %1197 = vmatprep.subr.bf16.mxu0 0
      %1198 = vmatpush1.bf16.msra.mxu0 0
      %1199 = vmatprep.subr.bf16.mxu0 0
      %1200 = vmatpush1.bf16.msra.mxu0 0
      %1201 = vmatprep.subr.bf16.mxu0 0
      %1202 = vmatpush1.bf16.msra.mxu0 0
      %1203 = vmatprep.subr.bf16.mxu0 0
      %1204 = vmatpush1.bf16.msra.mxu0 0
      %1205 = vmatprep.subr.bf16.mxu0 0
      %1206 = vmatpush1.bf16.msra.mxu0 0
      %1207 = vmatprep.mubr.bf16.mxu0 0
      %1208 = vmatmul.mubr.bf16.gmra.mrb[0].mxu0 %v1161
      %v1209 = vpop.f32.mrb[0].mxu0
      %v1210 = vadd.f32 0.0, %v1209
      %v1211 = vpop.f32.mrb[0].mxu0
      %v1212 = vpop.f32.mrb[0].mxu0
      %v1213 = vadd.f32 0.0, %v1212
      %v1214 = vpop.f32.mrb[0].mxu0
      %1215 = vmatprep.mubr.bf16.mxu0 0
      %1216 = vmatmul.mubr.bf16.gmra.mrb[0].mxu0 %v1164
      %v1217 = vpop.f32.mrb[0].mxu0
      %v1218 = vadd.f32 0.0, %v1217
      %v1219 = vpop.f32.mrb[0].mxu0
      %v1220 = vpop.f32.mrb[0].mxu0
      %v1221 = vadd.f32 0.0, %v1220
      %v1222 = vpop.f32.mrb[0].mxu0
      %1223 = vmatprep.mubr.bf16.mxu0 0
      %1224 = vmatmul.mubr.bf16.gmra.mrb[0].mxu0 %v1167
      %v1225 = vpop.f32.mrb[0].mxu0
      %v1226 = vadd.f32 0.0, %v1225
      %v1227 = vpop.f32.mrb[0].mxu0
      %v1228 = vpop.f32.mrb[0].mxu0
      %v1229 = vadd.f32 0.0, %v1228
      %v1230 = vpop.f32.mrb[0].mxu0
      %1231 = vmatprep.mubr.bf16.mxu0 0
      %1232 = vmatmul.mubr.bf16.gmra.mrb[0].mxu0 %v1170
      %v1233 = vpop.f32.mrb[0].mxu0
      %v1234 = vadd.f32 0.0, %v1233
      %v1235 = vpop.f32.mrb[0].mxu0
      %v1236 = vpop.f32.mrb[0].mxu0
      %v1237 = vadd.f32 0.0, %v1236
      %v1238 = vpop.f32.mrb[0].mxu0
      %1239 = vdwg.mxu0
      %v1240 = vadd.f32 %v857, %v1210
      %v1241 = vadd.f32 %v860, %v1213
      %v1242 = vadd.f32 %v865, %v1218
      %v1243 = vadd.f32 %v868, %v1221
      %v1244 = vadd.f32 %v873, %v1226
      %v1245 = vadd.f32 %v876, %v1229
      %v1246 = vadd.f32 %v881, %v1234
      %v1247 = vadd.f32 %v884, %v1237
      %s1248 = scalar_lea.vmem %s5, 2
      %v1249 = vld [vmem:[%s1248] sm:$0x3]
      %v1250 = vunpack.c.l.b16 %v1047
      %v1251 = vunpack.c.l.b16 %v1061
      %v1252 = vunpack.c.l.b16 %v1075
      %v1253 = vunpack.c.l.b16 %v1089
      %v1254 = vunpack.c.l.b16 %v1103
      %v1255 = vunpack.c.l.b16 %v1117
      %v1256 = vunpack.c.l.b16 %v1131
      %v1257 = vunpack.c.l.b16 %v1145
      %v1258 = vpack.c.b16 %v1251, %v1250
      %v1259 = vpack.c.b16 %v1253, %v1252
      %v1260 = vpack.c.b16 %v1255, %v1254
      %v1261 = vpack.c.b16 %v1257, %v1256
      %v1263 = vsel %vm705, %v1258, 0
      %v1266 = vsel %vm705, %v1259, 0
      %v1269 = vsel %vm705, %v1260, 0
      %v1272 = vsel %vm705, %v1261, 0
      %v1275 = vsel %vm718, %v1249, 0
      %1277 = vmatprep.subr.bf16.mxu0 0
      %1278 = vmatpush1.bf16.msra.mxu0 %v1275
      %1279 = vmatprep.subr.bf16.mxu0 0
      %1280 = vmatpush1.bf16.msra.mxu0 0
      %1281 = vmatprep.subr.bf16.mxu0 0
      %1282 = vmatpush1.bf16.msra.mxu0 0
      %1283 = vmatprep.subr.bf16.mxu0 0
      %1284 = vmatpush1.bf16.msra.mxu0 0
      %1285 = vmatprep.subr.bf16.mxu0 0
      %1286 = vmatpush1.bf16.msra.mxu0 0
      %1287 = vmatprep.subr.bf16.mxu0 0
      %1288 = vmatpush1.bf16.msra.mxu0 0
      %1289 = vmatprep.subr.bf16.mxu0 0
      %1290 = vmatpush1.bf16.msra.mxu0 0
      %1291 = vmatprep.subr.bf16.mxu0 0
      %1292 = vmatpush1.bf16.msra.mxu0 0
      %1293 = vmatprep.subr.bf16.mxu0 0
      %1294 = vmatpush1.bf16.msra.mxu0 0
      %1295 = vmatprep.subr.bf16.mxu0 0
      %1296 = vmatpush1.bf16.msra.mxu0 0
      %1297 = vmatprep.subr.bf16.mxu0 0
      %1298 = vmatpush1.bf16.msra.mxu0 0
      %1299 = vmatprep.subr.bf16.mxu0 0
      %1300 = vmatpush1.bf16.msra.mxu0 0
      %1301 = vmatprep.subr.bf16.mxu0 0
      %1302 = vmatpush1.bf16.msra.mxu0 0
      %1303 = vmatprep.subr.bf16.mxu0 0
      %1304 = vmatpush1.bf16.msra.mxu0 0
      %1305 = vmatprep.subr.bf16.mxu0 0
      %1306 = vmatpush1.bf16.msra.mxu0 0
      %1307 = vmatprep.subr.bf16.mxu0 0
      %1308 = vmatpush1.bf16.msra.mxu0 0
      %1309 = vmatprep.mubr.bf16.mxu0 0
      %1310 = vmatmul.mubr.bf16.gmra.mrb[0].mxu0 %v1263
      %v1311 = vpop.f32.mrb[0].mxu0
      %v1312 = vadd.f32 0.0, %v1311
      %v1313 = vpop.f32.mrb[0].mxu0
      %v1314 = vpop.f32.mrb[0].mxu0
      %v1315 = vadd.f32 0.0, %v1314
      %v1316 = vpop.f32.mrb[0].mxu0
      %1317 = vmatprep.mubr.bf16.mxu0 0
      %1318 = vmatmul.mubr.bf16.gmra.mrb[0].mxu0 %v1266
      %v1319 = vpop.f32.mrb[0].mxu0
      %v1320 = vadd.f32 0.0, %v1319
      %v1321 = vpop.f32.mrb[0].mxu0
      %v1322 = vpop.f32.mrb[0].mxu0
      %v1323 = vadd.f32 0.0, %v1322
      %v1324 = vpop.f32.mrb[0].mxu0
      %1325 = vmatprep.mubr.bf16.mxu0 0
      %1326 = vmatmul.mubr.bf16.gmra.mrb[0].mxu0 %v1269
      %v1327 = vpop.f32.mrb[0].mxu0
      %v1328 = vadd.f32 0.0, %v1327
      %v1329 = vpop.f32.mrb[0].mxu0
      %v1330 = vpop.f32.mrb[0].mxu0
      %v1331 = vadd.f32 0.0, %v1330
      %v1332 = vpop.f32.mrb[0].mxu0
      %1333 = vmatprep.mubr.bf16.mxu0 0
      %1334 = vmatmul.mubr.bf16.gmra.mrb[0].mxu0 %v1272
      %v1335 = vpop.f32.mrb[0].mxu0
      %v1336 = vadd.f32 0.0, %v1335
      %v1337 = vpop.f32.mrb[0].mxu0
      %v1338 = vpop.f32.mrb[0].mxu0
      %v1339 = vadd.f32 0.0, %v1338
      %v1340 = vpop.f32.mrb[0].mxu0
      %1341 = vdwg.mxu0
      %v1342 = vadd.f32 %v1240, %v1312
      %v1343 = vadd.f32 %v1241, %v1315
      %v1344 = vadd.f32 %v1242, %v1320
      %v1345 = vadd.f32 %v1243, %v1323
      %v1346 = vadd.f32 %v1244, %v1328
      %v1347 = vadd.f32 %v1245, %v1331
      %v1348 = vadd.f32 %v1246, %v1336
      %v1349 = vadd.f32 %v1247, %v1339
      %v1350 = vld [vmem:[#allocation2] sm:$0xe]
      %v1351 = vld [vmem:[#allocation2 + $0x8] sm:$0xe]
      %v1352 = vld [vmem:[#allocation2 + $0x10] sm:$0xe]
      %v1353 = vld [vmem:[#allocation2 + $0x18] sm:$0xe]
      %v1354 = vld [vmem:[#allocation2 + $0x20] sm:$0xe]
      %v1355 = vld [vmem:[#allocation2 + $0x28] sm:$0xe]
      %v1356 = vld [vmem:[#allocation2 + $0x30] sm:$0xe]
      %v1357 = vld [vmem:[#allocation2 + $0x38] sm:$0xe]
      %vm1374 = vcmask 1042432
      %vm1375 = vcmask 1046532
      %vm1376 = vmor %vm1374, %vm1375
      %v1377 = vrot.slane %v1350, 5
      %v1378 = vrot.slane %v1377, 4
      %v1379 = vrot.slane %v888, 5
      %v1380 = vsel %vm1376, %v1378, %v1379
      %v1381 = vrot.slane %v1351, 5
      %v1382 = vrot.slane %v1381, 4
      %v1383 = vrot.slane %v890, 5
      %v1384 = vsel %vm1376, %v1382, %v1383
      %v1385 = vrot.slane %v1352, 5
      %v1386 = vrot.slane %v1385, 4
      %v1387 = vrot.slane %v892, 5
      %v1388 = vsel %vm1376, %v1386, %v1387
      %v1389 = vrot.slane %v1353, 5
      %v1390 = vrot.slane %v1389, 4
      %v1391 = vrot.slane %v894, 5
      %v1392 = vsel %vm1376, %v1390, %v1391
      %v1393 = vrot.slane %v1354, 5
      %v1394 = vrot.slane %v1393, 4
      %v1395 = vrot.slane %v896, 5
      %v1396 = vsel %vm1376, %v1394, %v1395
      %v1397 = vrot.slane %v1355, 5
      %v1398 = vrot.slane %v1397, 4
      %v1399 = vrot.slane %v898, 5
      %v1400 = vsel %vm1376, %v1398, %v1399
      %v1401 = vrot.slane %v1356, 5
      %v1402 = vrot.slane %v1401, 4
      %v1403 = vrot.slane %v900, 5
      %v1404 = vsel %vm1376, %v1402, %v1403
      %v1405 = vrot.slane %v1357, 5
      %v1406 = vrot.slane %v1405, 4
      %v1407 = vrot.slane %v902, 5
      %v1408 = vsel %vm1376, %v1406, %v1407
      %v1409 = vld [vmem:[%s295] sm:$0xe]
      %v1410 = vld [vmem:[%s295 + $0x8] sm:$0xe]
      %v1411 = vld [vmem:[%s295 + $0x10] sm:$0xe]
      %v1412 = vld [vmem:[%s295 + $0x18] sm:$0xe]
      %v1413 = vld [vmem:[%s295 + $0x20] sm:$0xe]
      %v1414 = vld [vmem:[%s295 + $0x28] sm:$0xe]
      %v1415 = vld [vmem:[%s295 + $0x30] sm:$0xe]
      %v1416 = vld [vmem:[%s295 + $0x38] sm:$0xe]
      %v1433 = vrot.slane %v1409, 5
      %v1434 = vrot.slane %v1433, 4
      %v1435 = vrot.slane %v1019, 5
      %v1436 = vsel %vm1376, %v1434, %v1435
      %v1437 = vrot.slane %v1410, 5
      %v1438 = vrot.slane %v1437, 4
      %v1439 = vrot.slane %v1021, 5
      %v1440 = vsel %vm1376, %v1438, %v1439
      %v1441 = vrot.slane %v1411, 5
      %v1442 = vrot.slane %v1441, 4
      %v1443 = vrot.slane %v1023, 5
      %v1444 = vsel %vm1376, %v1442, %v1443
      %v1445 = vrot.slane %v1412, 5
      %v1446 = vrot.slane %v1445, 4
      %v1447 = vrot.slane %v1025, 5
      %v1448 = vsel %vm1376, %v1446, %v1447
      %v1449 = vrot.slane %v1413, 5
      %v1450 = vrot.slane %v1449, 4
      %v1451 = vrot.slane %v1027, 5
      %v1452 = vsel %vm1376, %v1450, %v1451
      %v1453 = vrot.slane %v1414, 5
      %v1454 = vrot.slane %v1453, 4
      %v1455 = vrot.slane %v1029, 5
      %v1456 = vsel %vm1376, %v1454, %v1455
      %v1457 = vrot.slane %v1415, 5
      %v1458 = vrot.slane %v1457, 4
      %v1459 = vrot.slane %v1031, 5
      %v1460 = vsel %vm1376, %v1458, %v1459
      %v1461 = vrot.slane %v1416, 5
      %v1462 = vrot.slane %v1461, 4
      %v1463 = vrot.slane %v1033, 5
      %v1464 = vsel %vm1376, %v1462, %v1463
      %s1465 = scalar_lea.vmem %s4, 4
      %v1466 = vld [vmem:[%s1465] sm:$0x3]
      %v1467 = vunpack.c.l.b16 %v1380
      %v1468 = vunpack.c.l.b16 %v1384
      %v1469 = vunpack.c.l.b16 %v1388
      %v1470 = vunpack.c.l.b16 %v1392
      %v1471 = vunpack.c.l.b16 %v1396
      %v1472 = vunpack.c.l.b16 %v1400
      %v1473 = vunpack.c.l.b16 %v1404
      %v1474 = vunpack.c.l.b16 %v1408
      %v1475 = vpack.c.b16 %v1468, %v1467
      %v1476 = vpack.c.b16 %v1470, %v1469
      %v1477 = vpack.c.b16 %v1472, %v1471
      %v1478 = vpack.c.b16 %v1474, %v1473
      %v1480 = vsel %vm705, %v1475, 0
      %v1483 = vsel %vm705, %v1476, 0
      %v1486 = vsel %vm705, %v1477, 0
      %v1489 = vsel %vm705, %v1478, 0
      %v1492 = vsel %vm718, %v1466, 0
      %1494 = vmatprep.subr.bf16.mxu0 0
      %1495 = vmatpush1.bf16.msra.mxu0 %v1492
      %1496 = vmatprep.subr.bf16.mxu0 0
      %1497 = vmatpush1.bf16.msra.mxu0 0
      %1498 = vmatprep.subr.bf16.mxu0 0
      %1499 = vmatpush1.bf16.msra.mxu0 0
      %1500 = vmatprep.subr.bf16.mxu0 0
      %1501 = vmatpush1.bf16.msra.mxu0 0
      %1502 = vmatprep.subr.bf16.mxu0 0
      %1503 = vmatpush1.bf16.msra.mxu0 0
      %1504 = vmatprep.subr.bf16.mxu0 0
      %1505 = vmatpush1.bf16.msra.mxu0 0
      %1506 = vmatprep.subr.bf16.mxu0 0
      %1507 = vmatpush1.bf16.msra.mxu0 0
      %1508 = vmatprep.subr.bf16.mxu0 0
      %1509 = vmatpush1.bf16.msra.mxu0 0
      %1510 = vmatprep.subr.bf16.mxu0 0
      %1511 = vmatpush1.bf16.msra.mxu0 0
      %1512 = vmatprep.subr.bf16.mxu0 0
      %1513 = vmatpush1.bf16.msra.mxu0 0
      %1514 = vmatprep.subr.bf16.mxu0 0
      %1515 = vmatpush1.bf16.msra.mxu0 0
      %1516 = vmatprep.subr.bf16.mxu0 0
      %1517 = vmatpush1.bf16.msra.mxu0 0
      %1518 = vmatprep.subr.bf16.mxu0 0
      %1519 = vmatpush1.bf16.msra.mxu0 0
      %1520 = vmatprep.subr.bf16.mxu0 0
      %1521 = vmatpush1.bf16.msra.mxu0 0
      %1522 = vmatprep.subr.bf16.mxu0 0
      %1523 = vmatpush1.bf16.msra.mxu0 0
      %1524 = vmatprep.subr.bf16.mxu0 0
      %1525 = vmatpush1.bf16.msra.mxu0 0
      %1526 = vmatprep.mubr.bf16.mxu0 0
      %1527 = vmatmul.mubr.bf16.gmra.mrb[0].mxu0 %v1480
      %v1528 = vpop.f32.mrb[0].mxu0
      %v1529 = vadd.f32 0.0, %v1528
      %v1530 = vpop.f32.mrb[0].mxu0
      %v1531 = vpop.f32.mrb[0].mxu0
      %v1532 = vadd.f32 0.0, %v1531
      %v1533 = vpop.f32.mrb[0].mxu0
      %1534 = vmatprep.mubr.bf16.mxu0 0
      %1535 = vmatmul.mubr.bf16.gmra.mrb[0].mxu0 %v1483
      %v1536 = vpop.f32.mrb[0].mxu0
      %v1537 = vadd.f32 0.0, %v1536
      %v1538 = vpop.f32.mrb[0].mxu0
      %v1539 = vpop.f32.mrb[0].mxu0
      %v1540 = vadd.f32 0.0, %v1539
      %v1541 = vpop.f32.mrb[0].mxu0
      %1542 = vmatprep.mubr.bf16.mxu0 0
      %1543 = vmatmul.mubr.bf16.gmra.mrb[0].mxu0 %v1486
      %v1544 = vpop.f32.mrb[0].mxu0
      %v1545 = vadd.f32 0.0, %v1544
      %v1546 = vpop.f32.mrb[0].mxu0
      %v1547 = vpop.f32.mrb[0].mxu0
      %v1548 = vadd.f32 0.0, %v1547
      %v1549 = vpop.f32.mrb[0].mxu0
      %1550 = vmatprep.mubr.bf16.mxu0 0
      %1551 = vmatmul.mubr.bf16.gmra.mrb[0].mxu0 %v1489
      %v1552 = vpop.f32.mrb[0].mxu0
      %v1553 = vadd.f32 0.0, %v1552
      %v1554 = vpop.f32.mrb[0].mxu0
      %v1555 = vpop.f32.mrb[0].mxu0
      %v1556 = vadd.f32 0.0, %v1555
      %v1557 = vpop.f32.mrb[0].mxu0
      %1558 = vdwg.mxu0
      %v1559 = vadd.f32 %v1342, %v1529
      %v1560 = vadd.f32 %v1343, %v1532
      %v1561 = vadd.f32 %v1344, %v1537
      %v1562 = vadd.f32 %v1345, %v1540
      %v1563 = vadd.f32 %v1346, %v1545
      %v1564 = vadd.f32 %v1347, %v1548
      %v1565 = vadd.f32 %v1348, %v1553
      %v1566 = vadd.f32 %v1349, %v1556
      %s1567 = scalar_lea.vmem %s5, 4
      %v1568 = vld [vmem:[%s1567] sm:$0x3]
      %v1569 = vunpack.c.l.b16 %v1436
      %v1570 = vunpack.c.l.b16 %v1440
      %v1571 = vunpack.c.l.b16 %v1444
      %v1572 = vunpack.c.l.b16 %v1448
      %v1573 = vunpack.c.l.b16 %v1452
      %v1574 = vunpack.c.l.b16 %v1456
      %v1575 = vunpack.c.l.b16 %v1460
      %v1576 = vunpack.c.l.b16 %v1464
      %v1577 = vpack.c.b16 %v1570, %v1569
      %v1578 = vpack.c.b16 %v1572, %v1571
      %v1579 = vpack.c.b16 %v1574, %v1573
      %v1580 = vpack.c.b16 %v1576, %v1575
      %v1582 = vsel %vm705, %v1577, 0
      %v1585 = vsel %vm705, %v1578, 0
      %v1588 = vsel %vm705, %v1579, 0
      %v1591 = vsel %vm705, %v1580, 0
      %v1594 = vsel %vm718, %v1568, 0
      %1596 = vmatprep.subr.bf16.mxu0 0
      %1597 = vmatpush1.bf16.msra.mxu0 %v1594
      %1598 = vmatprep.subr.bf16.mxu0 0
      %1599 = vmatpush1.bf16.msra.mxu0 0
      %1600 = vmatprep.subr.bf16.mxu0 0
      %1601 = vmatpush1.bf16.msra.mxu0 0
      %1602 = vmatprep.subr.bf16.mxu0 0
      %1603 = vmatpush1.bf16.msra.mxu0 0
      %1604 = vmatprep.subr.bf16.mxu0 0
      %1605 = vmatpush1.bf16.msra.mxu0 0
      %1606 = vmatprep.subr.bf16.mxu0 0
      %1607 = vmatpush1.bf16.msra.mxu0 0
      %1608 = vmatprep.subr.bf16.mxu0 0
      %1609 = vmatpush1.bf16.msra.mxu0 0
      %1610 = vmatprep.subr.bf16.mxu0 0
      %1611 = vmatpush1.bf16.msra.mxu0 0
      %1612 = vmatprep.subr.bf16.mxu0 0
      %1613 = vmatpush1.bf16.msra.mxu0 0
      %1614 = vmatprep.subr.bf16.mxu0 0
      %1615 = vmatpush1.bf16.msra.mxu0 0
      %1616 = vmatprep.subr.bf16.mxu0 0
      %1617 = vmatpush1.bf16.msra.mxu0 0
      %1618 = vmatprep.subr.bf16.mxu0 0
      %1619 = vmatpush1.bf16.msra.mxu0 0
      %1620 = vmatprep.subr.bf16.mxu0 0
      %1621 = vmatpush1.bf16.msra.mxu0 0
      %1622 = vmatprep.subr.bf16.mxu0 0
      %1623 = vmatpush1.bf16.msra.mxu0 0
      %1624 = vmatprep.subr.bf16.mxu0 0
      %1625 = vmatpush1.bf16.msra.mxu0 0
      %1626 = vmatprep.subr.bf16.mxu0 0
      %1627 = vmatpush1.bf16.msra.mxu0 0
      %1628 = vmatprep.mubr.bf16.mxu0 0
      %1629 = vmatmul.mubr.bf16.gmra.mrb[0].mxu0 %v1582
      %v1630 = vpop.f32.mrb[0].mxu0
      %v1631 = vadd.f32 0.0, %v1630
      %v1632 = vpop.f32.mrb[0].mxu0
      %v1633 = vpop.f32.mrb[0].mxu0
      %v1634 = vadd.f32 0.0, %v1633
      %v1635 = vpop.f32.mrb[0].mxu0
      %1636 = vmatprep.mubr.bf16.mxu0 0
      %1637 = vmatmul.mubr.bf16.gmra.mrb[0].mxu0 %v1585
      %v1638 = vpop.f32.mrb[0].mxu0
      %v1639 = vadd.f32 0.0, %v1638
      %v1640 = vpop.f32.mrb[0].mxu0
      %v1641 = vpop.f32.mrb[0].mxu0
      %v1642 = vadd.f32 0.0, %v1641
      %v1643 = vpop.f32.mrb[0].mxu0
      %1644 = vmatprep.mubr.bf16.mxu0 0
      %1645 = vmatmul.mubr.bf16.gmra.mrb[0].mxu0 %v1588
      %v1646 = vpop.f32.mrb[0].mxu0
      %v1647 = vadd.f32 0.0, %v1646
      %v1648 = vpop.f32.mrb[0].mxu0
      %v1649 = vpop.f32.mrb[0].mxu0
      %v1650 = vadd.f32 0.0, %v1649
      %v1651 = vpop.f32.mrb[0].mxu0
      %1652 = vmatprep.mubr.bf16.mxu0 0
      %1653 = vmatmul.mubr.bf16.gmra.mrb[0].mxu0 %v1591
      %v1654 = vpop.f32.mrb[0].mxu0
      %v1655 = vadd.f32 0.0, %v1654
      %v1656 = vpop.f32.mrb[0].mxu0
      %v1657 = vpop.f32.mrb[0].mxu0
      %v1658 = vadd.f32 0.0, %v1657
      %v1659 = vpop.f32.mrb[0].mxu0
      %1660 = vdwg.mxu0
      %v1661 = vadd.f32 %v1559, %v1631
      %v1662 = vadd.f32 %v1560, %v1634
      %v1663 = vadd.f32 %v1561, %v1639
      %v1664 = vadd.f32 %v1562, %v1642
      %v1665 = vadd.f32 %v1563, %v1647
      %v1666 = vadd.f32 %v1564, %v1650
      %v1667 = vadd.f32 %v1565, %v1655
      %v1668 = vadd.f32 %v1566, %v1658
      %v1669 = vld [vmem:[%s612] sm:$0xf]
      %v1670 = vld [vmem:[%s612 + $0x8] sm:$0xf]
      %v1671 = vld [vmem:[%s612 + $0x10] sm:$0xf]
      %v1672 = vld [vmem:[%s612 + $0x18] sm:$0xf]
      %v1673 = vld [vmem:[%s612 + $0x20] sm:$0xf]
      %v1674 = vld [vmem:[%s612 + $0x28] sm:$0xf]
      %v1675 = vld [vmem:[%s612 + $0x30] sm:$0xf]
      %v1676 = vld [vmem:[%s612 + $0x38] sm:$0xf]
      %s1677 = scalar_lea.vmem %s295, 8
      %v1678 = vld [vmem:[%s1677] sm:$0xf]
      %v1679 = vld [vmem:[%s1677 + $0x8] sm:$0xf]
      %v1680 = vld [vmem:[%s1677 + $0x10] sm:$0xf]
      %v1681 = vld [vmem:[%s1677 + $0x18] sm:$0xf]
      %v1682 = vld [vmem:[%s1677 + $0x20] sm:$0xf]
      %v1683 = vld [vmem:[%s1677 + $0x28] sm:$0xf]
      %v1684 = vld [vmem:[%s1677 + $0x30] sm:$0xf]
      %v1685 = vld [vmem:[%s1677 + $0x38] sm:$0xf]
      %s1686 = scalar_lea.vmem %s4, 6
      %v1687 = vld [vmem:[%s1686] sm:$0x3]
      %v1696 = vunpack.c.l.b16 %v1669
      %v1697 = vunpack.c.l.b16 %v1670
      %v1698 = vunpack.c.l.b16 %v1671
      %v1699 = vunpack.c.l.b16 %v1672
      %v1700 = vunpack.c.l.b16 %v1673
      %v1701 = vunpack.c.l.b16 %v1674
      %v1702 = vunpack.c.l.b16 %v1675
      %v1703 = vunpack.c.l.b16 %v1676
      %v1704 = vpack.c.b16 %v1697, %v1696
      %v1705 = vpack.c.b16 %v1699, %v1698
      %v1706 = vpack.c.b16 %v1701, %v1700
      %v1707 = vpack.c.b16 %v1703, %v1702
      %v1709 = vsel %vm705, %v1704, 0
      %v1712 = vsel %vm705, %v1705, 0
      %v1715 = vsel %vm705, %v1706, 0
      %v1718 = vsel %vm705, %v1707, 0
      %v1721 = vsel %vm718, %v1687, 0
      %1723 = vmatprep.subr.bf16.mxu0 0
      %1724 = vmatpush1.bf16.msra.mxu0 %v1721
      %1725 = vmatprep.subr.bf16.mxu0 0
      %1726 = vmatpush1.bf16.msra.mxu0 0
      %1727 = vmatprep.subr.bf16.mxu0 0
      %1728 = vmatpush1.bf16.msra.mxu0 0
      %1729 = vmatprep.subr.bf16.mxu0 0
      %1730 = vmatpush1.bf16.msra.mxu0 0
      %1731 = vmatprep.subr.bf16.mxu0 0
      %1732 = vmatpush1.bf16.msra.mxu0 0
      %1733 = vmatprep.subr.bf16.mxu0 0
      %1734 = vmatpush1.bf16.msra.mxu0 0
      %1735 = vmatprep.subr.bf16.mxu0 0
      %1736 = vmatpush1.bf16.msra.mxu0 0
      %1737 = vmatprep.subr.bf16.mxu0 0
      %1738 = vmatpush1.bf16.msra.mxu0 0
      %1739 = vmatprep.subr.bf16.mxu0 0
      %1740 = vmatpush1.bf16.msra.mxu0 0
      %1741 = vmatprep.subr.bf16.mxu0 0
      %1742 = vmatpush1.bf16.msra.mxu0 0
      %1743 = vmatprep.subr.bf16.mxu0 0
      %1744 = vmatpush1.bf16.msra.mxu0 0
      %1745 = vmatprep.subr.bf16.mxu0 0
      %1746 = vmatpush1.bf16.msra.mxu0 0
      %1747 = vmatprep.subr.bf16.mxu0 0
      %1748 = vmatpush1.bf16.msra.mxu0 0
      %1749 = vmatprep.subr.bf16.mxu0 0
      %1750 = vmatpush1.bf16.msra.mxu0 0
      %1751 = vmatprep.subr.bf16.mxu0 0
      %1752 = vmatpush1.bf16.msra.mxu0 0
      %1753 = vmatprep.subr.bf16.mxu0 0
      %1754 = vmatpush1.bf16.msra.mxu0 0
      %1755 = vmatprep.mubr.bf16.mxu0 0
      %1756 = vmatmul.mubr.bf16.gmra.mrb[0].mxu0 %v1709
      %v1757 = vpop.f32.mrb[0].mxu0
      %v1758 = vadd.f32 0.0, %v1757
      %v1759 = vpop.f32.mrb[0].mxu0
      %v1760 = vpop.f32.mrb[0].mxu0
      %v1761 = vadd.f32 0.0, %v1760
      %v1762 = vpop.f32.mrb[0].mxu0
      %1763 = vmatprep.mubr.bf16.mxu0 0
      %1764 = vmatmul.mubr.bf16.gmra.mrb[0].mxu0 %v1712
      %v1765 = vpop.f32.mrb[0].mxu0
      %v1766 = vadd.f32 0.0, %v1765
      %v1767 = vpop.f32.mrb[0].mxu0
      %v1768 = vpop.f32.mrb[0].mxu0
      %v1769 = vadd.f32 0.0, %v1768
      %v1770 = vpop.f32.mrb[0].mxu0
      %1771 = vmatprep.mubr.bf16.mxu0 0
      %1772 = vmatmul.mubr.bf16.gmra.mrb[0].mxu0 %v1715
      %v1773 = vpop.f32.mrb[0].mxu0
      %v1774 = vadd.f32 0.0, %v1773
      %v1775 = vpop.f32.mrb[0].mxu0
      %v1776 = vpop.f32.mrb[0].mxu0
      %v1777 = vadd.f32 0.0, %v1776
      %v1778 = vpop.f32.mrb[0].mxu0
      %1779 = vmatprep.mubr.bf16.mxu0 0
      %1780 = vmatmul.mubr.bf16.gmra.mrb[0].mxu0 %v1718
      %v1781 = vpop.f32.mrb[0].mxu0
      %v1782 = vadd.f32 0.0, %v1781
      %v1783 = vpop.f32.mrb[0].mxu0
      %v1784 = vpop.f32.mrb[0].mxu0
      %v1785 = vadd.f32 0.0, %v1784
      %v1786 = vpop.f32.mrb[0].mxu0
      %1787 = vdwg.mxu0
      %v1788 = vadd.f32 %v1661, %v1758
      %v1789 = vadd.f32 %v1662, %v1761
      %v1790 = vadd.f32 %v1663, %v1766
      %v1791 = vadd.f32 %v1664, %v1769
      %v1792 = vadd.f32 %v1665, %v1774
      %v1793 = vadd.f32 %v1666, %v1777
      %v1794 = vadd.f32 %v1667, %v1782
      %v1795 = vadd.f32 %v1668, %v1785
      %s1796 = scalar_lea.vmem %s5, 6
      %v1797 = vld [vmem:[%s1796] sm:$0x3]
      %v1806 = vunpack.c.l.b16 %v1678
      %v1807 = vunpack.c.l.b16 %v1679
      %v1808 = vunpack.c.l.b16 %v1680
      %v1809 = vunpack.c.l.b16 %v1681
      %v1810 = vunpack.c.l.b16 %v1682
      %v1811 = vunpack.c.l.b16 %v1683
      %v1812 = vunpack.c.l.b16 %v1684
      %v1813 = vunpack.c.l.b16 %v1685
      %v1814 = vpack.c.b16 %v1807, %v1806
      %v1815 = vpack.c.b16 %v1809, %v1808
      %v1816 = vpack.c.b16 %v1811, %v1810
      %v1817 = vpack.c.b16 %v1813, %v1812
      %v1819 = vsel %vm705, %v1814, 0
      %v1822 = vsel %vm705, %v1815, 0
      %v1825 = vsel %vm705, %v1816, 0
      %v1828 = vsel %vm705, %v1817, 0
      %v1831 = vsel %vm718, %v1797, 0
      %1833 = vmatprep.subr.bf16.mxu0 0
      %1834 = vmatpush1.bf16.msra.mxu0 %v1831
      %1835 = vmatprep.subr.bf16.mxu0 0
      %1836 = vmatpush1.bf16.msra.mxu0 0
      %1837 = vmatprep.subr.bf16.mxu0 0
      %1838 = vmatpush1.bf16.msra.mxu0 0
      %1839 = vmatprep.subr.bf16.mxu0 0
      %1840 = vmatpush1.bf16.msra.mxu0 0
      %1841 = vmatprep.subr.bf16.mxu0 0
      %1842 = vmatpush1.bf16.msra.mxu0 0
      %1843 = vmatprep.subr.bf16.mxu0 0
      %1844 = vmatpush1.bf16.msra.mxu0 0
      %1845 = vmatprep.subr.bf16.mxu0 0
      %1846 = vmatpush1.bf16.msra.mxu0 0
      %1847 = vmatprep.subr.bf16.mxu0 0
      %1848 = vmatpush1.bf16.msra.mxu0 0
      %1849 = vmatprep.subr.bf16.mxu0 0
      %1850 = vmatpush1.bf16.msra.mxu0 0
      %1851 = vmatprep.subr.bf16.mxu0 0
      %1852 = vmatpush1.bf16.msra.mxu0 0
      %1853 = vmatprep.subr.bf16.mxu0 0
      %1854 = vmatpush1.bf16.msra.mxu0 0
      %1855 = vmatprep.subr.bf16.mxu0 0
      %1856 = vmatpush1.bf16.msra.mxu0 0
      %1857 = vmatprep.subr.bf16.mxu0 0
      %1858 = vmatpush1.bf16.msra.mxu0 0
      %1859 = vmatprep.subr.bf16.mxu0 0
      %1860 = vmatpush1.bf16.msra.mxu0 0
      %1861 = vmatprep.subr.bf16.mxu0 0
      %1862 = vmatpush1.bf16.msra.mxu0 0
      %1863 = vmatprep.subr.bf16.mxu0 0
      %1864 = vmatpush1.bf16.msra.mxu0 0
      %1865 = vmatprep.mubr.bf16.mxu0 0
      %1866 = vmatmul.mubr.bf16.gmra.mrb[0].mxu0 %v1819
      %v1867 = vpop.f32.mrb[0].mxu0
      %v1868 = vadd.f32 0.0, %v1867
      %v1869 = vpop.f32.mrb[0].mxu0
      %v1870 = vpop.f32.mrb[0].mxu0
      %v1871 = vadd.f32 0.0, %v1870
      %v1872 = vpop.f32.mrb[0].mxu0
      %1873 = vmatprep.mubr.bf16.mxu0 0
      %1874 = vmatmul.mubr.bf16.gmra.mrb[0].mxu0 %v1822
      %v1875 = vpop.f32.mrb[0].mxu0
      %v1876 = vadd.f32 0.0, %v1875
      %v1877 = vpop.f32.mrb[0].mxu0
      %v1878 = vpop.f32.mrb[0].mxu0
      %v1879 = vadd.f32 0.0, %v1878
      %v1880 = vpop.f32.mrb[0].mxu0
      %1881 = vmatprep.mubr.bf16.mxu0 0
      %1882 = vmatmul.mubr.bf16.gmra.mrb[0].mxu0 %v1825
      %v1883 = vpop.f32.mrb[0].mxu0
      %v1884 = vadd.f32 0.0, %v1883
      %v1885 = vpop.f32.mrb[0].mxu0
      %v1886 = vpop.f32.mrb[0].mxu0
      %v1887 = vadd.f32 0.0, %v1886
      %v1888 = vpop.f32.mrb[0].mxu0
      %1889 = vmatprep.mubr.bf16.mxu0 0
      %1890 = vmatmul.mubr.bf16.gmra.mrb[0].mxu0 %v1828
      %v1891 = vpop.f32.mrb[0].mxu0
      %v1892 = vadd.f32 0.0, %v1891
      %v1893 = vpop.f32.mrb[0].mxu0
      %v1894 = vpop.f32.mrb[0].mxu0
      %v1895 = vadd.f32 0.0, %v1894
      %v1896 = vpop.f32.mrb[0].mxu0
      %1897 = vdwg.mxu0
      %v1898 = vadd.f32 %v1788, %v1868
      %v1899 = vadd.f32 %v1789, %v1871
      %v1900 = vadd.f32 %v1790, %v1876
      %v1901 = vadd.f32 %v1791, %v1879
      %v1902 = vadd.f32 %v1792, %v1884
      %v1903 = vadd.f32 %v1793, %v1887
      %v1904 = vadd.f32 %v1794, %v1892
      %v1905 = vadd.f32 %v1795, %v1895
      %v1906 = vld [vmem:[%s612] sm:$0xf]
      %v1907 = vld [vmem:[%s612 + $0x4] sm:$0x1]
      %v1908 = vld [vmem:[%s612 + $0x8] sm:$0xf]
      %v1909 = vld [vmem:[%s612 + $0xc] sm:$0x1]
      %v1910 = vld [vmem:[%s612 + $0x10] sm:$0xf]
      %v1911 = vld [vmem:[%s612 + $0x14] sm:$0x1]
      %v1912 = vld [vmem:[%s612 + $0x18] sm:$0xf]
      %v1913 = vld [vmem:[%s612 + $0x1c] sm:$0x1]
      %v1914 = vld [vmem:[%s612 + $0x20] sm:$0xf]
      %v1915 = vld [vmem:[%s612 + $0x24] sm:$0x1]
      %v1916 = vld [vmem:[%s612 + $0x28] sm:$0xf]
      %v1917 = vld [vmem:[%s612 + $0x2c] sm:$0x1]
      %v1918 = vld [vmem:[%s612 + $0x30] sm:$0xf]
      %v1919 = vld [vmem:[%s612 + $0x34] sm:$0x1]
      %v1920 = vld [vmem:[%s612 + $0x38] sm:$0xf]
      %v1921 = vld [vmem:[%s612 + $0x3c] sm:$0x1]
      %v1923 = vshrl.u32 %v1906, 16
      %v1925 = vrot.slane %v1923, 4
      %v1926 = vshll.u32 %v1906, 16
      %v1928 = vrot.slane %v1926, 5
      %v1929 = vor.u32 %v1925, %v1928
      %v1930 = vrot.slane %v1929, 4
      %v1932 = vshll.u32 %v1907, 16
      %v1934 = vrot.slane %v1932, 5
      %v1935 = vsel %vm905, %v1930, %v1934
      %v1937 = vshrl.u32 %v1908, 16
      %v1939 = vrot.slane %v1937, 4
      %v1940 = vshll.u32 %v1908, 16
      %v1942 = vrot.slane %v1940, 5
      %v1943 = vor.u32 %v1939, %v1942
      %v1944 = vrot.slane %v1943, 4
      %v1946 = vshll.u32 %v1909, 16
      %v1948 = vrot.slane %v1946, 5
      %v1949 = vsel %vm905, %v1944, %v1948
      %v1951 = vshrl.u32 %v1910, 16
      %v1953 = vrot.slane %v1951, 4
      %v1954 = vshll.u32 %v1910, 16
      %v1956 = vrot.slane %v1954, 5
      %v1957 = vor.u32 %v1953, %v1956
      %v1958 = vrot.slane %v1957, 4
      %v1960 = vshll.u32 %v1911, 16
      %v1962 = vrot.slane %v1960, 5
      %v1963 = vsel %vm905, %v1958, %v1962
      %v1965 = vshrl.u32 %v1912, 16
      %v1967 = vrot.slane %v1965, 4
      %v1968 = vshll.u32 %v1912, 16
      %v1970 = vrot.slane %v1968, 5
      %v1971 = vor.u32 %v1967, %v1970
      %v1972 = vrot.slane %v1971, 4
      %v1974 = vshll.u32 %v1913, 16
      %v1976 = vrot.slane %v1974, 5
      %v1977 = vsel %vm905, %v1972, %v1976
      %v1979 = vshrl.u32 %v1914, 16
      %v1981 = vrot.slane %v1979, 4
      %v1982 = vshll.u32 %v1914, 16
      %v1984 = vrot.slane %v1982, 5
      %v1985 = vor.u32 %v1981, %v1984
      %v1986 = vrot.slane %v1985, 4
      %v1988 = vshll.u32 %v1915, 16
      %v1990 = vrot.slane %v1988, 5
      %v1991 = vsel %vm905, %v1986, %v1990
      %v1993 = vshrl.u32 %v1916, 16
      %v1995 = vrot.slane %v1993, 4
      %v1996 = vshll.u32 %v1916, 16
      %v1998 = vrot.slane %v1996, 5
      %v1999 = vor.u32 %v1995, %v1998
      %v2000 = vrot.slane %v1999, 4
      %v2002 = vshll.u32 %v1917, 16
      %v2004 = vrot.slane %v2002, 5
      %v2005 = vsel %vm905, %v2000, %v2004
      %v2007 = vshrl.u32 %v1918, 16
      %v2009 = vrot.slane %v2007, 4
      %v2010 = vshll.u32 %v1918, 16
      %v2012 = vrot.slane %v2010, 5
      %v2013 = vor.u32 %v2009, %v2012
      %v2014 = vrot.slane %v2013, 4
      %v2016 = vshll.u32 %v1919, 16
      %v2018 = vrot.slane %v2016, 5
      %v2019 = vsel %vm905, %v2014, %v2018
      %v2021 = vshrl.u32 %v1920, 16
      %v2023 = vrot.slane %v2021, 4
      %v2024 = vshll.u32 %v1920, 16
      %v2026 = vrot.slane %v2024, 5
      %v2027 = vor.u32 %v2023, %v2026
      %v2028 = vrot.slane %v2027, 4
      %v2030 = vshll.u32 %v1921, 16
      %v2032 = vrot.slane %v2030, 5
      %v2033 = vsel %vm905, %v2028, %v2032
      %v2034 = vld [vmem:[%s1677] sm:$0xf]
      %v2035 = vld [vmem:[%s1677 + $0x4] sm:$0x1]
      %v2036 = vld [vmem:[%s1677 + $0x8] sm:$0xf]
      %v2037 = vld [vmem:[%s1677 + $0xc] sm:$0x1]
      %v2038 = vld [vmem:[%s1677 + $0x10] sm:$0xf]
      %v2039 = vld [vmem:[%s1677 + $0x14] sm:$0x1]
      %v2040 = vld [vmem:[%s1677 + $0x18] sm:$0xf]
      %v2041 = vld [vmem:[%s1677 + $0x1c] sm:$0x1]
      %v2042 = vld [vmem:[%s1677 + $0x20] sm:$0xf]
      %v2043 = vld [vmem:[%s1677 + $0x24] sm:$0x1]
      %v2044 = vld [vmem:[%s1677 + $0x28] sm:$0xf]
      %v2045 = vld [vmem:[%s1677 + $0x2c] sm:$0x1]
      %v2046 = vld [vmem:[%s1677 + $0x30] sm:$0xf]
      %v2047 = vld [vmem:[%s1677 + $0x34] sm:$0x1]
      %v2048 = vld [vmem:[%s1677 + $0x38] sm:$0xf]
      %v2049 = vld [vmem:[%s1677 + $0x3c] sm:$0x1]
      %v2051 = vshrl.u32 %v2034, 16
      %v2053 = vrot.slane %v2051, 4
      %v2054 = vshll.u32 %v2034, 16
      %v2056 = vrot.slane %v2054, 5
      %v2057 = vor.u32 %v2053, %v2056
      %v2058 = vrot.slane %v2057, 4
      %v2060 = vshll.u32 %v2035, 16
      %v2062 = vrot.slane %v2060, 5
      %v2063 = vsel %vm905, %v2058, %v2062
      %v2065 = vshrl.u32 %v2036, 16
      %v2067 = vrot.slane %v2065, 4
      %v2068 = vshll.u32 %v2036, 16
      %v2070 = vrot.slane %v2068, 5
      %v2071 = vor.u32 %v2067, %v2070
      %v2072 = vrot.slane %v2071, 4
      %v2074 = vshll.u32 %v2037, 16
      %v2076 = vrot.slane %v2074, 5
      %v2077 = vsel %vm905, %v2072, %v2076
      %v2079 = vshrl.u32 %v2038, 16
      %v2081 = vrot.slane %v2079, 4
      %v2082 = vshll.u32 %v2038, 16
      %v2084 = vrot.slane %v2082, 5
      %v2085 = vor.u32 %v2081, %v2084
      %v2086 = vrot.slane %v2085, 4
      %v2088 = vshll.u32 %v2039, 16
      %v2090 = vrot.slane %v2088, 5
      %v2091 = vsel %vm905, %v2086, %v2090
      %v2093 = vshrl.u32 %v2040, 16
      %v2095 = vrot.slane %v2093, 4
      %v2096 = vshll.u32 %v2040, 16
      %v2098 = vrot.slane %v2096, 5
      %v2099 = vor.u32 %v2095, %v2098
      %v2100 = vrot.slane %v2099, 4
      %v2102 = vshll.u32 %v2041, 16
      %v2104 = vrot.slane %v2102, 5
      %v2105 = vsel %vm905, %v2100, %v2104
      %v2107 = vshrl.u32 %v2042, 16
      %v2109 = vrot.slane %v2107, 4
      %v2110 = vshll.u32 %v2042, 16
      %v2112 = vrot.slane %v2110, 5
      %v2113 = vor.u32 %v2109, %v2112
      %v2114 = vrot.slane %v2113, 4
      %v2116 = vshll.u32 %v2043, 16
      %v2118 = vrot.slane %v2116, 5
      %v2119 = vsel %vm905, %v2114, %v2118
      %v2121 = vshrl.u32 %v2044, 16
      %v2123 = vrot.slane %v2121, 4
      %v2124 = vshll.u32 %v2044, 16
      %v2126 = vrot.slane %v2124, 5
      %v2127 = vor.u32 %v2123, %v2126
      %v2128 = vrot.slane %v2127, 4
      %v2130 = vshll.u32 %v2045, 16
      %v2132 = vrot.slane %v2130, 5
      %v2133 = vsel %vm905, %v2128, %v2132
      %v2135 = vshrl.u32 %v2046, 16
      %v2137 = vrot.slane %v2135, 4
      %v2138 = vshll.u32 %v2046, 16
      %v2140 = vrot.slane %v2138, 5
      %v2141 = vor.u32 %v2137, %v2140
      %v2142 = vrot.slane %v2141, 4
      %v2144 = vshll.u32 %v2047, 16
      %v2146 = vrot.slane %v2144, 5
      %v2147 = vsel %vm905, %v2142, %v2146
      %v2149 = vshrl.u32 %v2048, 16
      %v2151 = vrot.slane %v2149, 4
      %v2152 = vshll.u32 %v2048, 16
      %v2154 = vrot.slane %v2152, 5
      %v2155 = vor.u32 %v2151, %v2154
      %v2156 = vrot.slane %v2155, 4
      %v2158 = vshll.u32 %v2049, 16
      %v2160 = vrot.slane %v2158, 5
      %v2161 = vsel %vm905, %v2156, %v2160
      %s2162 = scalar_lea.vmem %s4, 8
      %v2163 = vld [vmem:[%s2162] sm:$0x3]
      %v2164 = vunpack.c.l.b16 %v1935
      %v2165 = vunpack.c.l.b16 %v1949
      %v2166 = vunpack.c.l.b16 %v1963
      %v2167 = vunpack.c.l.b16 %v1977
      %v2168 = vunpack.c.l.b16 %v1991
      %v2169 = vunpack.c.l.b16 %v2005
      %v2170 = vunpack.c.l.b16 %v2019
      %v2171 = vunpack.c.l.b16 %v2033
      %v2172 = vpack.c.b16 %v2165, %v2164
      %v2173 = vpack.c.b16 %v2167, %v2166
      %v2174 = vpack.c.b16 %v2169, %v2168
      %v2175 = vpack.c.b16 %v2171, %v2170
      %v2177 = vsel %vm705, %v2172, 0
      %v2180 = vsel %vm705, %v2173, 0
      %v2183 = vsel %vm705, %v2174, 0
      %v2186 = vsel %vm705, %v2175, 0
      %v2189 = vsel %vm718, %v2163, 0
      %2191 = vmatprep.subr.bf16.mxu0 0
      %2192 = vmatpush1.bf16.msra.mxu0 %v2189
      %2193 = vmatprep.subr.bf16.mxu0 0
      %2194 = vmatpush1.bf16.msra.mxu0 0
      %2195 = vmatprep.subr.bf16.mxu0 0
      %2196 = vmatpush1.bf16.msra.mxu0 0
      %2197 = vmatprep.subr.bf16.mxu0 0
      %2198 = vmatpush1.bf16.msra.mxu0 0
      %2199 = vmatprep.subr.bf16.mxu0 0
      %2200 = vmatpush1.bf16.msra.mxu0 0
      %2201 = vmatprep.subr.bf16.mxu0 0
      %2202 = vmatpush1.bf16.msra.mxu0 0
      %2203 = vmatprep.subr.bf16.mxu0 0
      %2204 = vmatpush1.bf16.msra.mxu0 0
      %2205 = vmatprep.subr.bf16.mxu0 0
      %2206 = vmatpush1.bf16.msra.mxu0 0
      %2207 = vmatprep.subr.bf16.mxu0 0
      %2208 = vmatpush1.bf16.msra.mxu0 0
      %2209 = vmatprep.subr.bf16.mxu0 0
      %2210 = vmatpush1.bf16.msra.mxu0 0
      %2211 = vmatprep.subr.bf16.mxu0 0
      %2212 = vmatpush1.bf16.msra.mxu0 0
      %2213 = vmatprep.subr.bf16.mxu0 0
      %2214 = vmatpush1.bf16.msra.mxu0 0
      %2215 = vmatprep.subr.bf16.mxu0 0
      %2216 = vmatpush1.bf16.msra.mxu0 0
      %2217 = vmatprep.subr.bf16.mxu0 0
      %2218 = vmatpush1.bf16.msra.mxu0 0
      %2219 = vmatprep.subr.bf16.mxu0 0
      %2220 = vmatpush1.bf16.msra.mxu0 0
      %2221 = vmatprep.subr.bf16.mxu0 0
      %2222 = vmatpush1.bf16.msra.mxu0 0
      %2223 = vmatprep.mubr.bf16.mxu0 0
      %2224 = vmatmul.mubr.bf16.gmra.mrb[0].mxu0 %v2177
      %v2225 = vpop.f32.mrb[0].mxu0
      %v2226 = vadd.f32 0.0, %v2225
      %v2227 = vpop.f32.mrb[0].mxu0
      %v2228 = vpop.f32.mrb[0].mxu0
      %v2229 = vadd.f32 0.0, %v2228
      %v2230 = vpop.f32.mrb[0].mxu0
      %2231 = vmatprep.mubr.bf16.mxu0 0
      %2232 = vmatmul.mubr.bf16.gmra.mrb[0].mxu0 %v2180
      %v2233 = vpop.f32.mrb[0].mxu0
      %v2234 = vadd.f32 0.0, %v2233
      %v2235 = vpop.f32.mrb[0].mxu0
      %v2236 = vpop.f32.mrb[0].mxu0
      %v2237 = vadd.f32 0.0, %v2236
      %v2238 = vpop.f32.mrb[0].mxu0
      %2239 = vmatprep.mubr.bf16.mxu0 0
      %2240 = vmatmul.mubr.bf16.gmra.mrb[0].mxu0 %v2183
      %v2241 = vpop.f32.mrb[0].mxu0
      %v2242 = vadd.f32 0.0, %v2241
      %v2243 = vpop.f32.mrb[0].mxu0
      %v2244 = vpop.f32.mrb[0].mxu0
      %v2245 = vadd.f32 0.0, %v2244
      %v2246 = vpop.f32.mrb[0].mxu0
      %2247 = vmatprep.mubr.bf16.mxu0 0
      %2248 = vmatmul.mubr.bf16.gmra.mrb[0].mxu0 %v2186
      %v2249 = vpop.f32.mrb[0].mxu0
      %v2250 = vadd.f32 0.0, %v2249
      %v2251 = vpop.f32.mrb[0].mxu0
      %v2252 = vpop.f32.mrb[0].mxu0
      %v2253 = vadd.f32 0.0, %v2252
      %v2254 = vpop.f32.mrb[0].mxu0
      %2255 = vdwg.mxu0
      %v2256 = vadd.f32 %v1898, %v2226
      %v2257 = vadd.f32 %v1899, %v2229
      %v2258 = vadd.f32 %v1900, %v2234
      %v2259 = vadd.f32 %v1901, %v2237
      %v2260 = vadd.f32 %v1902, %v2242
      %v2261 = vadd.f32 %v1903, %v2245
      %v2262 = vadd.f32 %v1904, %v2250
      %v2263 = vadd.f32 %v1905, %v2253
      %s2264 = scalar_lea.vmem %s5, 8
      %v2265 = vld [vmem:[%s2264] sm:$0x3]
      %v2266 = vunpack.c.l.b16 %v2063
      %v2267 = vunpack.c.l.b16 %v2077
      %v2268 = vunpack.c.l.b16 %v2091
      %v2269 = vunpack.c.l.b16 %v2105
      %v2270 = vunpack.c.l.b16 %v2119
      %v2271 = vunpack.c.l.b16 %v2133
      %v2272 = vunpack.c.l.b16 %v2147
      %v2273 = vunpack.c.l.b16 %v2161
      %v2274 = vpack.c.b16 %v2267, %v2266
      %v2275 = vpack.c.b16 %v2269, %v2268
      %v2276 = vpack.c.b16 %v2271, %v2270
      %v2277 = vpack.c.b16 %v2273, %v2272
      %v2279 = vsel %vm705, %v2274, 0
      %v2282 = vsel %vm705, %v2275, 0
      %v2285 = vsel %vm705, %v2276, 0
      %v2288 = vsel %vm705, %v2277, 0
      %v2291 = vsel %vm718, %v2265, 0
      %2293 = vmatprep.subr.bf16.mxu0 0
      %2294 = vmatpush1.bf16.msra.mxu0 %v2291
      %2295 = vmatprep.subr.bf16.mxu0 0
      %2296 = vmatpush1.bf16.msra.mxu0 0
      %2297 = vmatprep.subr.bf16.mxu0 0
      %2298 = vmatpush1.bf16.msra.mxu0 0
      %2299 = vmatprep.subr.bf16.mxu0 0
      %2300 = vmatpush1.bf16.msra.mxu0 0
      %2301 = vmatprep.subr.bf16.mxu0 0
      %2302 = vmatpush1.bf16.msra.mxu0 0
      %2303 = vmatprep.subr.bf16.mxu0 0
      %2304 = vmatpush1.bf16.msra.mxu0 0
      %2305 = vmatprep.subr.bf16.mxu0 0
      %2306 = vmatpush1.bf16.msra.mxu0 0
      %2307 = vmatprep.subr.bf16.mxu0 0
      %2308 = vmatpush1.bf16.msra.mxu0 0
      %2309 = vmatprep.subr.bf16.mxu0 0
      %2310 = vmatpush1.bf16.msra.mxu0 0
      %2311 = vmatprep.subr.bf16.mxu0 0
      %2312 = vmatpush1.bf16.msra.mxu0 0
      %2313 = vmatprep.subr.bf16.mxu0 0
      %2314 = vmatpush1.bf16.msra.mxu0 0
      %2315 = vmatprep.subr.bf16.mxu0 0
      %2316 = vmatpush1.bf16.msra.mxu0 0
      %2317 = vmatprep.subr.bf16.mxu0 0
      %2318 = vmatpush1.bf16.msra.mxu0 0
      %2319 = vmatprep.subr.bf16.mxu0 0
      %2320 = vmatpush1.bf16.msra.mxu0 0
      %2321 = vmatprep.subr.bf16.mxu0 0
      %2322 = vmatpush1.bf16.msra.mxu0 0
      %2323 = vmatprep.subr.bf16.mxu0 0
      %2324 = vmatpush1.bf16.msra.mxu0 0
      %2325 = vmatprep.mubr.bf16.mxu0 0
      %2326 = vmatmul.mubr.bf16.gmra.mrb[0].mxu0 %v2279
      %v2327 = vpop.f32.mrb[0].mxu0
      %v2328 = vadd.f32 0.0, %v2327
      %v2329 = vpop.f32.mrb[0].mxu0
      %v2330 = vpop.f32.mrb[0].mxu0
      %v2331 = vadd.f32 0.0, %v2330
      %v2332 = vpop.f32.mrb[0].mxu0
      %2333 = vmatprep.mubr.bf16.mxu0 0
      %2334 = vmatmul.mubr.bf16.gmra.mrb[0].mxu0 %v2282
      %v2335 = vpop.f32.mrb[0].mxu0
      %v2336 = vadd.f32 0.0, %v2335
      %v2337 = vpop.f32.mrb[0].mxu0
      %v2338 = vpop.f32.mrb[0].mxu0
      %v2339 = vadd.f32 0.0, %v2338
      %v2340 = vpop.f32.mrb[0].mxu0
      %2341 = vmatprep.mubr.bf16.mxu0 0
      %2342 = vmatmul.mubr.bf16.gmra.mrb[0].mxu0 %v2285
      %v2343 = vpop.f32.mrb[0].mxu0
      %v2344 = vadd.f32 0.0, %v2343
      %v2345 = vpop.f32.mrb[0].mxu0
      %v2346 = vpop.f32.mrb[0].mxu0
      %v2347 = vadd.f32 0.0, %v2346
      %v2348 = vpop.f32.mrb[0].mxu0
      %2349 = vmatprep.mubr.bf16.mxu0 0
      %2350 = vmatmul.mubr.bf16.gmra.mrb[0].mxu0 %v2288
      %v2351 = vpop.f32.mrb[0].mxu0
      %v2352 = vadd.f32 0.0, %v2351
      %v2353 = vpop.f32.mrb[0].mxu0
      %v2354 = vpop.f32.mrb[0].mxu0
      %v2355 = vadd.f32 0.0, %v2354
      %v2356 = vpop.f32.mrb[0].mxu0
      %2357 = vdwg.mxu0
      %v2358 = vadd.f32 %v2256, %v2328
      %v2359 = vadd.f32 %v2257, %v2331
      %v2360 = vadd.f32 %v2258, %v2336
      %v2361 = vadd.f32 %v2259, %v2339
      %v2362 = vadd.f32 %v2260, %v2344
      %v2363 = vadd.f32 %v2261, %v2347
      %v2364 = vadd.f32 %v2262, %v2352
      %v2365 = vadd.f32 %v2263, %v2355
      %v2366 = vld [vmem:[%s612] sm:$0xe]
      %v2367 = vld [vmem:[%s612 + $0x8] sm:$0xe]
      %v2368 = vld [vmem:[%s612 + $0x10] sm:$0xe]
      %v2369 = vld [vmem:[%s612 + $0x18] sm:$0xe]
      %v2370 = vld [vmem:[%s612 + $0x20] sm:$0xe]
      %v2371 = vld [vmem:[%s612 + $0x28] sm:$0xe]
      %v2372 = vld [vmem:[%s612 + $0x30] sm:$0xe]
      %v2373 = vld [vmem:[%s612 + $0x38] sm:$0xe]
      %v2390 = vrot.slane %v2366, 5
      %v2391 = vrot.slane %v2390, 4
      %v2392 = vrot.slane %v1907, 5
      %v2393 = vsel %vm1376, %v2391, %v2392
      %v2394 = vrot.slane %v2367, 5
      %v2395 = vrot.slane %v2394, 4
      %v2396 = vrot.slane %v1909, 5
      %v2397 = vsel %vm1376, %v2395, %v2396
      %v2398 = vrot.slane %v2368, 5
      %v2399 = vrot.slane %v2398, 4
      %v2400 = vrot.slane %v1911, 5
      %v2401 = vsel %vm1376, %v2399, %v2400
      %v2402 = vrot.slane %v2369, 5
      %v2403 = vrot.slane %v2402, 4
      %v2404 = vrot.slane %v1913, 5
      %v2405 = vsel %vm1376, %v2403, %v2404
      %v2406 = vrot.slane %v2370, 5
      %v2407 = vrot.slane %v2406, 4
      %v2408 = vrot.slane %v1915, 5
      %v2409 = vsel %vm1376, %v2407, %v2408
      %v2410 = vrot.slane %v2371, 5
      %v2411 = vrot.slane %v2410, 4
      %v2412 = vrot.slane %v1917, 5
      %v2413 = vsel %vm1376, %v2411, %v2412
      %v2414 = vrot.slane %v2372, 5
      %v2415 = vrot.slane %v2414, 4
      %v2416 = vrot.slane %v1919, 5
      %v2417 = vsel %vm1376, %v2415, %v2416
      %v2418 = vrot.slane %v2373, 5
      %v2419 = vrot.slane %v2418, 4
      %v2420 = vrot.slane %v1921, 5
      %v2421 = vsel %vm1376, %v2419, %v2420
      %v2422 = vld [vmem:[%s1677] sm:$0xe]
      %v2423 = vld [vmem:[%s1677 + $0x8] sm:$0xe]
      %v2424 = vld [vmem:[%s1677 + $0x10] sm:$0xe]
      %v2425 = vld [vmem:[%s1677 + $0x18] sm:$0xe]
      %v2426 = vld [vmem:[%s1677 + $0x20] sm:$0xe]
      %v2427 = vld [vmem:[%s1677 + $0x28] sm:$0xe]
      %v2428 = vld [vmem:[%s1677 + $0x30] sm:$0xe]
      %v2429 = vld [vmem:[%s1677 + $0x38] sm:$0xe]
      %v2446 = vrot.slane %v2422, 5
      %v2447 = vrot.slane %v2446, 4
      %v2448 = vrot.slane %v2035, 5
      %v2449 = vsel %vm1376, %v2447, %v2448
      %v2450 = vrot.slane %v2423, 5
      %v2451 = vrot.slane %v2450, 4
      %v2452 = vrot.slane %v2037, 5
      %v2453 = vsel %vm1376, %v2451, %v2452
      %v2454 = vrot.slane %v2424, 5
      %v2455 = vrot.slane %v2454, 4
      %v2456 = vrot.slane %v2039, 5
      %v2457 = vsel %vm1376, %v2455, %v2456
      %v2458 = vrot.slane %v2425, 5
      %v2459 = vrot.slane %v2458, 4
      %v2460 = vrot.slane %v2041, 5
      %v2461 = vsel %vm1376, %v2459, %v2460
      %v2462 = vrot.slane %v2426, 5
      %v2463 = vrot.slane %v2462, 4
      %v2464 = vrot.slane %v2043, 5
      %v2465 = vsel %vm1376, %v2463, %v2464
      %v2466 = vrot.slane %v2427, 5
      %v2467 = vrot.slane %v2466, 4
      %v2468 = vrot.slane %v2045, 5
      %v2469 = vsel %vm1376, %v2467, %v2468
      %v2470 = vrot.slane %v2428, 5
      %v2471 = vrot.slane %v2470, 4
      %v2472 = vrot.slane %v2047, 5
      %v2473 = vsel %vm1376, %v2471, %v2472
      %v2474 = vrot.slane %v2429, 5
      %v2475 = vrot.slane %v2474, 4
      %v2476 = vrot.slane %v2049, 5
      %v2477 = vsel %vm1376, %v2475, %v2476
      %s2478 = scalar_lea.vmem %s4, 10
      %v2479 = vld [vmem:[%s2478] sm:$0x3]
      %v2480 = vunpack.c.l.b16 %v2393
      %v2481 = vunpack.c.l.b16 %v2397
      %v2482 = vunpack.c.l.b16 %v2401
      %v2483 = vunpack.c.l.b16 %v2405
      %v2484 = vunpack.c.l.b16 %v2409
      %v2485 = vunpack.c.l.b16 %v2413
      %v2486 = vunpack.c.l.b16 %v2417
      %v2487 = vunpack.c.l.b16 %v2421
      %v2488 = vpack.c.b16 %v2481, %v2480
      %v2489 = vpack.c.b16 %v2483, %v2482
      %v2490 = vpack.c.b16 %v2485, %v2484
      %v2491 = vpack.c.b16 %v2487, %v2486
      %v2493 = vsel %vm705, %v2488, 0
      %v2496 = vsel %vm705, %v2489, 0
      %v2499 = vsel %vm705, %v2490, 0
      %v2502 = vsel %vm705, %v2491, 0
      %v2505 = vsel %vm718, %v2479, 0
      %2507 = vmatprep.subr.bf16.mxu0 0
      %2508 = vmatpush1.bf16.msra.mxu0 %v2505
      %2509 = vmatprep.subr.bf16.mxu0 0
      %2510 = vmatpush1.bf16.msra.mxu0 0
      %2511 = vmatprep.subr.bf16.mxu0 0
      %2512 = vmatpush1.bf16.msra.mxu0 0
      %2513 = vmatprep.subr.bf16.mxu0 0
      %2514 = vmatpush1.bf16.msra.mxu0 0
      %2515 = vmatprep.subr.bf16.mxu0 0
      %2516 = vmatpush1.bf16.msra.mxu0 0
      %2517 = vmatprep.subr.bf16.mxu0 0
      %2518 = vmatpush1.bf16.msra.mxu0 0
      %2519 = vmatprep.subr.bf16.mxu0 0
      %2520 = vmatpush1.bf16.msra.mxu0 0
      %2521 = vmatprep.subr.bf16.mxu0 0
      %2522 = vmatpush1.bf16.msra.mxu0 0
      %2523 = vmatprep.subr.bf16.mxu0 0
      %2524 = vmatpush1.bf16.msra.mxu0 0
      %2525 = vmatprep.subr.bf16.mxu0 0
      %2526 = vmatpush1.bf16.msra.mxu0 0
      %2527 = vmatprep.subr.bf16.mxu0 0
      %2528 = vmatpush1.bf16.msra.mxu0 0
      %2529 = vmatprep.subr.bf16.mxu0 0
      %2530 = vmatpush1.bf16.msra.mxu0 0
      %2531 = vmatprep.subr.bf16.mxu0 0
      %2532 = vmatpush1.bf16.msra.mxu0 0
      %2533 = vmatprep.subr.bf16.mxu0 0
      %2534 = vmatpush1.bf16.msra.mxu0 0
      %2535 = vmatprep.subr.bf16.mxu0 0
      %2536 = vmatpush1.bf16.msra.mxu0 0
      %2537 = vmatprep.subr.bf16.mxu0 0
      %2538 = vmatpush1.bf16.msra.mxu0 0
      %2539 = vmatprep.mubr.bf16.mxu0 0
      %2540 = vmatmul.mubr.bf16.gmra.mrb[0].mxu0 %v2493
      %v2541 = vpop.f32.mrb[0].mxu0
      %v2542 = vadd.f32 0.0, %v2541
      %v2543 = vpop.f32.mrb[0].mxu0
      %v2544 = vpop.f32.mrb[0].mxu0
      %v2545 = vadd.f32 0.0, %v2544
      %v2546 = vpop.f32.mrb[0].mxu0
      %2547 = vmatprep.mubr.bf16.mxu0 0
      %2548 = vmatmul.mubr.bf16.gmra.mrb[0].mxu0 %v2496
      %v2549 = vpop.f32.mrb[0].mxu0
      %v2550 = vadd.f32 0.0, %v2549
      %v2551 = vpop.f32.mrb[0].mxu0
      %v2552 = vpop.f32.mrb[0].mxu0
      %v2553 = vadd.f32 0.0, %v2552
      %v2554 = vpop.f32.mrb[0].mxu0
      %2555 = vmatprep.mubr.bf16.mxu0 0
      %2556 = vmatmul.mubr.bf16.gmra.mrb[0].mxu0 %v2499
      %v2557 = vpop.f32.mrb[0].mxu0
      %v2558 = vadd.f32 0.0, %v2557
      %v2559 = vpop.f32.mrb[0].mxu0
      %v2560 = vpop.f32.mrb[0].mxu0
      %v2561 = vadd.f32 0.0, %v2560
      %v2562 = vpop.f32.mrb[0].mxu0
      %2563 = vmatprep.mubr.bf16.mxu0 0
      %2564 = vmatmul.mubr.bf16.gmra.mrb[0].mxu0 %v2502
      %v2565 = vpop.f32.mrb[0].mxu0
      %v2566 = vadd.f32 0.0, %v2565
      %v2567 = vpop.f32.mrb[0].mxu0
      %v2568 = vpop.f32.mrb[0].mxu0
      %v2569 = vadd.f32 0.0, %v2568
      %v2570 = vpop.f32.mrb[0].mxu0
      %2571 = vdwg.mxu0
      %v2572 = vadd.f32 %v2358, %v2542
      %v2573 = vadd.f32 %v2359, %v2545
      %v2574 = vadd.f32 %v2360, %v2550
      %v2575 = vadd.f32 %v2361, %v2553
      %v2576 = vadd.f32 %v2362, %v2558
      %v2577 = vadd.f32 %v2363, %v2561
      %v2578 = vadd.f32 %v2364, %v2566
      %v2579 = vadd.f32 %v2365, %v2569
      %s2580 = scalar_lea.vmem %s5, 10
      %v2581 = vld [vmem:[%s2580] sm:$0x3]
      %v2582 = vunpack.c.l.b16 %v2449
      %v2583 = vunpack.c.l.b16 %v2453
      %v2584 = vunpack.c.l.b16 %v2457
      %v2585 = vunpack.c.l.b16 %v2461
      %v2586 = vunpack.c.l.b16 %v2465
      %v2587 = vunpack.c.l.b16 %v2469
      %v2588 = vunpack.c.l.b16 %v2473
      %v2589 = vunpack.c.l.b16 %v2477
      %v2590 = vpack.c.b16 %v2583, %v2582
      %v2591 = vpack.c.b16 %v2585, %v2584
      %v2592 = vpack.c.b16 %v2587, %v2586
      %v2593 = vpack.c.b16 %v2589, %v2588
      %v2595 = vsel %vm705, %v2590, 0
      %v2598 = vsel %vm705, %v2591, 0
      %v2601 = vsel %vm705, %v2592, 0
      %v2604 = vsel %vm705, %v2593, 0
      %v2607 = vsel %vm718, %v2581, 0
      %2609 = vmatprep.subr.bf16.mxu0 0
      %2610 = vmatpush1.bf16.msra.mxu0 %v2607
      %2611 = vmatprep.subr.bf16.mxu0 0
      %2612 = vmatpush1.bf16.msra.mxu0 0
      %2613 = vmatprep.subr.bf16.mxu0 0
      %2614 = vmatpush1.bf16.msra.mxu0 0
      %2615 = vmatprep.subr.bf16.mxu0 0
      %2616 = vmatpush1.bf16.msra.mxu0 0
      %2617 = vmatprep.subr.bf16.mxu0 0
      %2618 = vmatpush1.bf16.msra.mxu0 0
      %2619 = vmatprep.subr.bf16.mxu0 0
      %2620 = vmatpush1.bf16.msra.mxu0 0
      %2621 = vmatprep.subr.bf16.mxu0 0
      %2622 = vmatpush1.bf16.msra.mxu0 0
      %2623 = vmatprep.subr.bf16.mxu0 0
      %2624 = vmatpush1.bf16.msra.mxu0 0
      %2625 = vmatprep.subr.bf16.mxu0 0
      %2626 = vmatpush1.bf16.msra.mxu0 0
      %2627 = vmatprep.subr.bf16.mxu0 0
      %2628 = vmatpush1.bf16.msra.mxu0 0
      %2629 = vmatprep.subr.bf16.mxu0 0
      %2630 = vmatpush1.bf16.msra.mxu0 0
      %2631 = vmatprep.subr.bf16.mxu0 0
      %2632 = vmatpush1.bf16.msra.mxu0 0
      %2633 = vmatprep.subr.bf16.mxu0 0
      %2634 = vmatpush1.bf16.msra.mxu0 0
      %2635 = vmatprep.subr.bf16.mxu0 0
      %2636 = vmatpush1.bf16.msra.mxu0 0
      %2637 = vmatprep.subr.bf16.mxu0 0
      %2638 = vmatpush1.bf16.msra.mxu0 0
      %2639 = vmatprep.subr.bf16.mxu0 0
      %2640 = vmatpush1.bf16.msra.mxu0 0
      %2641 = vmatprep.mubr.bf16.mxu0 0
      %2642 = vmatmul.mubr.bf16.gmra.mrb[0].mxu0 %v2595
      %v2643 = vpop.f32.mrb[0].mxu0
      %v2644 = vadd.f32 0.0, %v2643
      %v2645 = vpop.f32.mrb[0].mxu0
      %v2646 = vpop.f32.mrb[0].mxu0
      %v2647 = vadd.f32 0.0, %v2646
      %v2648 = vpop.f32.mrb[0].mxu0
      %2649 = vmatprep.mubr.bf16.mxu0 0
      %2650 = vmatmul.mubr.bf16.gmra.mrb[0].mxu0 %v2598
      %v2651 = vpop.f32.mrb[0].mxu0
      %v2652 = vadd.f32 0.0, %v2651
      %v2653 = vpop.f32.mrb[0].mxu0
      %v2654 = vpop.f32.mrb[0].mxu0
      %v2655 = vadd.f32 0.0, %v2654
      %v2656 = vpop.f32.mrb[0].mxu0
      %2657 = vmatprep.mubr.bf16.mxu0 0
      %2658 = vmatmul.mubr.bf16.gmra.mrb[0].mxu0 %v2601
      %v2659 = vpop.f32.mrb[0].mxu0
      %v2660 = vadd.f32 0.0, %v2659
      %v2661 = vpop.f32.mrb[0].mxu0
      %v2662 = vpop.f32.mrb[0].mxu0
      %v2663 = vadd.f32 0.0, %v2662
      %v2664 = vpop.f32.mrb[0].mxu0
      %2665 = vmatprep.mubr.bf16.mxu0 0
      %2666 = vmatmul.mubr.bf16.gmra.mrb[0].mxu0 %v2604
      %v2667 = vpop.f32.mrb[0].mxu0
      %v2668 = vadd.f32 0.0, %v2667
      %v2669 = vpop.f32.mrb[0].mxu0
      %v2670 = vpop.f32.mrb[0].mxu0
      %v2671 = vadd.f32 0.0, %v2670
      %v2672 = vpop.f32.mrb[0].mxu0
      %2673 = vdwg.mxu0
      %v2674 = vadd.f32 %v2572, %v2644
      %v2675 = vadd.f32 %v2573, %v2647
      %v2676 = vadd.f32 %v2574, %v2652
      %v2677 = vadd.f32 %v2575, %v2655
      %v2678 = vadd.f32 %v2576, %v2660
      %v2679 = vadd.f32 %v2577, %v2663
      %v2680 = vadd.f32 %v2578, %v2668
      %v2681 = vadd.f32 %v2579, %v2671
      %s2682 = scalar_lea.vmem [#allocation2], 16
      %v2683 = vld [vmem:[%s2682] sm:$0xf]
      %v2684 = vld [vmem:[%s2682 + $0x8] sm:$0xf]
      %v2685 = vld [vmem:[%s2682 + $0x10] sm:$0xf]
      %v2686 = vld [vmem:[%s2682 + $0x18] sm:$0xf]
      %v2687 = vld [vmem:[%s2682 + $0x20] sm:$0xf]
      %v2688 = vld [vmem:[%s2682 + $0x28] sm:$0xf]
      %v2689 = vld [vmem:[%s2682 + $0x30] sm:$0xf]
      %v2690 = vld [vmem:[%s2682 + $0x38] sm:$0xf]
      %s2691 = scalar_lea.vmem %s295, 16
      %v2692 = vld [vmem:[%s2691] sm:$0xf]
      %v2693 = vld [vmem:[%s2691 + $0x8] sm:$0xf]
      %v2694 = vld [vmem:[%s2691 + $0x10] sm:$0xf]
      %v2695 = vld [vmem:[%s2691 + $0x18] sm:$0xf]
      %v2696 = vld [vmem:[%s2691 + $0x20] sm:$0xf]
      %v2697 = vld [vmem:[%s2691 + $0x28] sm:$0xf]
      %v2698 = vld [vmem:[%s2691 + $0x30] sm:$0xf]
      %v2699 = vld [vmem:[%s2691 + $0x38] sm:$0xf]
      %s2700 = scalar_lea.vmem %s4, 12
      %v2701 = vld [vmem:[%s2700] sm:$0x3]
      %v2710 = vunpack.c.l.b16 %v2683
      %v2711 = vunpack.c.l.b16 %v2684
      %v2712 = vunpack.c.l.b16 %v2685
      %v2713 = vunpack.c.l.b16 %v2686
      %v2714 = vunpack.c.l.b16 %v2687
      %v2715 = vunpack.c.l.b16 %v2688
      %v2716 = vunpack.c.l.b16 %v2689
      %v2717 = vunpack.c.l.b16 %v2690
      %v2718 = vpack.c.b16 %v2711, %v2710
      %v2719 = vpack.c.b16 %v2713, %v2712
      %v2720 = vpack.c.b16 %v2715, %v2714
      %v2721 = vpack.c.b16 %v2717, %v2716
      %v2723 = vsel %vm705, %v2718, 0
      %v2726 = vsel %vm705, %v2719, 0
      %v2729 = vsel %vm705, %v2720, 0
      %v2732 = vsel %vm705, %v2721, 0
      %v2735 = vsel %vm718, %v2701, 0
      %2737 = vmatprep.subr.bf16.mxu0 0
      %2738 = vmatpush1.bf16.msra.mxu0 %v2735
      %2739 = vmatprep.subr.bf16.mxu0 0
      %2740 = vmatpush1.bf16.msra.mxu0 0
      %2741 = vmatprep.subr.bf16.mxu0 0
      %2742 = vmatpush1.bf16.msra.mxu0 0
      %2743 = vmatprep.subr.bf16.mxu0 0
      %2744 = vmatpush1.bf16.msra.mxu0 0
      %2745 = vmatprep.subr.bf16.mxu0 0
      %2746 = vmatpush1.bf16.msra.mxu0 0
      %2747 = vmatprep.subr.bf16.mxu0 0
      %2748 = vmatpush1.bf16.msra.mxu0 0
      %2749 = vmatprep.subr.bf16.mxu0 0
      %2750 = vmatpush1.bf16.msra.mxu0 0
      %2751 = vmatprep.subr.bf16.mxu0 0
      %2752 = vmatpush1.bf16.msra.mxu0 0
      %2753 = vmatprep.subr.bf16.mxu0 0
      %2754 = vmatpush1.bf16.msra.mxu0 0
      %2755 = vmatprep.subr.bf16.mxu0 0
      %2756 = vmatpush1.bf16.msra.mxu0 0
      %2757 = vmatprep.subr.bf16.mxu0 0
      %2758 = vmatpush1.bf16.msra.mxu0 0
      %2759 = vmatprep.subr.bf16.mxu0 0
      %2760 = vmatpush1.bf16.msra.mxu0 0
      %2761 = vmatprep.subr.bf16.mxu0 0
      %2762 = vmatpush1.bf16.msra.mxu0 0
      %2763 = vmatprep.subr.bf16.mxu0 0
      %2764 = vmatpush1.bf16.msra.mxu0 0
      %2765 = vmatprep.subr.bf16.mxu0 0
      %2766 = vmatpush1.bf16.msra.mxu0 0
      %2767 = vmatprep.subr.bf16.mxu0 0
      %2768 = vmatpush1.bf16.msra.mxu0 0
      %2769 = vmatprep.mubr.bf16.mxu0 0
      %2770 = vmatmul.mubr.bf16.gmra.mrb[0].mxu0 %v2723
      %v2771 = vpop.f32.mrb[0].mxu0
      %v2772 = vadd.f32 0.0, %v2771
      %v2773 = vpop.f32.mrb[0].mxu0
      %v2774 = vpop.f32.mrb[0].mxu0
      %v2775 = vadd.f32 0.0, %v2774
      %v2776 = vpop.f32.mrb[0].mxu0
      %2777 = vmatprep.mubr.bf16.mxu0 0
      %2778 = vmatmul.mubr.bf16.gmra.mrb[0].mxu0 %v2726
      %v2779 = vpop.f32.mrb[0].mxu0
      %v2780 = vadd.f32 0.0, %v2779
      %v2781 = vpop.f32.mrb[0].mxu0
      %v2782 = vpop.f32.mrb[0].mxu0
      %v2783 = vadd.f32 0.0, %v2782
      %v2784 = vpop.f32.mrb[0].mxu0
      %2785 = vmatprep.mubr.bf16.mxu0 0
      %2786 = vmatmul.mubr.bf16.gmra.mrb[0].mxu0 %v2729
      %v2787 = vpop.f32.mrb[0].mxu0
      %v2788 = vadd.f32 0.0, %v2787
      %v2789 = vpop.f32.mrb[0].mxu0
      %v2790 = vpop.f32.mrb[0].mxu0
      %v2791 = vadd.f32 0.0, %v2790
      %v2792 = vpop.f32.mrb[0].mxu0
      %2793 = vmatprep.mubr.bf16.mxu0 0
      %2794 = vmatmul.mubr.bf16.gmra.mrb[0].mxu0 %v2732
      %v2795 = vpop.f32.mrb[0].mxu0
      %v2796 = vadd.f32 0.0, %v2795
      %v2797 = vpop.f32.mrb[0].mxu0
      %v2798 = vpop.f32.mrb[0].mxu0
      %v2799 = vadd.f32 0.0, %v2798
      %v2800 = vpop.f32.mrb[0].mxu0
      %2801 = vdwg.mxu0
      %v2802 = vadd.f32 %v2674, %v2772
      %v2803 = vadd.f32 %v2675, %v2775
      %v2804 = vadd.f32 %v2676, %v2780
      %v2805 = vadd.f32 %v2677, %v2783
      %v2806 = vadd.f32 %v2678, %v2788
      %v2807 = vadd.f32 %v2679, %v2791
      %v2808 = vadd.f32 %v2680, %v2796
      %v2809 = vadd.f32 %v2681, %v2799
      %s2810 = scalar_lea.vmem %s5, 12
      %v2811 = vld [vmem:[%s2810] sm:$0x3]
      %v2820 = vunpack.c.l.b16 %v2692
      %v2821 = vunpack.c.l.b16 %v2693
      %v2822 = vunpack.c.l.b16 %v2694
      %v2823 = vunpack.c.l.b16 %v2695
      %v2824 = vunpack.c.l.b16 %v2696
      %v2825 = vunpack.c.l.b16 %v2697
      %v2826 = vunpack.c.l.b16 %v2698
      %v2827 = vunpack.c.l.b16 %v2699
      %v2828 = vpack.c.b16 %v2821, %v2820
      %v2829 = vpack.c.b16 %v2823, %v2822
      %v2830 = vpack.c.b16 %v2825, %v2824
      %v2831 = vpack.c.b16 %v2827, %v2826
      %v2833 = vsel %vm705, %v2828, 0
      %v2836 = vsel %vm705, %v2829, 0
      %v2839 = vsel %vm705, %v2830, 0
      %v2842 = vsel %vm705, %v2831, 0
      %v2845 = vsel %vm718, %v2811, 0
      %2847 = vmatprep.subr.bf16.mxu0 0
      %2848 = vmatpush1.bf16.msra.mxu0 %v2845
      %2849 = vmatprep.subr.bf16.mxu0 0
      %2850 = vmatpush1.bf16.msra.mxu0 0
      %2851 = vmatprep.subr.bf16.mxu0 0
      %2852 = vmatpush1.bf16.msra.mxu0 0
      %2853 = vmatprep.subr.bf16.mxu0 0
      %2854 = vmatpush1.bf16.msra.mxu0 0
      %2855 = vmatprep.subr.bf16.mxu0 0
      %2856 = vmatpush1.bf16.msra.mxu0 0
      %2857 = vmatprep.subr.bf16.mxu0 0
      %2858 = vmatpush1.bf16.msra.mxu0 0
      %2859 = vmatprep.subr.bf16.mxu0 0
      %2860 = vmatpush1.bf16.msra.mxu0 0
      %2861 = vmatprep.subr.bf16.mxu0 0
      %2862 = vmatpush1.bf16.msra.mxu0 0
      %2863 = vmatprep.subr.bf16.mxu0 0
      %2864 = vmatpush1.bf16.msra.mxu0 0
      %2865 = vmatprep.subr.bf16.mxu0 0
      %2866 = vmatpush1.bf16.msra.mxu0 0
      %2867 = vmatprep.subr.bf16.mxu0 0
      %2868 = vmatpush1.bf16.msra.mxu0 0
      %2869 = vmatprep.subr.bf16.mxu0 0
      %2870 = vmatpush1.bf16.msra.mxu0 0
      %2871 = vmatprep.subr.bf16.mxu0 0
      %2872 = vmatpush1.bf16.msra.mxu0 0
      %2873 = vmatprep.subr.bf16.mxu0 0
      %2874 = vmatpush1.bf16.msra.mxu0 0
      %2875 = vmatprep.subr.bf16.mxu0 0
      %2876 = vmatpush1.bf16.msra.mxu0 0
      %2877 = vmatprep.subr.bf16.mxu0 0
      %2878 = vmatpush1.bf16.msra.mxu0 0
      %2879 = vmatprep.mubr.bf16.mxu0 0
      %2880 = vmatmul.mubr.bf16.gmra.mrb[0].mxu0 %v2833
      %v2881 = vpop.f32.mrb[0].mxu0
      %v2882 = vadd.f32 0.0, %v2881
      %v2883 = vpop.f32.mrb[0].mxu0
      %v2884 = vpop.f32.mrb[0].mxu0
      %v2885 = vadd.f32 0.0, %v2884
      %v2886 = vpop.f32.mrb[0].mxu0
      %2887 = vmatprep.mubr.bf16.mxu0 0
      %2888 = vmatmul.mubr.bf16.gmra.mrb[0].mxu0 %v2836
      %v2889 = vpop.f32.mrb[0].mxu0
      %v2890 = vadd.f32 0.0, %v2889
      %v2891 = vpop.f32.mrb[0].mxu0
      %v2892 = vpop.f32.mrb[0].mxu0
      %v2893 = vadd.f32 0.0, %v2892
      %v2894 = vpop.f32.mrb[0].mxu0
      %2895 = vmatprep.mubr.bf16.mxu0 0
      %2896 = vmatmul.mubr.bf16.gmra.mrb[0].mxu0 %v2839
      %v2897 = vpop.f32.mrb[0].mxu0
      %v2898 = vadd.f32 0.0, %v2897
      %v2899 = vpop.f32.mrb[0].mxu0
      %v2900 = vpop.f32.mrb[0].mxu0
      %v2901 = vadd.f32 0.0, %v2900
      %v2902 = vpop.f32.mrb[0].mxu0
      %2903 = vmatprep.mubr.bf16.mxu0 0
      %2904 = vmatmul.mubr.bf16.gmra.mrb[0].mxu0 %v2842
      %v2905 = vpop.f32.mrb[0].mxu0
      %v2906 = vadd.f32 0.0, %v2905
      %v2907 = vpop.f32.mrb[0].mxu0
      %v2908 = vpop.f32.mrb[0].mxu0
      %v2909 = vadd.f32 0.0, %v2908
      %v2910 = vpop.f32.mrb[0].mxu0
      %2911 = vdwg.mxu0
      %v2912 = vadd.f32 %v2802, %v2882
      %v2913 = vadd.f32 %v2803, %v2885
      %v2914 = vadd.f32 %v2804, %v2890
      %v2915 = vadd.f32 %v2805, %v2893
      %v2916 = vadd.f32 %v2806, %v2898
      %v2917 = vadd.f32 %v2807, %v2901
      %v2918 = vadd.f32 %v2808, %v2906
      %v2919 = vadd.f32 %v2809, %v2909
      %v2920 = vld [vmem:[%s2682] sm:$0xf]
      %v2921 = vld [vmem:[%s2682 + $0x4] sm:$0x1]
      %v2922 = vld [vmem:[%s2682 + $0x8] sm:$0xf]
      %v2923 = vld [vmem:[%s2682 + $0xc] sm:$0x1]
      %v2924 = vld [vmem:[%s2682 + $0x10] sm:$0xf]
      %v2925 = vld [vmem:[%s2682 + $0x14] sm:$0x1]
      %v2926 = vld [vmem:[%s2682 + $0x18] sm:$0xf]
      %v2927 = vld [vmem:[%s2682 + $0x1c] sm:$0x1]
      %v2928 = vld [vmem:[%s2682 + $0x20] sm:$0xf]
      %v2929 = vld [vmem:[%s2682 + $0x24] sm:$0x1]
      %v2930 = vld [vmem:[%s2682 + $0x28] sm:$0xf]
      %v2931 = vld [vmem:[%s2682 + $0x2c] sm:$0x1]
      %v2932 = vld [vmem:[%s2682 + $0x30] sm:$0xf]
      %v2933 = vld [vmem:[%s2682 + $0x34] sm:$0x1]
      %v2934 = vld [vmem:[%s2682 + $0x38] sm:$0xf]
      %v2935 = vld [vmem:[%s2682 + $0x3c] sm:$0x1]
      %v2937 = vshrl.u32 %v2920, 16
      %v2939 = vrot.slane %v2937, 4
      %v2940 = vshll.u32 %v2920, 16
      %v2942 = vrot.slane %v2940, 5
      %v2943 = vor.u32 %v2939, %v2942
      %v2944 = vrot.slane %v2943, 4
      %v2946 = vshll.u32 %v2921, 16
      %v2948 = vrot.slane %v2946, 5
      %v2949 = vsel %vm905, %v2944, %v2948
      %v2951 = vshrl.u32 %v2922, 16
      %v2953 = vrot.slane %v2951, 4
      %v2954 = vshll.u32 %v2922, 16
      %v2956 = vrot.slane %v2954, 5
      %v2957 = vor.u32 %v2953, %v2956
      %v2958 = vrot.slane %v2957, 4
      %v2960 = vshll.u32 %v2923, 16
      %v2962 = vrot.slane %v2960, 5
      %v2963 = vsel %vm905, %v2958, %v2962
      %v2965 = vshrl.u32 %v2924, 16
      %v2967 = vrot.slane %v2965, 4
      %v2968 = vshll.u32 %v2924, 16
      %v2970 = vrot.slane %v2968, 5
      %v2971 = vor.u32 %v2967, %v2970
      %v2972 = vrot.slane %v2971, 4
      %v2974 = vshll.u32 %v2925, 16
      %v2976 = vrot.slane %v2974, 5
      %v2977 = vsel %vm905, %v2972, %v2976
      %v2979 = vshrl.u32 %v2926, 16
      %v2981 = vrot.slane %v2979, 4
      %v2982 = vshll.u32 %v2926, 16
      %v2984 = vrot.slane %v2982, 5
      %v2985 = vor.u32 %v2981, %v2984
      %v2986 = vrot.slane %v2985, 4
      %v2988 = vshll.u32 %v2927, 16
      %v2990 = vrot.slane %v2988, 5
      %v2991 = vsel %vm905, %v2986, %v2990
      %v2993 = vshrl.u32 %v2928, 16
      %v2995 = vrot.slane %v2993, 4
      %v2996 = vshll.u32 %v2928, 16
      %v2998 = vrot.slane %v2996, 5
      %v2999 = vor.u32 %v2995, %v2998
      %v3000 = vrot.slane %v2999, 4
      %v3002 = vshll.u32 %v2929, 16
      %v3004 = vrot.slane %v3002, 5
      %v3005 = vsel %vm905, %v3000, %v3004
      %v3007 = vshrl.u32 %v2930, 16
      %v3009 = vrot.slane %v3007, 4
      %v3010 = vshll.u32 %v2930, 16
      %v3012 = vrot.slane %v3010, 5
      %v3013 = vor.u32 %v3009, %v3012
      %v3014 = vrot.slane %v3013, 4
      %v3016 = vshll.u32 %v2931, 16
      %v3018 = vrot.slane %v3016, 5
      %v3019 = vsel %vm905, %v3014, %v3018
      %v3021 = vshrl.u32 %v2932, 16
      %v3023 = vrot.slane %v3021, 4
      %v3024 = vshll.u32 %v2932, 16
      %v3026 = vrot.slane %v3024, 5
      %v3027 = vor.u32 %v3023, %v3026
      %v3028 = vrot.slane %v3027, 4
      %v3030 = vshll.u32 %v2933, 16
      %v3032 = vrot.slane %v3030, 5
      %v3033 = vsel %vm905, %v3028, %v3032
      %v3035 = vshrl.u32 %v2934, 16
      %v3037 = vrot.slane %v3035, 4
      %v3038 = vshll.u32 %v2934, 16
      %v3040 = vrot.slane %v3038, 5
      %v3041 = vor.u32 %v3037, %v3040
      %v3042 = vrot.slane %v3041, 4
      %v3044 = vshll.u32 %v2935, 16
      %v3046 = vrot.slane %v3044, 5
      %v3047 = vsel %vm905, %v3042, %v3046
      %v3048 = vld [vmem:[%s2691] sm:$0xf]
      %v3049 = vld [vmem:[%s2691 + $0x4] sm:$0x1]
      %v3050 = vld [vmem:[%s2691 + $0x8] sm:$0xf]
      %v3051 = vld [vmem:[%s2691 + $0xc] sm:$0x1]
      %v3052 = vld [vmem:[%s2691 + $0x10] sm:$0xf]
      %v3053 = vld [vmem:[%s2691 + $0x14] sm:$0x1]
      %v3054 = vld [vmem:[%s2691 + $0x18] sm:$0xf]
      %v3055 = vld [vmem:[%s2691 + $0x1c] sm:$0x1]
      %v3056 = vld [vmem:[%s2691 + $0x20] sm:$0xf]
      %v3057 = vld [vmem:[%s2691 + $0x24] sm:$0x1]
      %v3058 = vld [vmem:[%s2691 + $0x28] sm:$0xf]
      %v3059 = vld [vmem:[%s2691 + $0x2c] sm:$0x1]
      %v3060 = vld [vmem:[%s2691 + $0x30] sm:$0xf]
      %v3061 = vld [vmem:[%s2691 + $0x34] sm:$0x1]
      %v3062 = vld [vmem:[%s2691 + $0x38] sm:$0xf]
      %v3063 = vld [vmem:[%s2691 + $0x3c] sm:$0x1]
      %v3065 = vshrl.u32 %v3048, 16
      %v3067 = vrot.slane %v3065, 4
      %v3068 = vshll.u32 %v3048, 16
      %v3070 = vrot.slane %v3068, 5
      %v3071 = vor.u32 %v3067, %v3070
      %v3072 = vrot.slane %v3071, 4
      %v3074 = vshll.u32 %v3049, 16
      %v3076 = vrot.slane %v3074, 5
      %v3077 = vsel %vm905, %v3072, %v3076
      %v3079 = vshrl.u32 %v3050, 16
      %v3081 = vrot.slane %v3079, 4
      %v3082 = vshll.u32 %v3050, 16
      %v3084 = vrot.slane %v3082, 5
      %v3085 = vor.u32 %v3081, %v3084
      %v3086 = vrot.slane %v3085, 4
      %v3088 = vshll.u32 %v3051, 16
      %v3090 = vrot.slane %v3088, 5
      %v3091 = vsel %vm905, %v3086, %v3090
      %v3093 = vshrl.u32 %v3052, 16
      %v3095 = vrot.slane %v3093, 4
      %v3096 = vshll.u32 %v3052, 16
      %v3098 = vrot.slane %v3096, 5
      %v3099 = vor.u32 %v3095, %v3098
      %v3100 = vrot.slane %v3099, 4
      %v3102 = vshll.u32 %v3053, 16
      %v3104 = vrot.slane %v3102, 5
      %v3105 = vsel %vm905, %v3100, %v3104
      %v3107 = vshrl.u32 %v3054, 16
      %v3109 = vrot.slane %v3107, 4
      %v3110 = vshll.u32 %v3054, 16
      %v3112 = vrot.slane %v3110, 5
      %v3113 = vor.u32 %v3109, %v3112
      %v3114 = vrot.slane %v3113, 4
      %v3116 = vshll.u32 %v3055, 16
      %v3118 = vrot.slane %v3116, 5
      %v3119 = vsel %vm905, %v3114, %v3118
      %v3121 = vshrl.u32 %v3056, 16
      %v3123 = vrot.slane %v3121, 4
      %v3124 = vshll.u32 %v3056, 16
      %v3126 = vrot.slane %v3124, 5
      %v3127 = vor.u32 %v3123, %v3126
      %v3128 = vrot.slane %v3127, 4
      %v3130 = vshll.u32 %v3057, 16
      %v3132 = vrot.slane %v3130, 5
      %v3133 = vsel %vm905, %v3128, %v3132
      %v3135 = vshrl.u32 %v3058, 16
      %v3137 = vrot.slane %v3135, 4
      %v3138 = vshll.u32 %v3058, 16
      %v3140 = vrot.slane %v3138, 5
      %v3141 = vor.u32 %v3137, %v3140
      %v3142 = vrot.slane %v3141, 4
      %v3144 = vshll.u32 %v3059, 16
      %v3146 = vrot.slane %v3144, 5
      %v3147 = vsel %vm905, %v3142, %v3146
      %v3149 = vshrl.u32 %v3060, 16
      %v3151 = vrot.slane %v3149, 4
      %v3152 = vshll.u32 %v3060, 16
      %v3154 = vrot.slane %v3152, 5
      %v3155 = vor.u32 %v3151, %v3154
      %v3156 = vrot.slane %v3155, 4
      %v3158 = vshll.u32 %v3061, 16
      %v3160 = vrot.slane %v3158, 5
      %v3161 = vsel %vm905, %v3156, %v3160
      %v3163 = vshrl.u32 %v3062, 16
      %v3165 = vrot.slane %v3163, 4
      %v3166 = vshll.u32 %v3062, 16
      %v3168 = vrot.slane %v3166, 5
      %v3169 = vor.u32 %v3165, %v3168
      %v3170 = vrot.slane %v3169, 4
      %v3172 = vshll.u32 %v3063, 16
      %v3174 = vrot.slane %v3172, 5
      %v3175 = vsel %vm905, %v3170, %v3174
      %s3176 = scalar_lea.vmem %s4, 14
      %v3177 = vld [vmem:[%s3176] sm:$0x3]
      %v3178 = vunpack.c.l.b16 %v2949
      %v3179 = vunpack.c.l.b16 %v2963
      %v3180 = vunpack.c.l.b16 %v2977
      %v3181 = vunpack.c.l.b16 %v2991
      %v3182 = vunpack.c.l.b16 %v3005
      %v3183 = vunpack.c.l.b16 %v3019
      %v3184 = vunpack.c.l.b16 %v3033
      %v3185 = vunpack.c.l.b16 %v3047
      %v3186 = vpack.c.b16 %v3179, %v3178
      %v3187 = vpack.c.b16 %v3181, %v3180
      %v3188 = vpack.c.b16 %v3183, %v3182
      %v3189 = vpack.c.b16 %v3185, %v3184
      %v3191 = vsel %vm705, %v3186, 0
      %v3194 = vsel %vm705, %v3187, 0
      %v3197 = vsel %vm705, %v3188, 0
      %v3200 = vsel %vm705, %v3189, 0
      %v3203 = vsel %vm718, %v3177, 0
      %3205 = vmatprep.subr.bf16.mxu0 0
      %3206 = vmatpush1.bf16.msra.mxu0 %v3203
      %3207 = vmatprep.subr.bf16.mxu0 0
      %3208 = vmatpush1.bf16.msra.mxu0 0
      %3209 = vmatprep.subr.bf16.mxu0 0
      %3210 = vmatpush1.bf16.msra.mxu0 0
      %3211 = vmatprep.subr.bf16.mxu0 0
      %3212 = vmatpush1.bf16.msra.mxu0 0
      %3213 = vmatprep.subr.bf16.mxu0 0
      %3214 = vmatpush1.bf16.msra.mxu0 0
      %3215 = vmatprep.subr.bf16.mxu0 0
      %3216 = vmatpush1.bf16.msra.mxu0 0
      %3217 = vmatprep.subr.bf16.mxu0 0
      %3218 = vmatpush1.bf16.msra.mxu0 0
      %3219 = vmatprep.subr.bf16.mxu0 0
      %3220 = vmatpush1.bf16.msra.mxu0 0
      %3221 = vmatprep.subr.bf16.mxu0 0
      %3222 = vmatpush1.bf16.msra.mxu0 0
      %3223 = vmatprep.subr.bf16.mxu0 0
      %3224 = vmatpush1.bf16.msra.mxu0 0
      %3225 = vmatprep.subr.bf16.mxu0 0
      %3226 = vmatpush1.bf16.msra.mxu0 0
      %3227 = vmatprep.subr.bf16.mxu0 0
      %3228 = vmatpush1.bf16.msra.mxu0 0
      %3229 = vmatprep.subr.bf16.mxu0 0
      %3230 = vmatpush1.bf16.msra.mxu0 0
      %3231 = vmatprep.subr.bf16.mxu0 0
      %3232 = vmatpush1.bf16.msra.mxu0 0
      %3233 = vmatprep.subr.bf16.mxu0 0
      %3234 = vmatpush1.bf16.msra.mxu0 0
      %3235 = vmatprep.subr.bf16.mxu0 0
      %3236 = vmatpush1.bf16.msra.mxu0 0
      %3237 = vmatprep.mubr.bf16.mxu0 0
      %3238 = vmatmul.mubr.bf16.gmra.mrb[0].mxu0 %v3191
      %v3239 = vpop.f32.mrb[0].mxu0
      %v3240 = vadd.f32 0.0, %v3239
      %v3241 = vpop.f32.mrb[0].mxu0
      %v3242 = vpop.f32.mrb[0].mxu0
      %v3243 = vadd.f32 0.0, %v3242
      %v3244 = vpop.f32.mrb[0].mxu0
      %3245 = vmatprep.mubr.bf16.mxu0 0
      %3246 = vmatmul.mubr.bf16.gmra.mrb[0].mxu0 %v3194
      %v3247 = vpop.f32.mrb[0].mxu0
      %v3248 = vadd.f32 0.0, %v3247
      %v3249 = vpop.f32.mrb[0].mxu0
      %v3250 = vpop.f32.mrb[0].mxu0
      %v3251 = vadd.f32 0.0, %v3250
      %v3252 = vpop.f32.mrb[0].mxu0
      %3253 = vmatprep.mubr.bf16.mxu0 0
      %3254 = vmatmul.mubr.bf16.gmra.mrb[0].mxu0 %v3197
      %v3255 = vpop.f32.mrb[0].mxu0
      %v3256 = vadd.f32 0.0, %v3255
      %v3257 = vpop.f32.mrb[0].mxu0
      %v3258 = vpop.f32.mrb[0].mxu0
      %v3259 = vadd.f32 0.0, %v3258
      %v3260 = vpop.f32.mrb[0].mxu0
      %3261 = vmatprep.mubr.bf16.mxu0 0
      %3262 = vmatmul.mubr.bf16.gmra.mrb[0].mxu0 %v3200
      %v3263 = vpop.f32.mrb[0].mxu0
      %v3264 = vadd.f32 0.0, %v3263
      %v3265 = vpop.f32.mrb[0].mxu0
      %v3266 = vpop.f32.mrb[0].mxu0
      %v3267 = vadd.f32 0.0, %v3266
      %v3268 = vpop.f32.mrb[0].mxu0
      %3269 = vdwg.mxu0
      %v3270 = vadd.f32 %v2912, %v3240
      %v3271 = vadd.f32 %v2913, %v3243
      %v3272 = vadd.f32 %v2914, %v3248
      %v3273 = vadd.f32 %v2915, %v3251
      %v3274 = vadd.f32 %v2916, %v3256
      %v3275 = vadd.f32 %v2917, %v3259
      %v3276 = vadd.f32 %v2918, %v3264
      %v3277 = vadd.f32 %v2919, %v3267
      %s3278 = scalar_lea.vmem %s5, 14
      %v3279 = vld [vmem:[%s3278] sm:$0x3]
      %v3280 = vunpack.c.l.b16 %v3077
      %v3281 = vunpack.c.l.b16 %v3091
      %v3282 = vunpack.c.l.b16 %v3105
      %v3283 = vunpack.c.l.b16 %v3119
      %v3284 = vunpack.c.l.b16 %v3133
      %v3285 = vunpack.c.l.b16 %v3147
      %v3286 = vunpack.c.l.b16 %v3161
      %v3287 = vunpack.c.l.b16 %v3175
      %v3288 = vpack.c.b16 %v3281, %v3280
      %v3289 = vpack.c.b16 %v3283, %v3282
      %v3290 = vpack.c.b16 %v3285, %v3284
      %v3291 = vpack.c.b16 %v3287, %v3286
      %v3293 = vsel %vm705, %v3288, 0
      %v3296 = vsel %vm705, %v3289, 0
      %v3299 = vsel %vm705, %v3290, 0
      %v3302 = vsel %vm705, %v3291, 0
      %v3305 = vsel %vm718, %v3279, 0
      %3307 = vmatprep.subr.bf16.mxu0 0
      %3308 = vmatpush1.bf16.msra.mxu0 %v3305
      %3309 = vmatprep.subr.bf16.mxu0 0
      %3310 = vmatpush1.bf16.msra.mxu0 0
      %3311 = vmatprep.subr.bf16.mxu0 0
      %3312 = vmatpush1.bf16.msra.mxu0 0
      %3313 = vmatprep.subr.bf16.mxu0 0
      %3314 = vmatpush1.bf16.msra.mxu0 0
      %3315 = vmatprep.subr.bf16.mxu0 0
      %3316 = vmatpush1.bf16.msra.mxu0 0
      %3317 = vmatprep.subr.bf16.mxu0 0
      %3318 = vmatpush1.bf16.msra.mxu0 0
      %3319 = vmatprep.subr.bf16.mxu0 0
      %3320 = vmatpush1.bf16.msra.mxu0 0
      %3321 = vmatprep.subr.bf16.mxu0 0
      %3322 = vmatpush1.bf16.msra.mxu0 0
      %3323 = vmatprep.subr.bf16.mxu0 0
      %3324 = vmatpush1.bf16.msra.mxu0 0
      %3325 = vmatprep.subr.bf16.mxu0 0
      %3326 = vmatpush1.bf16.msra.mxu0 0
      %3327 = vmatprep.subr.bf16.mxu0 0
      %3328 = vmatpush1.bf16.msra.mxu0 0
      %3329 = vmatprep.subr.bf16.mxu0 0
      %3330 = vmatpush1.bf16.msra.mxu0 0
      %3331 = vmatprep.subr.bf16.mxu0 0
      %3332 = vmatpush1.bf16.msra.mxu0 0
      %3333 = vmatprep.subr.bf16.mxu0 0
      %3334 = vmatpush1.bf16.msra.mxu0 0
      %3335 = vmatprep.subr.bf16.mxu0 0
      %3336 = vmatpush1.bf16.msra.mxu0 0
      %3337 = vmatprep.subr.bf16.mxu0 0
      %3338 = vmatpush1.bf16.msra.mxu0 0
      %3339 = vmatprep.mubr.bf16.mxu0 0
      %3340 = vmatmul.mubr.bf16.gmra.mrb[0].mxu0 %v3293
      %v3341 = vpop.f32.mrb[0].mxu0
      %v3342 = vadd.f32 0.0, %v3341
      %v3343 = vpop.f32.mrb[0].mxu0
      %v3344 = vpop.f32.mrb[0].mxu0
      %v3345 = vadd.f32 0.0, %v3344
      %v3346 = vpop.f32.mrb[0].mxu0
      %3347 = vmatprep.mubr.bf16.mxu0 0
      %3348 = vmatmul.mubr.bf16.gmra.mrb[0].mxu0 %v3296
      %v3349 = vpop.f32.mrb[0].mxu0
      %v3350 = vadd.f32 0.0, %v3349
      %v3351 = vpop.f32.mrb[0].mxu0
      %v3352 = vpop.f32.mrb[0].mxu0
      %v3353 = vadd.f32 0.0, %v3352
      %v3354 = vpop.f32.mrb[0].mxu0
      %3355 = vmatprep.mubr.bf16.mxu0 0
      %3356 = vmatmul.mubr.bf16.gmra.mrb[0].mxu0 %v3299
      %v3357 = vpop.f32.mrb[0].mxu0
      %v3358 = vadd.f32 0.0, %v3357
      %v3359 = vpop.f32.mrb[0].mxu0
      %v3360 = vpop.f32.mrb[0].mxu0
      %v3361 = vadd.f32 0.0, %v3360
      %v3362 = vpop.f32.mrb[0].mxu0
      %3363 = vmatprep.mubr.bf16.mxu0 0
      %3364 = vmatmul.mubr.bf16.gmra.mrb[0].mxu0 %v3302
      %v3365 = vpop.f32.mrb[0].mxu0
      %v3366 = vadd.f32 0.0, %v3365
      %v3367 = vpop.f32.mrb[0].mxu0
      %v3368 = vpop.f32.mrb[0].mxu0
      %v3369 = vadd.f32 0.0, %v3368
      %v3370 = vpop.f32.mrb[0].mxu0
      %3371 = vdwg.mxu0
      %v3372 = vadd.f32 %v3270, %v3342
      %v3373 = vadd.f32 %v3271, %v3345
      %v3374 = vadd.f32 %v3272, %v3350
      %v3375 = vadd.f32 %v3273, %v3353
      %v3376 = vadd.f32 %v3274, %v3358
      %v3377 = vadd.f32 %v3275, %v3361
      %v3378 = vadd.f32 %v3276, %v3366
      %v3379 = vadd.f32 %v3277, %v3369
      %v3380 = vld [vmem:[%s2682] sm:$0xe]
      %v3381 = vld [vmem:[%s2682 + $0x8] sm:$0xe]
      %v3382 = vld [vmem:[%s2682 + $0x10] sm:$0xe]
      %v3383 = vld [vmem:[%s2682 + $0x18] sm:$0xe]
      %v3384 = vld [vmem:[%s2682 + $0x20] sm:$0xe]
      %v3385 = vld [vmem:[%s2682 + $0x28] sm:$0xe]
      %v3386 = vld [vmem:[%s2682 + $0x30] sm:$0xe]
      %v3387 = vld [vmem:[%s2682 + $0x38] sm:$0xe]
      %v3404 = vrot.slane %v3380, 5
      %v3405 = vrot.slane %v3404, 4
      %v3406 = vrot.slane %v2921, 5
      %v3407 = vsel %vm1376, %v3405, %v3406
      %v3408 = vrot.slane %v3381, 5
      %v3409 = vrot.slane %v3408, 4
      %v3410 = vrot.slane %v2923, 5
      %v3411 = vsel %vm1376, %v3409, %v3410
      %v3412 = vrot.slane %v3382, 5
      %v3413 = vrot.slane %v3412, 4
      %v3414 = vrot.slane %v2925, 5
      %v3415 = vsel %vm1376, %v3413, %v3414
      %v3416 = vrot.slane %v3383, 5
      %v3417 = vrot.slane %v3416, 4
      %v3418 = vrot.slane %v2927, 5
      %v3419 = vsel %vm1376, %v3417, %v3418
      %v3420 = vrot.slane %v3384, 5
      %v3421 = vrot.slane %v3420, 4
      %v3422 = vrot.slane %v2929, 5
      %v3423 = vsel %vm1376, %v3421, %v3422
      %v3424 = vrot.slane %v3385, 5
      %v3425 = vrot.slane %v3424, 4
      %v3426 = vrot.slane %v2931, 5
      %v3427 = vsel %vm1376, %v3425, %v3426
      %v3428 = vrot.slane %v3386, 5
      %v3429 = vrot.slane %v3428, 4
      %v3430 = vrot.slane %v2933, 5
      %v3431 = vsel %vm1376, %v3429, %v3430
      %v3432 = vrot.slane %v3387, 5
      %v3433 = vrot.slane %v3432, 4
      %v3434 = vrot.slane %v2935, 5
      %v3435 = vsel %vm1376, %v3433, %v3434
      %v3436 = vld [vmem:[%s2691] sm:$0xe]
      %v3437 = vld [vmem:[%s2691 + $0x8] sm:$0xe]
      %v3438 = vld [vmem:[%s2691 + $0x10] sm:$0xe]
      %v3439 = vld [vmem:[%s2691 + $0x18] sm:$0xe]
      %v3440 = vld [vmem:[%s2691 + $0x20] sm:$0xe]
      %v3441 = vld [vmem:[%s2691 + $0x28] sm:$0xe]
      %v3442 = vld [vmem:[%s2691 + $0x30] sm:$0xe]
      %v3443 = vld [vmem:[%s2691 + $0x38] sm:$0xe]
      %v3460 = vrot.slane %v3436, 5
      %v3461 = vrot.slane %v3460, 4
      %v3462 = vrot.slane %v3049, 5
      %v3463 = vsel %vm1376, %v3461, %v3462
      %v3464 = vrot.slane %v3437, 5
      %v3465 = vrot.slane %v3464, 4
      %v3466 = vrot.slane %v3051, 5
      %v3467 = vsel %vm1376, %v3465, %v3466
      %v3468 = vrot.slane %v3438, 5
      %v3469 = vrot.slane %v3468, 4
      %v3470 = vrot.slane %v3053, 5
      %v3471 = vsel %vm1376, %v3469, %v3470
      %v3472 = vrot.slane %v3439, 5
      %v3473 = vrot.slane %v3472, 4
      %v3474 = vrot.slane %v3055, 5
      %v3475 = vsel %vm1376, %v3473, %v3474
      %v3476 = vrot.slane %v3440, 5
      %v3477 = vrot.slane %v3476, 4
      %v3478 = vrot.slane %v3057, 5
      %v3479 = vsel %vm1376, %v3477, %v3478
      %v3480 = vrot.slane %v3441, 5
      %v3481 = vrot.slane %v3480, 4
      %v3482 = vrot.slane %v3059, 5
      %v3483 = vsel %vm1376, %v3481, %v3482
      %v3484 = vrot.slane %v3442, 5
      %v3485 = vrot.slane %v3484, 4
      %v3486 = vrot.slane %v3061, 5
      %v3487 = vsel %vm1376, %v3485, %v3486
      %v3488 = vrot.slane %v3443, 5
      %v3489 = vrot.slane %v3488, 4
      %v3490 = vrot.slane %v3063, 5
      %v3491 = vsel %vm1376, %v3489, %v3490
      %s3492 = scalar_lea.vmem %s4, 16
      %v3493 = vld [vmem:[%s3492] sm:$0x3]
      %v3494 = vunpack.c.l.b16 %v3407
      %v3495 = vunpack.c.l.b16 %v3411
      %v3496 = vunpack.c.l.b16 %v3415
      %v3497 = vunpack.c.l.b16 %v3419
      %v3498 = vunpack.c.l.b16 %v3423
      %v3499 = vunpack.c.l.b16 %v3427
      %v3500 = vunpack.c.l.b16 %v3431
      %v3501 = vunpack.c.l.b16 %v3435
      %v3502 = vpack.c.b16 %v3495, %v3494
      %v3503 = vpack.c.b16 %v3497, %v3496
      %v3504 = vpack.c.b16 %v3499, %v3498
      %v3505 = vpack.c.b16 %v3501, %v3500
      %v3507 = vsel %vm705, %v3502, 0
      %v3510 = vsel %vm705, %v3503, 0
      %v3513 = vsel %vm705, %v3504, 0
      %v3516 = vsel %vm705, %v3505, 0
      %v3519 = vsel %vm718, %v3493, 0
      %3521 = vmatprep.subr.bf16.mxu0 0
      %3522 = vmatpush1.bf16.msra.mxu0 %v3519
      %3523 = vmatprep.subr.bf16.mxu0 0
      %3524 = vmatpush1.bf16.msra.mxu0 0
      %3525 = vmatprep.subr.bf16.mxu0 0
      %3526 = vmatpush1.bf16.msra.mxu0 0
      %3527 = vmatprep.subr.bf16.mxu0 0
      %3528 = vmatpush1.bf16.msra.mxu0 0
      %3529 = vmatprep.subr.bf16.mxu0 0
      %3530 = vmatpush1.bf16.msra.mxu0 0
      %3531 = vmatprep.subr.bf16.mxu0 0
      %3532 = vmatpush1.bf16.msra.mxu0 0
      %3533 = vmatprep.subr.bf16.mxu0 0
      %3534 = vmatpush1.bf16.msra.mxu0 0
      %3535 = vmatprep.subr.bf16.mxu0 0
      %3536 = vmatpush1.bf16.msra.mxu0 0
      %3537 = vmatprep.subr.bf16.mxu0 0
      %3538 = vmatpush1.bf16.msra.mxu0 0
      %3539 = vmatprep.subr.bf16.mxu0 0
      %3540 = vmatpush1.bf16.msra.mxu0 0
      %3541 = vmatprep.subr.bf16.mxu0 0
      %3542 = vmatpush1.bf16.msra.mxu0 0
      %3543 = vmatprep.subr.bf16.mxu0 0
      %3544 = vmatpush1.bf16.msra.mxu0 0
      %3545 = vmatprep.subr.bf16.mxu0 0
      %3546 = vmatpush1.bf16.msra.mxu0 0
      %3547 = vmatprep.subr.bf16.mxu0 0
      %3548 = vmatpush1.bf16.msra.mxu0 0
      %3549 = vmatprep.subr.bf16.mxu0 0
      %3550 = vmatpush1.bf16.msra.mxu0 0
      %3551 = vmatprep.subr.bf16.mxu0 0
      %3552 = vmatpush1.bf16.msra.mxu0 0
      %3553 = vmatprep.mubr.bf16.mxu0 0
      %3554 = vmatmul.mubr.bf16.gmra.mrb[0].mxu0 %v3507
      %v3555 = vpop.f32.mrb[0].mxu0
      %v3556 = vadd.f32 0.0, %v3555
      %v3557 = vpop.f32.mrb[0].mxu0
      %v3558 = vpop.f32.mrb[0].mxu0
      %v3559 = vadd.f32 0.0, %v3558
      %v3560 = vpop.f32.mrb[0].mxu0
      %3561 = vmatprep.mubr.bf16.mxu0 0
      %3562 = vmatmul.mubr.bf16.gmra.mrb[0].mxu0 %v3510
      %v3563 = vpop.f32.mrb[0].mxu0
      %v3564 = vadd.f32 0.0, %v3563
      %v3565 = vpop.f32.mrb[0].mxu0
      %v3566 = vpop.f32.mrb[0].mxu0
      %v3567 = vadd.f32 0.0, %v3566
      %v3568 = vpop.f32.mrb[0].mxu0
      %3569 = vmatprep.mubr.bf16.mxu0 0
      %3570 = vmatmul.mubr.bf16.gmra.mrb[0].mxu0 %v3513
      %v3571 = vpop.f32.mrb[0].mxu0
      %v3572 = vadd.f32 0.0, %v3571
      %v3573 = vpop.f32.mrb[0].mxu0
      %v3574 = vpop.f32.mrb[0].mxu0
      %v3575 = vadd.f32 0.0, %v3574
      %v3576 = vpop.f32.mrb[0].mxu0
      %3577 = vmatprep.mubr.bf16.mxu0 0
      %3578 = vmatmul.mubr.bf16.gmra.mrb[0].mxu0 %v3516
      %v3579 = vpop.f32.mrb[0].mxu0
      %v3580 = vadd.f32 0.0, %v3579
      %v3581 = vpop.f32.mrb[0].mxu0
      %v3582 = vpop.f32.mrb[0].mxu0
      %v3583 = vadd.f32 0.0, %v3582
      %v3584 = vpop.f32.mrb[0].mxu0
      %3585 = vdwg.mxu0
      %v3586 = vadd.f32 %v3372, %v3556
      %v3587 = vadd.f32 %v3373, %v3559
      %v3588 = vadd.f32 %v3374, %v3564
      %v3589 = vadd.f32 %v3375, %v3567
      %v3590 = vadd.f32 %v3376, %v3572
      %v3591 = vadd.f32 %v3377, %v3575
      %v3592 = vadd.f32 %v3378, %v3580
      %v3593 = vadd.f32 %v3379, %v3583
      %s3594 = scalar_lea.vmem %s5, 16
      %v3595 = vld [vmem:[%s3594] sm:$0x3]
      %v3596 = vunpack.c.l.b16 %v3463
      %v3597 = vunpack.c.l.b16 %v3467
      %v3598 = vunpack.c.l.b16 %v3471
      %v3599 = vunpack.c.l.b16 %v3475
      %v3600 = vunpack.c.l.b16 %v3479
      %v3601 = vunpack.c.l.b16 %v3483
      %v3602 = vunpack.c.l.b16 %v3487
      %v3603 = vunpack.c.l.b16 %v3491
      %v3604 = vpack.c.b16 %v3597, %v3596
      %v3605 = vpack.c.b16 %v3599, %v3598
      %v3606 = vpack.c.b16 %v3601, %v3600
      %v3607 = vpack.c.b16 %v3603, %v3602
      %v3609 = vsel %vm705, %v3604, 0
      %v3612 = vsel %vm705, %v3605, 0
      %v3615 = vsel %vm705, %v3606, 0
      %v3618 = vsel %vm705, %v3607, 0
      %v3621 = vsel %vm718, %v3595, 0
      %3623 = vmatprep.subr.bf16.mxu0 0
      %3624 = vmatpush1.bf16.msra.mxu0 %v3621
      %3625 = vmatprep.subr.bf16.mxu0 0
      %3626 = vmatpush1.bf16.msra.mxu0 0
      %3627 = vmatprep.subr.bf16.mxu0 0
      %3628 = vmatpush1.bf16.msra.mxu0 0
      %3629 = vmatprep.subr.bf16.mxu0 0
      %3630 = vmatpush1.bf16.msra.mxu0 0
      %3631 = vmatprep.subr.bf16.mxu0 0
      %3632 = vmatpush1.bf16.msra.mxu0 0
      %3633 = vmatprep.subr.bf16.mxu0 0
      %3634 = vmatpush1.bf16.msra.mxu0 0
      %3635 = vmatprep.subr.bf16.mxu0 0
      %3636 = vmatpush1.bf16.msra.mxu0 0
      %3637 = vmatprep.subr.bf16.mxu0 0
      %3638 = vmatpush1.bf16.msra.mxu0 0
      %3639 = vmatprep.subr.bf16.mxu0 0
      %3640 = vmatpush1.bf16.msra.mxu0 0
      %3641 = vmatprep.subr.bf16.mxu0 0
      %3642 = vmatpush1.bf16.msra.mxu0 0
      %3643 = vmatprep.subr.bf16.mxu0 0
      %3644 = vmatpush1.bf16.msra.mxu0 0
      %3645 = vmatprep.subr.bf16.mxu0 0
      %3646 = vmatpush1.bf16.msra.mxu0 0
      %3647 = vmatprep.subr.bf16.mxu0 0
      %3648 = vmatpush1.bf16.msra.mxu0 0
      %3649 = vmatprep.subr.bf16.mxu0 0
      %3650 = vmatpush1.bf16.msra.mxu0 0
      %3651 = vmatprep.subr.bf16.mxu0 0
      %3652 = vmatpush1.bf16.msra.mxu0 0
      %3653 = vmatprep.subr.bf16.mxu0 0
      %3654 = vmatpush1.bf16.msra.mxu0 0
      %3655 = vmatprep.mubr.bf16.mxu0 0
      %3656 = vmatmul.mubr.bf16.gmra.mrb[0].mxu0 %v3609
      %v3657 = vpop.f32.mrb[0].mxu0
      %v3658 = vadd.f32 0.0, %v3657
      %v3659 = vpop.f32.mrb[0].mxu0
      %v3660 = vpop.f32.mrb[0].mxu0
      %v3661 = vadd.f32 0.0, %v3660
      %v3662 = vpop.f32.mrb[0].mxu0
      %3663 = vmatprep.mubr.bf16.mxu0 0
      %3664 = vmatmul.mubr.bf16.gmra.mrb[0].mxu0 %v3612
      %v3665 = vpop.f32.mrb[0].mxu0
      %v3666 = vadd.f32 0.0, %v3665
      %v3667 = vpop.f32.mrb[0].mxu0
      %v3668 = vpop.f32.mrb[0].mxu0
      %v3669 = vadd.f32 0.0, %v3668
      %v3670 = vpop.f32.mrb[0].mxu0
      %3671 = vmatprep.mubr.bf16.mxu0 0
      %3672 = vmatmul.mubr.bf16.gmra.mrb[0].mxu0 %v3615
      %v3673 = vpop.f32.mrb[0].mxu0
      %v3674 = vadd.f32 0.0, %v3673
      %v3675 = vpop.f32.mrb[0].mxu0
      %v3676 = vpop.f32.mrb[0].mxu0
      %v3677 = vadd.f32 0.0, %v3676
      %v3678 = vpop.f32.mrb[0].mxu0
      %3679 = vmatprep.mubr.bf16.mxu0 0
      %3680 = vmatmul.mubr.bf16.gmra.mrb[0].mxu0 %v3618
      %v3681 = vpop.f32.mrb[0].mxu0
      %v3682 = vadd.f32 0.0, %v3681
      %v3683 = vpop.f32.mrb[0].mxu0
      %v3684 = vpop.f32.mrb[0].mxu0
      %v3685 = vadd.f32 0.0, %v3684
      %v3686 = vpop.f32.mrb[0].mxu0
      %3687 = vdwg.mxu0
      %v3688 = vadd.f32 %v3586, %v3658
      %v3689 = vadd.f32 %v3587, %v3661
      %v3690 = vadd.f32 %v3588, %v3666
      %v3691 = vadd.f32 %v3589, %v3669
      %v3692 = vadd.f32 %v3590, %v3674
      %v3693 = vadd.f32 %v3591, %v3677
      %v3694 = vadd.f32 %v3592, %v3682
      %v3695 = vadd.f32 %v3593, %v3685
      %v3696 = vld [vmem:[%s6] sm:$0x1]
      %v3698 = vlaneseq
      %v3699 = vshrl.u32 %v3698, 7
      %v3700 = vsub.s32 0, %v3699
      %v3701 = vrot.slane %v3696, %v3700
      %v3703 = vadd.f32 %v3688, %v3701
      %v3704 = vadd.f32 %v3689, %v3701
      %v3705 = vadd.f32 %v3690, %v3701
      %v3706 = vadd.f32 %v3691, %v3701
      %v3707 = vadd.f32 %v3692, %v3701
      %v3708 = vadd.f32 %v3693, %v3701
      %v3709 = vadd.f32 %v3694, %v3701
      %v3710 = vadd.f32 %v3695, %v3701
      %v3711 = vmul.f32 %v3703, 0.01
      %v3712 = vmul.f32 %v3704, 0.01
      %v3713 = vmul.f32 %v3705, 0.01
      %v3714 = vmul.f32 %v3706, 0.01
      %v3715 = vmul.f32 %v3707, 0.01
      %v3716 = vmul.f32 %v3708, 0.01
      %v3717 = vmul.f32 %v3709, 0.01
      %v3718 = vmul.f32 %v3710, 0.01
      %v3719 = vmax.f32 %v3703, %v3711
      %v3720 = vmax.f32 %v3704, %v3712
      %v3721 = vmax.f32 %v3705, %v3713
      %v3722 = vmax.f32 %v3706, %v3714
      %v3723 = vmax.f32 %v3707, %v3715
      %v3724 = vmax.f32 %v3708, %v3716
      %v3725 = vmax.f32 %v3709, %v3717
      %v3726 = vmax.f32 %v3710, %v3718
      %vm3727 = vcmask 64512
      %3728 = vst.msk [vmem:[%s300] sm:$0xff] %vm3727, %v3719
      %3729 = vst.msk [vmem:[%s300 + $0x8] sm:$0xff] %vm3727, %v3720
      %3730 = vst.msk [vmem:[%s300 + $0x10] sm:$0xff] %vm3727, %v3721
      %3731 = vst.msk [vmem:[%s300 + $0x18] sm:$0xff] %vm3727, %v3722
      %3732 = vst.msk [vmem:[%s300 + $0x20] sm:$0xff] %vm3727, %v3723
      %3733 = vst.msk [vmem:[%s300 + $0x28] sm:$0xff] %vm3727, %v3724
      %3734 = vst.msk [vmem:[%s300 + $0x30] sm:$0xff] %vm3727, %v3725
      %3735 = vst.msk [vmem:[%s300 + $0x38] sm:$0xff] %vm3727, %v3726
      %p3736 = scmp.lt.s32.totalorder %s18, 1
      %s3737 = scalar_select %p3736, %s18, 1
      %s3738 = smul.addr %s3737, 8
      %s3739 = smul.addr %s3738, 8
      %s3740 = scalar_lea.vmem %s7, %s3739
      // Predicated region
      $region49: #{conv2x_forward.1} parent=47 // pred_check
        %p3741 = pneg %p193
      $region50: #{conv2x_forward.1} parent=47 // pred_check_branch
        %3743 = sbr.rel (%p3741) target = $region52
      $region51: #{conv2x_forward.1} parent=47 // pred_region
        _
      $region52: #{conv2x_forward.1} parent=47 // pred_fallthru
        _
    $region48: #{conv2x_forward.1} parent=5 // pred_fallthru
      _
    %p3744 = scmp.le.s32.totalorder 2, %s13
    // Predicated region
    $region53: #{conv2x_forward.1} parent=5 // pred_check
      %p3745 = pneg %p3744
    $region54: #{conv2x_forward.1} parent=5 // pred_check_branch
      %3747 = sbr.rel (%p3745) target = $region56
    $region55: #{conv2x_forward.1} parent=5 // pred_region
      %s3748 = ssub.s32 %s13, 2
      // Predicated region
      $region57: #{conv2x_forward.1} parent=55 // pred_check
        %p3749 = pneg %p199
      $region58: #{conv2x_forward.1} parent=55 // pred_check_branch
        %3751 = sbr.rel (%p3749) target = $region60
      $region59: #{conv2x_forward.1} parent=55 // pred_region
        %p3752 = scmp.lt.s32.totalorder %s19, 1
        %s3753 = scalar_select %p3752, %s19, 1
        %s3754 = smul.addr %s3753, 8
        %s3755 = smul.addr %s3754, 8
        %s3756 = scalar_lea.vmem %s7, %s3755
      $region60: #{conv2x_forward.1} parent=55 // pred_fallthru
        _
    $region56: #{conv2x_forward.1} parent=5 // pred_fallthru
      _
  $region6: #{conv2x_forward.1} parent=0 // loop_footer
    %s17 = sadd.s32 1, %s13
  $region7: #{conv2x_forward.1} parent=0 // loop_footer_branch
    %12 = sbr.rel target = $region3
  $region8: #{conv2x_forward.1} parent=0 // loop_exit
    _

</llo_original>
